<compile_context>
chip_gen: v5e
topology: v5e:2x2
jax: 0.10.0
libtpu: 0.0.40
codegen_flags: <defaults>
</compile_context>

<pallas_src>
import functools
import math

import jax
import jax.numpy as jnp
import numpy as np
from jax.experimental import pallas as pl
from jax.experimental.pallas import tpu as pltpu

# ----------------------------------------------------------------------------
# Config (consistent with the module's forward-shape constraints:
# target_q_h * target_q_w must equal target_inp_h * target_inp_w).
# ----------------------------------------------------------------------------
CFG = dict(
    embed_dim=32,
    num_heads=4,
    target_inp_h=8, target_inp_w=8,
    target_q_h=8, target_q_w=8,
    target_kv_h=4, target_kv_w=4,
    kernel_size=3,
    padding_q=1, stride_q=1,
    padding_kv=1, stride_kv=2,
    ff_scale=2,
)
B = 2
LN_EPS = 1e-5
BN_EPS = 1e-5


# ----------------------------------------------------------------------------
# In-kernel math helpers
# ----------------------------------------------------------------------------
def _erf_approx(x):
    # Abramowitz & Stegun 7.1.26, |abs err| < 1.5e-7 (fp32-level accuracy).
    a1, a2, a3, a4, a5 = (0.254829592, -0.284496736, 1.421413741,
                          -1.453152027, 1.061405429)
    p = 0.3275911
    s = jnp.where(x >= 0.0, 1.0, -1.0)
    ax = jnp.abs(x)
    t = 1.0 / (1.0 + p * ax)
    poly = ((((a5 * t + a4) * t + a3) * t + a2) * t + a1) * t
    return s * (1.0 - poly * jnp.exp(-ax * ax))


def _gelu_exact(x):
    return 0.5 * x * (1.0 + _erf_approx(x * (1.0 / math.sqrt(2.0))))


def _layernorm(x, gamma_row, beta_row):
    mean = jnp.mean(x, axis=-1, keepdims=True)
    xc = x - mean
    var = jnp.mean(xc * xc, axis=-1, keepdims=True)
    return xc * jax.lax.rsqrt(var + LN_EPS) * gamma_row + beta_row


# ----------------------------------------------------------------------------
# Fused kernel: one grid step handles `bblk` batch items, everything stays
# VMEM/vreg resident; only the final (N, C) per item is written back.
# ----------------------------------------------------------------------------
def _mixed_attn_kernel(x_ref, gp_ref, tile3_ref, sel_ref, bd_ref, bones_ref,
                       ln1_ref, convw_ref, convb_ref, bns_ref, bnt_ref,
                       pqw_ref, pqb_ref, pkvw_ref, pkvb_ref,
                       ln2_ref, ff1w_ref, ff1b_ref, ff2w_ref, ff2b_ref,
                       o_ref,
                       *, bblk, num_heads, head_dim, nkv, taps):
    f32 = jnp.float32
    C = num_heads * head_dim
    scale = 1.0 / math.sqrt(head_dim)

    # Constant / parameter blocks: load once, reuse for every batch item
    # handled by this grid step.
    gp = gp_ref[...]          # (taps*N, N)   conv gather (zero-padding folded in)
    tile3 = tile3_ref[...]    # (C, 3C)       [I | I | I] lane-tiling matrix
    sel = sel_ref[...]        # (nkv, N)      stride-kv subsample selector
    bd = bd_ref[...]          # (H*nkv, 2C)   block-diagonal head mask for [K|V]
    bones = bones_ref[...]    # (H*nkv, H*nkv) per-head block-ones (softmax sum)
    ln1 = ln1_ref[...]        # (2, C)
    conv_w = convw_ref[...]   # (taps, 3C)    [wq | wk | wv]
    conv_b = convb_ref[...]   # (1, 3C)
    bns = bns_ref[...]        # (1, 3C)       folded BN scale
    bnt = bnt_ref[...]        # (1, 3C)       folded BN shift
    wq_p = pqw_ref[...]       # (C, C)
    bq_p = pqb_ref[...]       # (1, C)
    wkv_p = pkvw_ref[...]     # (2C, 2C)      block-diag(Wk, Wv)
    bkv_p = pkvb_ref[...]     # (1, 2C)
    ln2 = ln2_ref[...]        # (2, C)
    w1 = ff1w_ref[...]        # (C, ffh)
    b1 = ff1b_ref[...]        # (1, ffh)
    w2 = ff2w_ref[...]        # (ffh, C)
    b2 = ff2b_ref[...]        # (1, C)

    for bi in range(bblk):                                 # static batch loop
        x = x_ref[bi].astype(f32)                          # (N, C)
        n_tok = x.shape[0]

        # ---- LayerNorm 1 -------------------------------------------------
        xn = _layernorm(x, ln1[0:1, :], ln1[1:2, :])

        # ---- fused depthwise conv for q/k/v (shared patches, stride 1) ----
        # Lane-tile channels to 3C so all three branches share one 96-lane
        # accumulator; the padded/shifted patches come from a single constant
        # gather matmul (MXU), so there is no padded-image scratch and no
        # sublane-offset window slicing.
        xn3 = jnp.dot(xn, tile3, preferred_element_type=f32)        # (N, 3C)
        shifted = jnp.dot(gp, xn3, preferred_element_type=f32)      # (taps*N, 3C)

        conv = jnp.zeros((n_tok, 3 * C), f32)
        for t in range(taps):                               # 9 aligned row slabs
            conv = conv + shifted[t * n_tok:(t + 1) * n_tok, :] * conv_w[t:t + 1, :]

        # ---- conv bias + ELU + BatchNorm (eval, folded scale/shift) -------
        a = conv + conv_b
        a = jnp.where(a > 0.0, a, jnp.exp(jnp.minimum(a, 0.0)) - 1.0)   # ELU(1)
        mapped = a * bns + bnt                              # (N, 3C) = [q | k | v]

        q_map = mapped[:, :C]                               # stride-1 conv output
        # stride-kv subsampling of k & v in ONE selection matmul (selection
        # commutes with the pointwise ELU/BN, so selecting afterwards is exact).
        kv_map = jnp.dot(sel, mapped, preferred_element_type=f32)[:, C:]  # (nkv, 2C)

        # ---- q projection + fused k/v projection (block-diagonal weight) ---
        q = jnp.dot(q_map, wq_p, preferred_element_type=f32) + bq_p      # (N, C)
        kv = jnp.dot(kv_map, wkv_p, preferred_element_type=f32) + bkv_p  # (nkv, 2C)

        # ---- block-diagonal multi-head attention ---------------------------
        # One QK^T and one P@V matmul for ALL heads; the per-head structure is
        # carried by the constant block-diagonal mask.  No attention scratch,
        # no masked 8-lane column stores, no per-head matmuls.
        kv_bd = jnp.concatenate([kv] * num_heads, axis=0) * bd           # (H*nkv, 2C)
        k_bd = kv_bd[:, :C]
        v_bd = kv_bd[:, C:]
        s = jax.lax.dot_general(q * scale, k_bd, (((1,), (1,)), ((), ())),
                                preferred_element_type=f32)              # (N, H*nkv)
        # Per-head softmax with no per-head slicing: shift by the global row
        # max (shift-invariant; post-LN scores are O(1) so no underflow risk),
        # sum each 16-column head block via a constant block-ones matmul, and
        # divide exactly (review correctness note: no approx reciprocal).
        e = jnp.exp(s - jnp.max(s, axis=-1, keepdims=True))
        denom = jnp.dot(e, bones, preferred_element_type=f32)
        p = e / denom
        attn = jnp.dot(p, v_bd, preferred_element_type=f32)              # (N, C)

        # ---- residual + LN2 + MLP(GELU) + residual (DropPath = id in eval) --
        x1 = x + attn
        hdn = _layernorm(x1, ln2[0:1, :], ln2[1:2, :])
        h1 = _gelu_exact(jnp.dot(hdn, w1, preferred_element_type=f32) + b1)
        h2 = jnp.dot(h1, w2, preferred_element_type=f32) + b2
        o_ref[bi] = (x1 + h2).astype(o_ref.dtype)


# ----------------------------------------------------------------------------
# Generation-aware batch split: one grid step per TensorCore that can share a
# "parallel" grid axis.  v5e/v6e have a single TC -> fold the whole batch into
# one step (fewer fixed per-step overheads); v4/v5p (megacore) and v7x (2 TCs)
# -> 2-way batch parallelism.  Detection is best-effort: any value is correct,
# only performance differs.
# ----------------------------------------------------------------------------
def _grid_split(batch):
    try:
        kind = jax.devices()[0].device_kind.lower()
    except Exception:
        kind = ""
    single_tc = ("lite" in kind) or ("v5e" in kind) or ("v6e" in kind) or ("v6" in kind)
    dual_tc = (not single_tc) and any(t in kind for t in ("v4", "v5p", "v7", "7x", "tpu7"))
    n = 2 if dual_tc else 1
    n = max(1, min(n, batch))
    while batch % n:
        n -= 1
    return n


# ----------------------------------------------------------------------------
# Wrapper: one pallas_call for the whole forward.
# ----------------------------------------------------------------------------
def mixed_attention_forward(x, params):
    cfg = CFG
    Bx, N, D = x.shape
    Ht, Wt = cfg['target_inp_h'], cfg['target_inp_w']
    H = cfg['num_heads']
    hd = D // H
    ks = cfg['kernel_size']
    taps = ks * ks
    pq, pkv = cfg['padding_q'], cfg['padding_kv']
    sq, skv = cfg['stride_q'], cfg['stride_kv']
    assert N == Ht * Wt
    assert pq == pkv and sq == 1, "fused conv path assumes shared padding, stride_q=1"

    hfull = Ht + 2 * pq - ks + 1          # stride-1 conv output height/width
    wfull = Wt + 2 * pq - ks + 1
    assert hfull * wfull == cfg['target_q_h'] * cfg['target_q_w'] == N
    hkv = (Ht + 2 * pkv - ks) // skv + 1
    wkv = (Wt + 2 * pkv - ks) // skv + 1
    assert (hkv, wkv) == (cfg['target_kv_h'], cfg['target_kv_w'])
    Nkv = hkv * wkv
    ffh = params['ff1_w'].shape[1]

    # --- constant matrices (host numpy, baked in as small f32 inputs) --------
    # gp: for tap t and output position n, selects the zero-padded input pixel
    # hit by that tap (rows hitting padding stay all-zero).
    gp_np = np.zeros((taps * N, N), np.float32)
    for kh in range(ks):
        for kw in range(ks):
            t = kh * ks + kw
            for i in range(hfull):
                for j in range(wfull):
                    r, c = i + kh - pq, j + kw - pq
                    if 0 <= r < Ht and 0 <= c < Wt:
                        gp_np[t * N + i * wfull + j, r * Wt + c] = 1.0
    # tile3: lane-tiles (N, C) -> (N, 3C) on the MXU ([I | I | I]).
    tile3_np = np.tile(np.eye(D, dtype=np.float32), (1, 3))
    # sel: picks the stride-skv positions out of the stride-1 conv output.
    rows = np.arange(Nkv)
    cols = (rows // wkv) * (skv * wfull) + (rows % wkv) * skv
    sel_np = np.zeros((Nkv, N), np.float32)
    sel_np[rows, cols] = 1.0
    # bd: block-diagonal head mask applied to the row-tiled [k | v].
    bd_np = np.zeros((H * Nkv, 2 * D), np.float32)
    for h in range(H):
        bd_np[h * Nkv:(h + 1) * Nkv, h * hd:(h + 1) * hd] = 1.0
        bd_np[h * Nkv:(h + 1) * Nkv, D + h * hd:D + (h + 1) * hd] = 1.0
    # bones: block-ones matrix broadcasting each head's softmax denominator.
    bones_np = np.zeros((H * Nkv, H * Nkv), np.float32)
    for h in range(H):
        bones_np[h * Nkv:(h + 1) * Nkv, h * Nkv:(h + 1) * Nkv] = 1.0

    steps = _grid_split(Bx)
    bblk = Bx // steps

    kernel = functools.partial(_mixed_attn_kernel, bblk=bblk, num_heads=H,
                               head_dim=hd, nkv=Nkv, taps=taps)

    def fixed2(shape):
        return pl.BlockSpec(shape, lambda b: (0, 0))

    # Advisory cost estimate (helps XLA schedule around this tiny kernel).
    mm_flops = 2 * (taps * N * N * 3 * D      # gather matmul
                    + N * D * 3 * D           # lane tiling
                    + Nkv * N * 3 * D         # k/v selection
                    + N * D * D               # q projection
                    + Nkv * 2 * D * 2 * D     # fused k/v projection
                    + N * D * (H * Nkv)       # QK^T
                    + N * (H * Nkv) * (H * Nkv)   # block-ones softmax sums
                    + N * (H * Nkv) * D       # P@V
                    + 2 * N * D * ffh)        # FF1 + FF2
    cost = pl.CostEstimate(
        flops=int(Bx * (mm_flops + 2 * taps * N * 3 * D)),
        transcendentals=int(Bx * (N * 3 * D + N * H * Nkv + N * ffh)),
        bytes_accessed=int(4 * (2 * Bx * N * D + gp_np.size + tile3_np.size
                                + sel_np.size + bd_np.size + bones_np.size
                                + 10 * 3 * D + 5 * D * D + 2 * D * ffh)))

    return pl.pallas_call(
        kernel,
        out_shape=jax.ShapeDtypeStruct((Bx, N, D), x.dtype),
        grid=(steps,),
        in_specs=[
            pl.BlockSpec((bblk, N, D), lambda b: (b, 0, 0)),   # x
            fixed2((taps * N, N)),       # gather matrix
            fixed2((D, 3 * D)),          # lane-tiling matrix
            fixed2((Nkv, N)),            # stride-kv selector
            fixed2((H * Nkv, 2 * D)),    # block-diagonal head mask
            fixed2((H * Nkv, H * Nkv)),  # softmax block-ones
            fixed2((2, D)),              # LN1 gamma/beta
            fixed2((taps, 3 * D)),       # depthwise q/k/v weights (packed)
            fixed2((1, 3 * D)),          # conv biases (packed)
            fixed2((1, 3 * D)),          # folded BN scales
            fixed2((1, 3 * D)),          # folded BN shifts
            fixed2((D, D)),              # proj_q weight
            fixed2((1, D)),              # proj_q bias
            fixed2((2 * D, 2 * D)),      # proj_k/proj_v block-diag weight
            fixed2((1, 2 * D)),          # proj_k/proj_v biases
            fixed2((2, D)),              # LN2 gamma/beta
            fixed2((D, ffh)),            # FF1 weight
            fixed2((1, ffh)),            # FF1 bias
            fixed2((ffh, D)),            # FF2 weight
            fixed2((1, D)),              # FF2 bias
        ],
        out_specs=pl.BlockSpec((bblk, N, D), lambda b: (b, 0, 0)),
        compiler_params=pltpu.CompilerParams(
            dimension_semantics=("parallel",)),
        cost_estimate=cost,
    )(x, jnp.asarray(gp_np), jnp.asarray(tile3_np), jnp.asarray(sel_np),
      jnp.asarray(bd_np), jnp.asarray(bones_np),
      params['ln1'], params['conv_w'], params['conv_b'],
      params['bn_scale'], params['bn_shift'],
      params['proj_q_w'], params['proj_q_b'],
      params['proj_kv_w'], params['proj_kv_b'],
      params['ln2'], params['ff1_w'], params['ff1_b'],
      params['ff2_w'], params['ff2_b'])


# ----------------------------------------------------------------------------
# Deterministic parameter init (packed layouts for the fused kernel)
# ----------------------------------------------------------------------------
def init_params(key):
    D = CFG['embed_dim']
    ks = CFG['kernel_size']
    ffh = D * CFG['ff_scale']
    keys = jax.random.split(key, 16)

    def nrm(k_, shape, s=0.1):
        return jax.random.normal(k_, shape, jnp.float32) * s

    # Per-branch BatchNorm2d (eval): gamma=1, beta=0, running mean=0, var=1,
    # folded into per-channel scale/shift applied after the ELU; packed [q|k|v].
    gamma = jnp.ones((1, 3 * D), jnp.float32)
    beta = jnp.zeros((1, 3 * D), jnp.float32)
    rmean = jnp.zeros((1, 3 * D), jnp.float32)
    rvar = jnp.ones((1, 3 * D), jnp.float32)
    inv = gamma / jnp.sqrt(rvar + BN_EPS)

    wk = nrm(keys[8], (D, D))
    wv = nrm(keys[10], (D, D))
    zz = jnp.zeros((D, D), jnp.float32)
    proj_kv_w = jnp.concatenate(
        [jnp.concatenate([wk, zz], axis=1),
         jnp.concatenate([zz, wv], axis=1)], axis=0)       # block-diag(Wk, Wv)

    return dict(
        ln1=jnp.stack([jnp.ones((D,), jnp.float32), jnp.zeros((D,), jnp.float32)]),
        conv_w=jnp.concatenate([nrm(keys[0], (ks * ks, D)),
                                nrm(keys[2], (ks * ks, D)),
                                nrm(keys[4], (ks * ks, D))], axis=-1),  # (k*k, 3D)
        conv_b=jnp.concatenate([nrm(keys[1], (1, D), 0.02),
                                nrm(keys[3], (1, D), 0.02),
                                nrm(keys[5], (1, D), 0.02)], axis=-1),  # (1, 3D)
        bn_scale=inv,
        bn_shift=beta - rmean * inv,
        proj_q_w=nrm(keys[6], (D, D)),
        proj_q_b=nrm(keys[7], (1, D), 0.02),
        proj_kv_w=proj_kv_w,
        proj_kv_b=jnp.concatenate([nrm(keys[9], (1, D), 0.02),
                                   nrm(keys[11], (1, D), 0.02)], axis=-1),
        ln2=jnp.stack([jnp.ones((D,), jnp.float32), jnp.zeros((D,), jnp.float32)]),
        ff1_w=nrm(keys[12], (D, ffh)),
        ff1_b=nrm(keys[13], (1, ffh), 0.02),
        ff2_w=nrm(keys[14], (ffh, D)),
        ff2_b=nrm(keys[15], (1, D), 0.02),
    )


if __name__ == "__main__":
    root = jax.random.PRNGKey(0)
    pkey, xkey = jax.random.split(root)
    params = init_params(pkey)

    N = CFG['target_inp_h'] * CFG['target_inp_w']
    D = CFG['embed_dim']
    x = jax.random.normal(xkey, (B, N, D), jnp.float32)

    fwd = jax.jit(mixed_attention_forward)
    out = jax.block_until_ready(fwd(x, params))

    assert out.shape == (B, N, D), out.shape
    assert bool(jnp.all(jnp.isfinite(out)))
    print("KERNEL_OK")
</pallas_src>

<mosaic_0001>
module attributes {stable_mosaic.version = 11 : i64} {
  func.func @_mixed_attn_kernel(%arg0: i32, %arg1: memref<2x64x32xf32, #tpu.memory_space<vmem>>, %arg2: memref<576x64xf32, #tpu.memory_space<vmem>>, %arg3: memref<32x96xf32, #tpu.memory_space<vmem>>, %arg4: memref<16x64xf32, #tpu.memory_space<vmem>>, %arg5: memref<64x64xf32, #tpu.memory_space<vmem>>, %arg6: memref<64x64xf32, #tpu.memory_space<vmem>>, %arg7: memref<2x32xf32, #tpu.memory_space<vmem>>, %arg8: memref<9x96xf32, #tpu.memory_space<vmem>>, %arg9: memref<1x96xf32, #tpu.memory_space<vmem>>, %arg10: memref<1x96xf32, #tpu.memory_space<vmem>>, %arg11: memref<1x96xf32, #tpu.memory_space<vmem>>, %arg12: memref<32x32xf32, #tpu.memory_space<vmem>>, %arg13: memref<1x32xf32, #tpu.memory_space<vmem>>, %arg14: memref<64x64xf32, #tpu.memory_space<vmem>>, %arg15: memref<1x64xf32, #tpu.memory_space<vmem>>, %arg16: memref<2x32xf32, #tpu.memory_space<vmem>>, %arg17: memref<32x64xf32, #tpu.memory_space<vmem>>, %arg18: memref<1x64xf32, #tpu.memory_space<vmem>>, %arg19: memref<64x32xf32, #tpu.memory_space<vmem>>, %arg20: memref<1x32xf32, #tpu.memory_space<vmem>>, %arg21: memref<2x64x32xf32, #tpu.memory_space<vmem>>) attributes {dimension_semantics = [#tpu.dimension_semantics<parallel>], iteration_bounds = array<i64: 1>, scalar_prefetch = 0 : i64, scratch_operands = 0 : i64, tpu.core_type = #tpu.core_type<tc>, window_params = [{transform_indices = @transform_0, window_bounds = array<i64: 2, 64, 32>}, {pipeline_mode = #tpu.pipeline_mode<synchronous>, transform_indices = @transform_1, window_bounds = array<i64: 576, 64>}, {pipeline_mode = #tpu.pipeline_mode<synchronous>, transform_indices = @transform_2, window_bounds = array<i64: 32, 96>}, {pipeline_mode = #tpu.pipeline_mode<synchronous>, transform_indices = @transform_3, window_bounds = array<i64: 16, 64>}, {pipeline_mode = #tpu.pipeline_mode<synchronous>, transform_indices = @transform_4, window_bounds = array<i64: 64, 64>}, {pipeline_mode = #tpu.pipeline_mode<synchronous>, transform_indices = @transform_5, window_bounds = array<i64: 64, 64>}, {pipeline_mode = #tpu.pipeline_mode<synchronous>, transform_indices = @transform_6, window_bounds = array<i64: 2, 32>}, {pipeline_mode = #tpu.pipeline_mode<synchronous>, transform_indices = @transform_7, window_bounds = array<i64: 9, 96>}, {pipeline_mode = #tpu.pipeline_mode<synchronous>, transform_indices = @transform_8, window_bounds = array<i64: 1, 96>}, {pipeline_mode = #tpu.pipeline_mode<synchronous>, transform_indices = @transform_9, window_bounds = array<i64: 1, 96>}, {pipeline_mode = #tpu.pipeline_mode<synchronous>, transform_indices = @transform_10, window_bounds = array<i64: 1, 96>}, {pipeline_mode = #tpu.pipeline_mode<synchronous>, transform_indices = @transform_11, window_bounds = array<i64: 32, 32>}, {pipeline_mode = #tpu.pipeline_mode<synchronous>, transform_indices = @transform_12, window_bounds = array<i64: 1, 32>}, {pipeline_mode = #tpu.pipeline_mode<synchronous>, transform_indices = @transform_13, window_bounds = array<i64: 64, 64>}, {pipeline_mode = #tpu.pipeline_mode<synchronous>, transform_indices = @transform_14, window_bounds = array<i64: 1, 64>}, {pipeline_mode = #tpu.pipeline_mode<synchronous>, transform_indices = @transform_15, window_bounds = array<i64: 2, 32>}, {pipeline_mode = #tpu.pipeline_mode<synchronous>, transform_indices = @transform_16, window_bounds = array<i64: 32, 64>}, {pipeline_mode = #tpu.pipeline_mode<synchronous>, transform_indices = @transform_17, window_bounds = array<i64: 1, 64>}, {pipeline_mode = #tpu.pipeline_mode<synchronous>, transform_indices = @transform_18, window_bounds = array<i64: 64, 32>}, {pipeline_mode = #tpu.pipeline_mode<synchronous>, transform_indices = @transform_19, window_bounds = array<i64: 1, 32>}, {transform_indices = @transform_20, window_bounds = array<i64: 2, 64, 32>}]} {
    %c0 = arith.constant 0 : index
    %c0_0 = arith.constant 0 : index
    %0 = vector.load %arg2[%c0, %c0_0] : memref<576x64xf32, #tpu.memory_space<vmem>>, vector<576x64xf32>
    %c0_1 = arith.constant 0 : index
    %c0_2 = arith.constant 0 : index
    %1 = vector.load %arg3[%c0_1, %c0_2] : memref<32x96xf32, #tpu.memory_space<vmem>>, vector<32x96xf32>
    %c0_3 = arith.constant 0 : index
    %c0_4 = arith.constant 0 : index
    %2 = vector.load %arg4[%c0_3, %c0_4] : memref<16x64xf32, #tpu.memory_space<vmem>>, vector<16x64xf32>
    %c0_5 = arith.constant 0 : index
    %c0_6 = arith.constant 0 : index
    %3 = vector.load %arg5[%c0_5, %c0_6] : memref<64x64xf32, #tpu.memory_space<vmem>>, vector<64x64xf32>
    %c0_7 = arith.constant 0 : index
    %c0_8 = arith.constant 0 : index
    %4 = vector.load %arg6[%c0_7, %c0_8] : memref<64x64xf32, #tpu.memory_space<vmem>>, vector<64x64xf32>
    %c0_9 = arith.constant 0 : index
    %c0_10 = arith.constant 0 : index
    %5 = vector.load %arg7[%c0_9, %c0_10] : memref<2x32xf32, #tpu.memory_space<vmem>>, vector<2x32xf32>
    %c0_11 = arith.constant 0 : index
    %c0_12 = arith.constant 0 : index
    %6 = vector.load %arg8[%c0_11, %c0_12] : memref<9x96xf32, #tpu.memory_space<vmem>>, vector<9x96xf32>
    %c0_13 = arith.constant 0 : index
    %c0_14 = arith.constant 0 : index
    %7 = vector.load %arg9[%c0_13, %c0_14] : memref<1x96xf32, #tpu.memory_space<vmem>>, vector<1x96xf32>
    %c0_15 = arith.constant 0 : index
    %c0_16 = arith.constant 0 : index
    %8 = vector.load %arg10[%c0_15, %c0_16] : memref<1x96xf32, #tpu.memory_space<vmem>>, vector<1x96xf32>
    %c0_17 = arith.constant 0 : index
    %c0_18 = arith.constant 0 : index
    %9 = vector.load %arg11[%c0_17, %c0_18] : memref<1x96xf32, #tpu.memory_space<vmem>>, vector<1x96xf32>
    %c0_19 = arith.constant 0 : index
    %c0_20 = arith.constant 0 : index
    %10 = vector.load %arg12[%c0_19, %c0_20] : memref<32x32xf32, #tpu.memory_space<vmem>>, vector<32x32xf32>
    %c0_21 = arith.constant 0 : index
    %c0_22 = arith.constant 0 : index
    %11 = vector.load %arg13[%c0_21, %c0_22] : memref<1x32xf32, #tpu.memory_space<vmem>>, vector<1x32xf32>
    %c0_23 = arith.constant 0 : index
    %c0_24 = arith.constant 0 : index
    %12 = vector.load %arg14[%c0_23, %c0_24] : memref<64x64xf32, #tpu.memory_space<vmem>>, vector<64x64xf32>
    %c0_25 = arith.constant 0 : index
    %c0_26 = arith.constant 0 : index
    %13 = vector.load %arg15[%c0_25, %c0_26] : memref<1x64xf32, #tpu.memory_space<vmem>>, vector<1x64xf32>
    %c0_27 = arith.constant 0 : index
    %c0_28 = arith.constant 0 : index
    %14 = vector.load %arg16[%c0_27, %c0_28] : memref<2x32xf32, #tpu.memory_space<vmem>>, vector<2x32xf32>
    %c0_29 = arith.constant 0 : index
    %c0_30 = arith.constant 0 : index
    %15 = vector.load %arg17[%c0_29, %c0_30] : memref<32x64xf32, #tpu.memory_space<vmem>>, vector<32x64xf32>
    %c0_31 = arith.constant 0 : index
    %c0_32 = arith.constant 0 : index
    %16 = vector.load %arg18[%c0_31, %c0_32] : memref<1x64xf32, #tpu.memory_space<vmem>>, vector<1x64xf32>
    %c0_33 = arith.constant 0 : index
    %c0_34 = arith.constant 0 : index
    %17 = vector.load %arg19[%c0_33, %c0_34] : memref<64x32xf32, #tpu.memory_space<vmem>>, vector<64x32xf32>
    %c0_35 = arith.constant 0 : index
    %c0_36 = arith.constant 0 : index
    %18 = vector.load %arg20[%c0_35, %c0_36] : memref<1x32xf32, #tpu.memory_space<vmem>>, vector<1x32xf32>
    %c0_37 = arith.constant 0 : index
    %c0_38 = arith.constant 0 : index
    %c0_39 = arith.constant 0 : index
    %19 = vector.load %arg1[%c0_37, %c0_38, %c0_39] : memref<2x64x32xf32, #tpu.memory_space<vmem>>, vector<1x64x32xf32>
    %20 = vector.shape_cast %19 : vector<1x64x32xf32> to vector<64x32xf32>
    %21 = vector.extract_strided_slice %5 {offsets = [0, 0], sizes = [1, 32], strides = [1, 1]} : vector<2x32xf32> to vector<1x32xf32>
    %22 = vector.extract_strided_slice %5 {offsets = [1, 0], sizes = [1, 32], strides = [1, 1]} : vector<2x32xf32> to vector<1x32xf32>
    %cst = arith.constant dense<0.000000e+00> : vector<64xf32>
    %23 = vector.multi_reduction <add>, %20, %cst [1] : vector<64x32xf32> to vector<64xf32>
    %24 = vector.shape_cast %23 : vector<64xf32> to vector<64x1xf32>
    %cst_40 = arith.constant 3.200000e+01 : f32
    %25 = vector.broadcast %cst_40 : f32 to vector<64x1xf32>
    %26 = arith.divf %24, %25 : vector<64x1xf32>
    %27 = vector.broadcast %26 : vector<64x1xf32> to vector<64x32xf32>
    %28 = arith.subf %20, %27 : vector<64x32xf32>
    %29 = arith.mulf %28, %28 : vector<64x32xf32>
    %cst_41 = arith.constant dense<0.000000e+00> : vector<64xf32>
    %30 = vector.multi_reduction <add>, %29, %cst_41 [1] : vector<64x32xf32> to vector<64xf32>
    %31 = vector.shape_cast %30 : vector<64xf32> to vector<64x1xf32>
    %cst_42 = arith.constant 3.200000e+01 : f32
    %32 = vector.broadcast %cst_42 : f32 to vector<64x1xf32>
    %33 = arith.divf %31, %32 : vector<64x1xf32>
    %cst_43 = arith.constant 9.99999974E-6 : f32
    %34 = vector.broadcast %cst_43 : f32 to vector<64x1xf32>
    %35 = arith.addf %33, %34 : vector<64x1xf32>
    %36 = math.rsqrt %35 : vector<64x1xf32>
    %37 = vector.broadcast %36 : vector<64x1xf32> to vector<64x32xf32>
    %38 = arith.mulf %28, %37 : vector<64x32xf32>
    %39 = vector.broadcast %21 : vector<1x32xf32> to vector<64x32xf32>
    %40 = arith.mulf %38, %39 : vector<64x32xf32>
    %41 = vector.broadcast %22 : vector<1x32xf32> to vector<64x32xf32>
    %42 = arith.addf %40, %41 : vector<64x32xf32>
    %cst_44 = arith.constant dense<0.000000e+00> : vector<64x96xf32>
    %43 = tpu.matmul %42, %1, %cst_44 {dimension_numbers = #tpu.dot_dimension_numbers<[1], [0], [0], [1], [0, 0, 1, 1], [], []>} : vector<64x32xf32>, vector<32x96xf32>, vector<64x96xf32> -> vector<64x96xf32>
    %cst_45 = arith.constant dense<0.000000e+00> : vector<576x96xf32>
    %44 = tpu.matmul %0, %43, %cst_45 {dimension_numbers = #tpu.dot_dimension_numbers<[1], [0], [0], [1], [0, 0, 1, 1], [], []>} : vector<576x64xf32>, vector<64x96xf32>, vector<576x96xf32> -> vector<576x96xf32>
    %cst_46 = arith.constant 0.000000e+00 : f32
    %45 = vector.broadcast %cst_46 : f32 to vector<64x96xf32>
    %46 = vector.extract_strided_slice %44 {offsets = [0, 0], sizes = [64, 96], strides = [1, 1]} : vector<576x96xf32> to vector<64x96xf32>
    %47 = vector.extract_strided_slice %6 {offsets = [0, 0], sizes = [1, 96], strides = [1, 1]} : vector<9x96xf32> to vector<1x96xf32>
    %48 = vector.broadcast %47 : vector<1x96xf32> to vector<64x96xf32>
    %49 = arith.mulf %46, %48 : vector<64x96xf32>
    %50 = arith.addf %45, %49 : vector<64x96xf32>
    %51 = vector.extract_strided_slice %44 {offsets = [64, 0], sizes = [64, 96], strides = [1, 1]} : vector<576x96xf32> to vector<64x96xf32>
    %52 = vector.extract_strided_slice %6 {offsets = [1, 0], sizes = [1, 96], strides = [1, 1]} : vector<9x96xf32> to vector<1x96xf32>
    %53 = vector.broadcast %52 : vector<1x96xf32> to vector<64x96xf32>
    %54 = arith.mulf %51, %53 : vector<64x96xf32>
    %55 = arith.addf %50, %54 : vector<64x96xf32>
    %56 = vector.extract_strided_slice %44 {offsets = [128, 0], sizes = [64, 96], strides = [1, 1]} : vector<576x96xf32> to vector<64x96xf32>
    %57 = vector.extract_strided_slice %6 {offsets = [2, 0], sizes = [1, 96], strides = [1, 1]} : vector<9x96xf32> to vector<1x96xf32>
    %58 = vector.broadcast %57 : vector<1x96xf32> to vector<64x96xf32>
    %59 = arith.mulf %56, %58 : vector<64x96xf32>
    %60 = arith.addf %55, %59 : vector<64x96xf32>
    %61 = vector.extract_strided_slice %44 {offsets = [192, 0], sizes = [64, 96], strides = [1, 1]} : vector<576x96xf32> to vector<64x96xf32>
    %62 = vector.extract_strided_slice %6 {offsets = [3, 0], sizes = [1, 96], strides = [1, 1]} : vector<9x96xf32> to vector<1x96xf32>
    %63 = vector.broadcast %62 : vector<1x96xf32> to vector<64x96xf32>
    %64 = arith.mulf %61, %63 : vector<64x96xf32>
    %65 = arith.addf %60, %64 : vector<64x96xf32>
    %66 = vector.extract_strided_slice %44 {offsets = [256, 0], sizes = [64, 96], strides = [1, 1]} : vector<576x96xf32> to vector<64x96xf32>
    %67 = vector.extract_strided_slice %6 {offsets = [4, 0], sizes = [1, 96], strides = [1, 1]} : vector<9x96xf32> to vector<1x96xf32>
    %68 = vector.broadcast %67 : vector<1x96xf32> to vector<64x96xf32>
    %69 = arith.mulf %66, %68 : vector<64x96xf32>
    %70 = arith.addf %65, %69 : vector<64x96xf32>
    %71 = vector.extract_strided_slice %44 {offsets = [320, 0], sizes = [64, 96], strides = [1, 1]} : vector<576x96xf32> to vector<64x96xf32>
    %72 = vector.extract_strided_slice %6 {offsets = [5, 0], sizes = [1, 96], strides = [1, 1]} : vector<9x96xf32> to vector<1x96xf32>
    %73 = vector.broadcast %72 : vector<1x96xf32> to vector<64x96xf32>
    %74 = arith.mulf %71, %73 : vector<64x96xf32>
    %75 = arith.addf %70, %74 : vector<64x96xf32>
    %76 = vector.extract_strided_slice %44 {offsets = [384, 0], sizes = [64, 96], strides = [1, 1]} : vector<576x96xf32> to vector<64x96xf32>
    %77 = vector.extract_strided_slice %6 {offsets = [6, 0], sizes = [1, 96], strides = [1, 1]} : vector<9x96xf32> to vector<1x96xf32>
    %78 = vector.broadcast %77 : vector<1x96xf32> to vector<64x96xf32>
    %79 = arith.mulf %76, %78 : vector<64x96xf32>
    %80 = arith.addf %75, %79 : vector<64x96xf32>
    %81 = vector.extract_strided_slice %44 {offsets = [448, 0], sizes = [64, 96], strides = [1, 1]} : vector<576x96xf32> to vector<64x96xf32>
    %82 = vector.extract_strided_slice %6 {offsets = [7, 0], sizes = [1, 96], strides = [1, 1]} : vector<9x96xf32> to vector<1x96xf32>
    %83 = vector.broadcast %82 : vector<1x96xf32> to vector<64x96xf32>
    %84 = arith.mulf %81, %83 : vector<64x96xf32>
    %85 = arith.addf %80, %84 : vector<64x96xf32>
    %86 = vector.extract_strided_slice %44 {offsets = [512, 0], sizes = [64, 96], strides = [1, 1]} : vector<576x96xf32> to vector<64x96xf32>
    %87 = vector.extract_strided_slice %6 {offsets = [8, 0], sizes = [1, 96], strides = [1, 1]} : vector<9x96xf32> to vector<1x96xf32>
    %88 = vector.broadcast %87 : vector<1x96xf32> to vector<64x96xf32>
    %89 = arith.mulf %86, %88 : vector<64x96xf32>
    %90 = arith.addf %85, %89 : vector<64x96xf32>
    %91 = vector.broadcast %7 : vector<1x96xf32> to vector<64x96xf32>
    %92 = arith.addf %90, %91 : vector<64x96xf32>
    %cst_47 = arith.constant 0.000000e+00 : f32
    %93 = vector.broadcast %cst_47 : f32 to vector<64x96xf32>
    %94 = arith.cmpf ogt, %92, %93 : vector<64x96xf32>
    %cst_48 = arith.constant 0.000000e+00 : f32
    %95 = vector.broadcast %cst_48 : f32 to vector<64x96xf32>
    %96 = arith.minimumf %92, %95 : vector<64x96xf32>
    %97 = math.exp %96 : vector<64x96xf32>
    %cst_49 = arith.constant 1.000000e+00 : f32
    %98 = vector.broadcast %cst_49 : f32 to vector<64x96xf32>
    %99 = arith.subf %97, %98 : vector<64x96xf32>
    %100 = arith.select %94, %92, %99 : vector<64x96xi1>, vector<64x96xf32>
    %101 = vector.broadcast %8 : vector<1x96xf32> to vector<64x96xf32>
    %102 = arith.mulf %100, %101 : vector<64x96xf32>
    %103 = vector.broadcast %9 : vector<1x96xf32> to vector<64x96xf32>
    %104 = arith.addf %102, %103 : vector<64x96xf32>
    %105 = vector.extract_strided_slice %104 {offsets = [0, 0], sizes = [64, 32], strides = [1, 1]} : vector<64x96xf32> to vector<64x32xf32>
    %cst_50 = arith.constant dense<0.000000e+00> : vector<16x96xf32>
    %106 = tpu.matmul %2, %104, %cst_50 {dimension_numbers = #tpu.dot_dimension_numbers<[1], [0], [0], [1], [0, 0, 1, 1], [], []>} : vector<16x64xf32>, vector<64x96xf32>, vector<16x96xf32> -> vector<16x96xf32>
    %107 = vector.extract_strided_slice %106 {offsets = [0, 32], sizes = [16, 64], strides = [1, 1]} : vector<16x96xf32> to vector<16x64xf32>
    %cst_51 = arith.constant dense<0.000000e+00> : vector<64x32xf32>
    %108 = tpu.matmul %105, %10, %cst_51 {dimension_numbers = #tpu.dot_dimension_numbers<[1], [0], [0], [1], [0, 0, 1, 1], [], []>} : vector<64x32xf32>, vector<32x32xf32>, vector<64x32xf32> -> vector<64x32xf32>
    %109 = vector.broadcast %11 : vector<1x32xf32> to vector<64x32xf32>
    %110 = arith.addf %108, %109 : vector<64x32xf32>
    %cst_52 = arith.constant dense<0.000000e+00> : vector<16x64xf32>
    %111 = tpu.matmul %107, %12, %cst_52 {dimension_numbers = #tpu.dot_dimension_numbers<[1], [0], [0], [1], [0, 0, 1, 1], [], []>} : vector<16x64xf32>, vector<64x64xf32>, vector<16x64xf32> -> vector<16x64xf32>
    %112 = vector.broadcast %13 : vector<1x64xf32> to vector<16x64xf32>
    %113 = arith.addf %111, %112 : vector<16x64xf32>
    %114 = tpu.concatenate %113, %113, %113, %113 in 0 : vector<16x64xf32>, vector<16x64xf32>, vector<16x64xf32>, vector<16x64xf32> -> vector<64x64xf32>
    %115 = arith.mulf %114, %3 : vector<64x64xf32>
    %116 = vector.extract_strided_slice %115 {offsets = [0, 0], sizes = [64, 32], strides = [1, 1]} : vector<64x64xf32> to vector<64x32xf32>
    %117 = vector.extract_strided_slice %115 {offsets = [0, 32], sizes = [64, 32], strides = [1, 1]} : vector<64x64xf32> to vector<64x32xf32>
    %cst_53 = arith.constant 0.353553385 : f32
    %118 = vector.broadcast %cst_53 : f32 to vector<64x32xf32>
    %119 = arith.mulf %110, %118 : vector<64x32xf32>
    %cst_54 = arith.constant dense<0.000000e+00> : vector<64x64xf32>
    %120 = tpu.matmul %119, %116, %cst_54 {dimension_numbers = #tpu.dot_dimension_numbers<[1], [1], [0], [0], [0, 0, 1, 0], [], []>} : vector<64x32xf32>, vector<64x32xf32>, vector<64x64xf32> -> vector<64x64xf32>
    %cst_55 = arith.constant dense<0xFF800000> : vector<64xf32>
    %121 = vector.multi_reduction <maximumf>, %120, %cst_55 [1] : vector<64x64xf32> to vector<64xf32>
    %122 = vector.shape_cast %121 : vector<64xf32> to vector<64x1xf32>
    %123 = vector.broadcast %122 : vector<64x1xf32> to vector<64x64xf32>
    %124 = arith.subf %120, %123 : vector<64x64xf32>
    %125 = math.exp %124 : vector<64x64xf32>
    %cst_56 = arith.constant dense<0.000000e+00> : vector<64x64xf32>
    %126 = tpu.matmul %125, %4, %cst_56 {dimension_numbers = #tpu.dot_dimension_numbers<[1], [0], [0], [1], [0, 0, 1, 1], [], []>} : vector<64x64xf32>, vector<64x64xf32>, vector<64x64xf32> -> vector<64x64xf32>
    %127 = arith.divf %125, %126 : vector<64x64xf32>
    %cst_57 = arith.constant dense<0.000000e+00> : vector<64x32xf32>
    %128 = tpu.matmul %127, %117, %cst_57 {dimension_numbers = #tpu.dot_dimension_numbers<[1], [0], [0], [1], [0, 0, 1, 1], [], []>} : vector<64x64xf32>, vector<64x32xf32>, vector<64x32xf32> -> vector<64x32xf32>
    %129 = arith.addf %20, %128 : vector<64x32xf32>
    %130 = vector.extract_strided_slice %14 {offsets = [0, 0], sizes = [1, 32], strides = [1, 1]} : vector<2x32xf32> to vector<1x32xf32>
    %131 = vector.extract_strided_slice %14 {offsets = [1, 0], sizes = [1, 32], strides = [1, 1]} : vector<2x32xf32> to vector<1x32xf32>
    %cst_58 = arith.constant dense<0.000000e+00> : vector<64xf32>
    %132 = vector.multi_reduction <add>, %129, %cst_58 [1] : vector<64x32xf32> to vector<64xf32>
    %133 = vector.shape_cast %132 : vector<64xf32> to vector<64x1xf32>
    %cst_59 = arith.constant 3.200000e+01 : f32
    %134 = vector.broadcast %cst_59 : f32 to vector<64x1xf32>
    %135 = arith.divf %133, %134 : vector<64x1xf32>
    %136 = vector.broadcast %135 : vector<64x1xf32> to vector<64x32xf32>
    %137 = arith.subf %129, %136 : vector<64x32xf32>
    %138 = arith.mulf %137, %137 : vector<64x32xf32>
    %cst_60 = arith.constant dense<0.000000e+00> : vector<64xf32>
    %139 = vector.multi_reduction <add>, %138, %cst_60 [1] : vector<64x32xf32> to vector<64xf32>
    %140 = vector.shape_cast %139 : vector<64xf32> to vector<64x1xf32>
    %cst_61 = arith.constant 3.200000e+01 : f32
    %141 = vector.broadcast %cst_61 : f32 to vector<64x1xf32>
    %142 = arith.divf %140, %141 : vector<64x1xf32>
    %cst_62 = arith.constant 9.99999974E-6 : f32
    %143 = vector.broadcast %cst_62 : f32 to vector<64x1xf32>
    %144 = arith.addf %142, %143 : vector<64x1xf32>
    %145 = math.rsqrt %144 : vector<64x1xf32>
    %146 = vector.broadcast %145 : vector<64x1xf32> to vector<64x32xf32>
    %147 = arith.mulf %137, %146 : vector<64x32xf32>
    %148 = vector.broadcast %130 : vector<1x32xf32> to vector<64x32xf32>
    %149 = arith.mulf %147, %148 : vector<64x32xf32>
    %150 = vector.broadcast %131 : vector<1x32xf32> to vector<64x32xf32>
    %151 = arith.addf %149, %150 : vector<64x32xf32>
    %cst_63 = arith.constant dense<0.000000e+00> : vector<64x64xf32>
    %152 = tpu.matmul %151, %15, %cst_63 {dimension_numbers = #tpu.dot_dimension_numbers<[1], [0], [0], [1], [0, 0, 1, 1], [], []>} : vector<64x32xf32>, vector<32x64xf32>, vector<64x64xf32> -> vector<64x64xf32>
    %153 = vector.broadcast %16 : vector<1x64xf32> to vector<64x64xf32>
    %154 = arith.addf %152, %153 : vector<64x64xf32>
    %cst_64 = arith.constant 5.000000e-01 : f32
    %155 = vector.broadcast %cst_64 : f32 to vector<64x64xf32>
    %156 = arith.mulf %155, %154 : vector<64x64xf32>
    %cst_65 = arith.constant 0.707106769 : f32
    %157 = vector.broadcast %cst_65 : f32 to vector<64x64xf32>
    %158 = arith.mulf %154, %157 : vector<64x64xf32>
    %cst_66 = arith.constant 0.000000e+00 : f32
    %159 = vector.broadcast %cst_66 : f32 to vector<64x64xf32>
    %160 = arith.cmpf oge, %158, %159 : vector<64x64xf32>
    %cst_67 = arith.constant 1.000000e+00 : f32
    %cst_68 = arith.constant -1.000000e+00 : f32
    %161 = vector.broadcast %cst_67 : f32 to vector<64x64xf32>
    %162 = vector.broadcast %cst_68 : f32 to vector<64x64xf32>
    %163 = arith.select %160, %161, %162 : vector<64x64xi1>, vector<64x64xf32>
    %164 = math.absf %158 : vector<64x64xf32>
    %cst_69 = arith.constant 0.327591091 : f32
    %165 = vector.broadcast %cst_69 : f32 to vector<64x64xf32>
    %166 = arith.mulf %165, %164 : vector<64x64xf32>
    %cst_70 = arith.constant 1.000000e+00 : f32
    %167 = vector.broadcast %cst_70 : f32 to vector<64x64xf32>
    %168 = arith.addf %167, %166 : vector<64x64xf32>
    %cst_71 = arith.constant 1.000000e+00 : f32
    %169 = vector.broadcast %cst_71 : f32 to vector<64x64xf32>
    %170 = arith.divf %169, %168 : vector<64x64xf32>
    %cst_72 = arith.constant 1.06140542 : f32
    %171 = vector.broadcast %cst_72 : f32 to vector<64x64xf32>
    %172 = arith.mulf %171, %170 : vector<64x64xf32>
    %cst_73 = arith.constant -1.45315206 : f32
    %173 = vector.broadcast %cst_73 : f32 to vector<64x64xf32>
    %174 = arith.addf %172, %173 : vector<64x64xf32>
    %175 = arith.mulf %174, %170 : vector<64x64xf32>
    %cst_74 = arith.constant 1.42141378 : f32
    %176 = vector.broadcast %cst_74 : f32 to vector<64x64xf32>
    %177 = arith.addf %175, %176 : vector<64x64xf32>
    %178 = arith.mulf %177, %170 : vector<64x64xf32>
    %cst_75 = arith.constant -0.284496725 : f32
    %179 = vector.broadcast %cst_75 : f32 to vector<64x64xf32>
    %180 = arith.addf %178, %179 : vector<64x64xf32>
    %181 = arith.mulf %180, %170 : vector<64x64xf32>
    %cst_76 = arith.constant 0.254829586 : f32
    %182 = vector.broadcast %cst_76 : f32 to vector<64x64xf32>
    %183 = arith.addf %181, %182 : vector<64x64xf32>
    %184 = arith.mulf %183, %170 : vector<64x64xf32>
    %cst_77 = arith.constant 0.000000e+00 : f32
    %185 = vector.broadcast %cst_77 : f32 to vector<64x64xf32>
    %186 = arith.subf %185, %164 : vector<64x64xf32>
    %187 = arith.mulf %186, %164 : vector<64x64xf32>
    %188 = math.exp %187 : vector<64x64xf32>
    %189 = arith.mulf %184, %188 : vector<64x64xf32>
    %cst_78 = arith.constant 1.000000e+00 : f32
    %190 = vector.broadcast %cst_78 : f32 to vector<64x64xf32>
    %191 = arith.subf %190, %189 : vector<64x64xf32>
    %192 = arith.mulf %163, %191 : vector<64x64xf32>
    %cst_79 = arith.constant 1.000000e+00 : f32
    %193 = vector.broadcast %cst_79 : f32 to vector<64x64xf32>
    %194 = arith.addf %193, %192 : vector<64x64xf32>
    %195 = arith.mulf %156, %194 : vector<64x64xf32>
    %cst_80 = arith.constant dense<0.000000e+00> : vector<64x32xf32>
    %196 = tpu.matmul %195, %17, %cst_80 {dimension_numbers = #tpu.dot_dimension_numbers<[1], [0], [0], [1], [0, 0, 1, 1], [], []>} : vector<64x64xf32>, vector<64x32xf32>, vector<64x32xf32> -> vector<64x32xf32>
    %197 = vector.broadcast %18 : vector<1x32xf32> to vector<64x32xf32>
    %198 = arith.addf %196, %197 : vector<64x32xf32>
    %199 = arith.addf %129, %198 : vector<64x32xf32>
    %c0_81 = arith.constant 0 : index
    %c0_82 = arith.constant 0 : index
    %c0_83 = arith.constant 0 : index
    %200 = vector.load %arg21[%c0_81, %c0_82, %c0_83] : memref<2x64x32xf32, #tpu.memory_space<vmem>>, vector<1x64x32xf32>
    %201 = vector.shape_cast %200 : vector<1x64x32xf32> to vector<64x32xf32>
    %202 = vector.shape_cast %199 : vector<64x32xf32> to vector<1x64x32xf32>
    tpu.vector_store %arg21[%c0_81, %c0_82, %c0_83], %202 {strides = array<i32>} : memref<2x64x32xf32, #tpu.memory_space<vmem>>, vector<1x64x32xf32>,
    %c1 = arith.constant 1 : index
    %c0_84 = arith.constant 0 : index
    %c0_85 = arith.constant 0 : index
    %203 = vector.load %arg1[%c1, %c0_84, %c0_85] : memref<2x64x32xf32, #tpu.memory_space<vmem>>, vector<1x64x32xf32>
    %204 = vector.shape_cast %203 : vector<1x64x32xf32> to vector<64x32xf32>
    %205 = vector.extract_strided_slice %5 {offsets = [0, 0], sizes = [1, 32], strides = [1, 1]} : vector<2x32xf32> to vector<1x32xf32>
    %206 = vector.extract_strided_slice %5 {offsets = [1, 0], sizes = [1, 32], strides = [1, 1]} : vector<2x32xf32> to vector<1x32xf32>
    %cst_86 = arith.constant dense<0.000000e+00> : vector<64xf32>
    %207 = vector.multi_reduction <add>, %204, %cst_86 [1] : vector<64x32xf32> to vector<64xf32>
    %208 = vector.shape_cast %207 : vector<64xf32> to vector<64x1xf32>
    %cst_87 = arith.constant 3.200000e+01 : f32
    %209 = vector.broadcast %cst_87 : f32 to vector<64x1xf32>
    %210 = arith.divf %208, %209 : vector<64x1xf32>
    %211 = vector.broadcast %210 : vector<64x1xf32> to vector<64x32xf32>
    %212 = arith.subf %204, %211 : vector<64x32xf32>
    %213 = arith.mulf %212, %212 : vector<64x32xf32>
    %cst_88 = arith.constant dense<0.000000e+00> : vector<64xf32>
    %214 = vector.multi_reduction <add>, %213, %cst_88 [1] : vector<64x32xf32> to vector<64xf32>
    %215 = vector.shape_cast %214 : vector<64xf32> to vector<64x1xf32>
    %cst_89 = arith.constant 3.200000e+01 : f32
    %216 = vector.broadcast %cst_89 : f32 to vector<64x1xf32>
    %217 = arith.divf %215, %216 : vector<64x1xf32>
    %cst_90 = arith.constant 9.99999974E-6 : f32
    %218 = vector.broadcast %cst_90 : f32 to vector<64x1xf32>
    %219 = arith.addf %217, %218 : vector<64x1xf32>
    %220 = math.rsqrt %219 : vector<64x1xf32>
    %221 = vector.broadcast %220 : vector<64x1xf32> to vector<64x32xf32>
    %222 = arith.mulf %212, %221 : vector<64x32xf32>
    %223 = vector.broadcast %205 : vector<1x32xf32> to vector<64x32xf32>
    %224 = arith.mulf %222, %223 : vector<64x32xf32>
    %225 = vector.broadcast %206 : vector<1x32xf32> to vector<64x32xf32>
    %226 = arith.addf %224, %225 : vector<64x32xf32>
    %cst_91 = arith.constant dense<0.000000e+00> : vector<64x96xf32>
    %227 = tpu.matmul %226, %1, %cst_91 {dimension_numbers = #tpu.dot_dimension_numbers<[1], [0], [0], [1], [0, 0, 1, 1], [], []>} : vector<64x32xf32>, vector<32x96xf32>, vector<64x96xf32> -> vector<64x96xf32>
    %cst_92 = arith.constant dense<0.000000e+00> : vector<576x96xf32>
    %228 = tpu.matmul %0, %227, %cst_92 {dimension_numbers = #tpu.dot_dimension_numbers<[1], [0], [0], [1], [0, 0, 1, 1], [], []>} : vector<576x64xf32>, vector<64x96xf32>, vector<576x96xf32> -> vector<576x96xf32>
    %cst_93 = arith.constant 0.000000e+00 : f32
    %229 = vector.broadcast %cst_93 : f32 to vector<64x96xf32>
    %230 = vector.extract_strided_slice %228 {offsets = [0, 0], sizes = [64, 96], strides = [1, 1]} : vector<576x96xf32> to vector<64x96xf32>
    %231 = vector.extract_strided_slice %6 {offsets = [0, 0], sizes = [1, 96], strides = [1, 1]} : vector<9x96xf32> to vector<1x96xf32>
    %232 = vector.broadcast %231 : vector<1x96xf32> to vector<64x96xf32>
    %233 = arith.mulf %230, %232 : vector<64x96xf32>
    %234 = arith.addf %229, %233 : vector<64x96xf32>
    %235 = vector.extract_strided_slice %228 {offsets = [64, 0], sizes = [64, 96], strides = [1, 1]} : vector<576x96xf32> to vector<64x96xf32>
    %236 = vector.extract_strided_slice %6 {offsets = [1, 0], sizes = [1, 96], strides = [1, 1]} : vector<9x96xf32> to vector<1x96xf32>
    %237 = vector.broadcast %236 : vector<1x96xf32> to vector<64x96xf32>
    %238 = arith.mulf %235, %237 : vector<64x96xf32>
    %239 = arith.addf %234, %238 : vector<64x96xf32>
    %240 = vector.extract_strided_slice %228 {offsets = [128, 0], sizes = [64, 96], strides = [1, 1]} : vector<576x96xf32> to vector<64x96xf32>
    %241 = vector.extract_strided_slice %6 {offsets = [2, 0], sizes = [1, 96], strides = [1, 1]} : vector<9x96xf32> to vector<1x96xf32>
    %242 = vector.broadcast %241 : vector<1x96xf32> to vector<64x96xf32>
    %243 = arith.mulf %240, %242 : vector<64x96xf32>
    %244 = arith.addf %239, %243 : vector<64x96xf32>
    %245 = vector.extract_strided_slice %228 {offsets = [192, 0], sizes = [64, 96], strides = [1, 1]} : vector<576x96xf32> to vector<64x96xf32>
    %246 = vector.extract_strided_slice %6 {offsets = [3, 0], sizes = [1, 96], strides = [1, 1]} : vector<9x96xf32> to vector<1x96xf32>
    %247 = vector.broadcast %246 : vector<1x96xf32> to vector<64x96xf32>
    %248 = arith.mulf %245, %247 : vector<64x96xf32>
    %249 = arith.addf %244, %248 : vector<64x96xf32>
    %250 = vector.extract_strided_slice %228 {offsets = [256, 0], sizes = [64, 96], strides = [1, 1]} : vector<576x96xf32> to vector<64x96xf32>
    %251 = vector.extract_strided_slice %6 {offsets = [4, 0], sizes = [1, 96], strides = [1, 1]} : vector<9x96xf32> to vector<1x96xf32>
    %252 = vector.broadcast %251 : vector<1x96xf32> to vector<64x96xf32>
    %253 = arith.mulf %250, %252 : vector<64x96xf32>
    %254 = arith.addf %249, %253 : vector<64x96xf32>
    %255 = vector.extract_strided_slice %228 {offsets = [320, 0], sizes = [64, 96], strides = [1, 1]} : vector<576x96xf32> to vector<64x96xf32>
    %256 = vector.extract_strided_slice %6 {offsets = [5, 0], sizes = [1, 96], strides = [1, 1]} : vector<9x96xf32> to vector<1x96xf32>
    %257 = vector.broadcast %256 : vector<1x96xf32> to vector<64x96xf32>
    %258 = arith.mulf %255, %257 : vector<64x96xf32>
    %259 = arith.addf %254, %258 : vector<64x96xf32>
    %260 = vector.extract_strided_slice %228 {offsets = [384, 0], sizes = [64, 96], strides = [1, 1]} : vector<576x96xf32> to vector<64x96xf32>
    %261 = vector.extract_strided_slice %6 {offsets = [6, 0], sizes = [1, 96], strides = [1, 1]} : vector<9x96xf32> to vector<1x96xf32>
    %262 = vector.broadcast %261 : vector<1x96xf32> to vector<64x96xf32>
    %263 = arith.mulf %260, %262 : vector<64x96xf32>
    %264 = arith.addf %259, %263 : vector<64x96xf32>
    %265 = vector.extract_strided_slice %228 {offsets = [448, 0], sizes = [64, 96], strides = [1, 1]} : vector<576x96xf32> to vector<64x96xf32>
    %266 = vector.extract_strided_slice %6 {offsets = [7, 0], sizes = [1, 96], strides = [1, 1]} : vector<9x96xf32> to vector<1x96xf32>
    %267 = vector.broadcast %266 : vector<1x96xf32> to vector<64x96xf32>
    %268 = arith.mulf %265, %267 : vector<64x96xf32>
    %269 = arith.addf %264, %268 : vector<64x96xf32>
    %270 = vector.extract_strided_slice %228 {offsets = [512, 0], sizes = [64, 96], strides = [1, 1]} : vector<576x96xf32> to vector<64x96xf32>
    %271 = vector.extract_strided_slice %6 {offsets = [8, 0], sizes = [1, 96], strides = [1, 1]} : vector<9x96xf32> to vector<1x96xf32>
    %272 = vector.broadcast %271 : vector<1x96xf32> to vector<64x96xf32>
    %273 = arith.mulf %270, %272 : vector<64x96xf32>
    %274 = arith.addf %269, %273 : vector<64x96xf32>
    %275 = vector.broadcast %7 : vector<1x96xf32> to vector<64x96xf32>
    %276 = arith.addf %274, %275 : vector<64x96xf32>
    %cst_94 = arith.constant 0.000000e+00 : f32
    %277 = vector.broadcast %cst_94 : f32 to vector<64x96xf32>
    %278 = arith.cmpf ogt, %276, %277 : vector<64x96xf32>
    %cst_95 = arith.constant 0.000000e+00 : f32
    %279 = vector.broadcast %cst_95 : f32 to vector<64x96xf32>
    %280 = arith.minimumf %276, %279 : vector<64x96xf32>
    %281 = math.exp %280 : vector<64x96xf32>
    %cst_96 = arith.constant 1.000000e+00 : f32
    %282 = vector.broadcast %cst_96 : f32 to vector<64x96xf32>
    %283 = arith.subf %281, %282 : vector<64x96xf32>
    %284 = arith.select %278, %276, %283 : vector<64x96xi1>, vector<64x96xf32>
    %285 = vector.broadcast %8 : vector<1x96xf32> to vector<64x96xf32>
    %286 = arith.mulf %284, %285 : vector<64x96xf32>
    %287 = vector.broadcast %9 : vector<1x96xf32> to vector<64x96xf32>
    %288 = arith.addf %286, %287 : vector<64x96xf32>
    %289 = vector.extract_strided_slice %288 {offsets = [0, 0], sizes = [64, 32], strides = [1, 1]} : vector<64x96xf32> to vector<64x32xf32>
    %cst_97 = arith.constant dense<0.000000e+00> : vector<16x96xf32>
    %290 = tpu.matmul %2, %288, %cst_97 {dimension_numbers = #tpu.dot_dimension_numbers<[1], [0], [0], [1], [0, 0, 1, 1], [], []>} : vector<16x64xf32>, vector<64x96xf32>, vector<16x96xf32> -> vector<16x96xf32>
    %291 = vector.extract_strided_slice %290 {offsets = [0, 32], sizes = [16, 64], strides = [1, 1]} : vector<16x96xf32> to vector<16x64xf32>
    %cst_98 = arith.constant dense<0.000000e+00> : vector<64x32xf32>
    %292 = tpu.matmul %289, %10, %cst_98 {dimension_numbers = #tpu.dot_dimension_numbers<[1], [0], [0], [1], [0, 0, 1, 1], [], []>} : vector<64x32xf32>, vector<32x32xf32>, vector<64x32xf32> -> vector<64x32xf32>
    %293 = vector.broadcast %11 : vector<1x32xf32> to vector<64x32xf32>
    %294 = arith.addf %292, %293 : vector<64x32xf32>
    %cst_99 = arith.constant dense<0.000000e+00> : vector<16x64xf32>
    %295 = tpu.matmul %291, %12, %cst_99 {dimension_numbers = #tpu.dot_dimension_numbers<[1], [0], [0], [1], [0, 0, 1, 1], [], []>} : vector<16x64xf32>, vector<64x64xf32>, vector<16x64xf32> -> vector<16x64xf32>
    %296 = vector.broadcast %13 : vector<1x64xf32> to vector<16x64xf32>
    %297 = arith.addf %295, %296 : vector<16x64xf32>
    %298 = tpu.concatenate %297, %297, %297, %297 in 0 : vector<16x64xf32>, vector<16x64xf32>, vector<16x64xf32>, vector<16x64xf32> -> vector<64x64xf32>
    %299 = arith.mulf %298, %3 : vector<64x64xf32>
    %300 = vector.extract_strided_slice %299 {offsets = [0, 0], sizes = [64, 32], strides = [1, 1]} : vector<64x64xf32> to vector<64x32xf32>
    %301 = vector.extract_strided_slice %299 {offsets = [0, 32], sizes = [64, 32], strides = [1, 1]} : vector<64x64xf32> to vector<64x32xf32>
    %cst_100 = arith.constant 0.353553385 : f32
    %302 = vector.broadcast %cst_100 : f32 to vector<64x32xf32>
    %303 = arith.mulf %294, %302 : vector<64x32xf32>
    %cst_101 = arith.constant dense<0.000000e+00> : vector<64x64xf32>
    %304 = tpu.matmul %303, %300, %cst_101 {dimension_numbers = #tpu.dot_dimension_numbers<[1], [1], [0], [0], [0, 0, 1, 0], [], []>} : vector<64x32xf32>, vector<64x32xf32>, vector<64x64xf32> -> vector<64x64xf32>
    %cst_102 = arith.constant dense<0xFF800000> : vector<64xf32>
    %305 = vector.multi_reduction <maximumf>, %304, %cst_102 [1] : vector<64x64xf32> to vector<64xf32>
    %306 = vector.shape_cast %305 : vector<64xf32> to vector<64x1xf32>
    %307 = vector.broadcast %306 : vector<64x1xf32> to vector<64x64xf32>
    %308 = arith.subf %304, %307 : vector<64x64xf32>
    %309 = math.exp %308 : vector<64x64xf32>
    %cst_103 = arith.constant dense<0.000000e+00> : vector<64x64xf32>
    %310 = tpu.matmul %309, %4, %cst_103 {dimension_numbers = #tpu.dot_dimension_numbers<[1], [0], [0], [1], [0, 0, 1, 1], [], []>} : vector<64x64xf32>, vector<64x64xf32>, vector<64x64xf32> -> vector<64x64xf32>
    %311 = arith.divf %309, %310 : vector<64x64xf32>
    %cst_104 = arith.constant dense<0.000000e+00> : vector<64x32xf32>
    %312 = tpu.matmul %311, %301, %cst_104 {dimension_numbers = #tpu.dot_dimension_numbers<[1], [0], [0], [1], [0, 0, 1, 1], [], []>} : vector<64x64xf32>, vector<64x32xf32>, vector<64x32xf32> -> vector<64x32xf32>
    %313 = arith.addf %204, %312 : vector<64x32xf32>
    %314 = vector.extract_strided_slice %14 {offsets = [0, 0], sizes = [1, 32], strides = [1, 1]} : vector<2x32xf32> to vector<1x32xf32>
    %315 = vector.extract_strided_slice %14 {offsets = [1, 0], sizes = [1, 32], strides = [1, 1]} : vector<2x32xf32> to vector<1x32xf32>
    %cst_105 = arith.constant dense<0.000000e+00> : vector<64xf32>
    %316 = vector.multi_reduction <add>, %313, %cst_105 [1] : vector<64x32xf32> to vector<64xf32>
    %317 = vector.shape_cast %316 : vector<64xf32> to vector<64x1xf32>
    %cst_106 = arith.constant 3.200000e+01 : f32
    %318 = vector.broadcast %cst_106 : f32 to vector<64x1xf32>
    %319 = arith.divf %317, %318 : vector<64x1xf32>
    %320 = vector.broadcast %319 : vector<64x1xf32> to vector<64x32xf32>
    %321 = arith.subf %313, %320 : vector<64x32xf32>
    %322 = arith.mulf %321, %321 : vector<64x32xf32>
    %cst_107 = arith.constant dense<0.000000e+00> : vector<64xf32>
    %323 = vector.multi_reduction <add>, %322, %cst_107 [1] : vector<64x32xf32> to vector<64xf32>
    %324 = vector.shape_cast %323 : vector<64xf32> to vector<64x1xf32>
    %cst_108 = arith.constant 3.200000e+01 : f32
    %325 = vector.broadcast %cst_108 : f32 to vector<64x1xf32>
    %326 = arith.divf %324, %325 : vector<64x1xf32>
    %cst_109 = arith.constant 9.99999974E-6 : f32
    %327 = vector.broadcast %cst_109 : f32 to vector<64x1xf32>
    %328 = arith.addf %326, %327 : vector<64x1xf32>
    %329 = math.rsqrt %328 : vector<64x1xf32>
    %330 = vector.broadcast %329 : vector<64x1xf32> to vector<64x32xf32>
    %331 = arith.mulf %321, %330 : vector<64x32xf32>
    %332 = vector.broadcast %314 : vector<1x32xf32> to vector<64x32xf32>
    %333 = arith.mulf %331, %332 : vector<64x32xf32>
    %334 = vector.broadcast %315 : vector<1x32xf32> to vector<64x32xf32>
    %335 = arith.addf %333, %334 : vector<64x32xf32>
    %cst_110 = arith.constant dense<0.000000e+00> : vector<64x64xf32>
    %336 = tpu.matmul %335, %15, %cst_110 {dimension_numbers = #tpu.dot_dimension_numbers<[1], [0], [0], [1], [0, 0, 1, 1], [], []>} : vector<64x32xf32>, vector<32x64xf32>, vector<64x64xf32> -> vector<64x64xf32>
    %337 = vector.broadcast %16 : vector<1x64xf32> to vector<64x64xf32>
    %338 = arith.addf %336, %337 : vector<64x64xf32>
    %cst_111 = arith.constant 5.000000e-01 : f32
    %339 = vector.broadcast %cst_111 : f32 to vector<64x64xf32>
    %340 = arith.mulf %339, %338 : vector<64x64xf32>
    %cst_112 = arith.constant 0.707106769 : f32
    %341 = vector.broadcast %cst_112 : f32 to vector<64x64xf32>
    %342 = arith.mulf %338, %341 : vector<64x64xf32>
    %cst_113 = arith.constant 0.000000e+00 : f32
    %343 = vector.broadcast %cst_113 : f32 to vector<64x64xf32>
    %344 = arith.cmpf oge, %342, %343 : vector<64x64xf32>
    %cst_114 = arith.constant 1.000000e+00 : f32
    %cst_115 = arith.constant -1.000000e+00 : f32
    %345 = vector.broadcast %cst_114 : f32 to vector<64x64xf32>
    %346 = vector.broadcast %cst_115 : f32 to vector<64x64xf32>
    %347 = arith.select %344, %345, %346 : vector<64x64xi1>, vector<64x64xf32>
    %348 = math.absf %342 : vector<64x64xf32>
    %cst_116 = arith.constant 0.327591091 : f32
    %349 = vector.broadcast %cst_116 : f32 to vector<64x64xf32>
    %350 = arith.mulf %349, %348 : vector<64x64xf32>
    %cst_117 = arith.constant 1.000000e+00 : f32
    %351 = vector.broadcast %cst_117 : f32 to vector<64x64xf32>
    %352 = arith.addf %351, %350 : vector<64x64xf32>
    %cst_118 = arith.constant 1.000000e+00 : f32
    %353 = vector.broadcast %cst_118 : f32 to vector<64x64xf32>
    %354 = arith.divf %353, %352 : vector<64x64xf32>
    %cst_119 = arith.constant 1.06140542 : f32
    %355 = vector.broadcast %cst_119 : f32 to vector<64x64xf32>
    %356 = arith.mulf %355, %354 : vector<64x64xf32>
    %cst_120 = arith.constant -1.45315206 : f32
    %357 = vector.broadcast %cst_120 : f32 to vector<64x64xf32>
    %358 = arith.addf %356, %357 : vector<64x64xf32>
    %359 = arith.mulf %358, %354 : vector<64x64xf32>
    %cst_121 = arith.constant 1.42141378 : f32
    %360 = vector.broadcast %cst_121 : f32 to vector<64x64xf32>
    %361 = arith.addf %359, %360 : vector<64x64xf32>
    %362 = arith.mulf %361, %354 : vector<64x64xf32>
    %cst_122 = arith.constant -0.284496725 : f32
    %363 = vector.broadcast %cst_122 : f32 to vector<64x64xf32>
    %364 = arith.addf %362, %363 : vector<64x64xf32>
    %365 = arith.mulf %364, %354 : vector<64x64xf32>
    %cst_123 = arith.constant 0.254829586 : f32
    %366 = vector.broadcast %cst_123 : f32 to vector<64x64xf32>
    %367 = arith.addf %365, %366 : vector<64x64xf32>
    %368 = arith.mulf %367, %354 : vector<64x64xf32>
    %cst_124 = arith.constant 0.000000e+00 : f32
    %369 = vector.broadcast %cst_124 : f32 to vector<64x64xf32>
    %370 = arith.subf %369, %348 : vector<64x64xf32>
    %371 = arith.mulf %370, %348 : vector<64x64xf32>
    %372 = math.exp %371 : vector<64x64xf32>
    %373 = arith.mulf %368, %372 : vector<64x64xf32>
    %cst_125 = arith.constant 1.000000e+00 : f32
    %374 = vector.broadcast %cst_125 : f32 to vector<64x64xf32>
    %375 = arith.subf %374, %373 : vector<64x64xf32>
    %376 = arith.mulf %347, %375 : vector<64x64xf32>
    %cst_126 = arith.constant 1.000000e+00 : f32
    %377 = vector.broadcast %cst_126 : f32 to vector<64x64xf32>
    %378 = arith.addf %377, %376 : vector<64x64xf32>
    %379 = arith.mulf %340, %378 : vector<64x64xf32>
    %cst_127 = arith.constant dense<0.000000e+00> : vector<64x32xf32>
    %380 = tpu.matmul %379, %17, %cst_127 {dimension_numbers = #tpu.dot_dimension_numbers<[1], [0], [0], [1], [0, 0, 1, 1], [], []>} : vector<64x64xf32>, vector<64x32xf32>, vector<64x32xf32> -> vector<64x32xf32>
    %381 = vector.broadcast %18 : vector<1x32xf32> to vector<64x32xf32>
    %382 = arith.addf %380, %381 : vector<64x32xf32>
    %383 = arith.addf %313, %382 : vector<64x32xf32>
    %c1_128 = arith.constant 1 : index
    %c0_129 = arith.constant 0 : index
    %c0_130 = arith.constant 0 : index
    %384 = vector.load %arg21[%c1_128, %c0_129, %c0_130] : memref<2x64x32xf32, #tpu.memory_space<vmem>>, vector<1x64x32xf32>
    %385 = vector.shape_cast %384 : vector<1x64x32xf32> to vector<64x32xf32>
    %386 = vector.shape_cast %383 : vector<64x32xf32> to vector<1x64x32xf32>
    tpu.vector_store %arg21[%c1_128, %c0_129, %c0_130], %386 {strides = array<i32>} : memref<2x64x32xf32, #tpu.memory_space<vmem>>, vector<1x64x32xf32>,
    return
  }
  func.func @transform_0(%arg0: i32) -> (i32, i32, i32) {
    %c0_i32 = arith.constant 0 : i32
    %c0_i32_0 = arith.constant 0 : i32
    %c0_i32_1 = arith.constant 0 : i32
    return %arg0, %c0_i32, %c0_i32_0 : i32, i32, i32
  }
  func.func @transform_1(%arg0: i32) -> (i32, i32) {
    %c0_i32 = arith.constant 0 : i32
    %c0_i32_0 = arith.constant 0 : i32
    %c0_i32_1 = arith.constant 0 : i32
    return %c0_i32, %c0_i32_0 : i32, i32
  }
  func.func @transform_2(%arg0: i32) -> (i32, i32) {
    %c0_i32 = arith.constant 0 : i32
    %c0_i32_0 = arith.constant 0 : i32
    %c0_i32_1 = arith.constant 0 : i32
    return %c0_i32, %c0_i32_0 : i32, i32
  }
  func.func @transform_3(%arg0: i32) -> (i32, i32) {
    %c0_i32 = arith.constant 0 : i32
    %c0_i32_0 = arith.constant 0 : i32
    %c0_i32_1 = arith.constant 0 : i32
    return %c0_i32, %c0_i32_0 : i32, i32
  }
  func.func @transform_4(%arg0: i32) -> (i32, i32) {
    %c0_i32 = arith.constant 0 : i32
    %c0_i32_0 = arith.constant 0 : i32
    %c0_i32_1 = arith.constant 0 : i32
    return %c0_i32, %c0_i32_0 : i32, i32
  }
  func.func @transform_5(%arg0: i32) -> (i32, i32) {
    %c0_i32 = arith.constant 0 : i32
    %c0_i32_0 = arith.constant 0 : i32
    %c0_i32_1 = arith.constant 0 : i32
    return %c0_i32, %c0_i32_0 : i32, i32
  }
  func.func @transform_6(%arg0: i32) -> (i32, i32) {
    %c0_i32 = arith.constant 0 : i32
    %c0_i32_0 = arith.constant 0 : i32
    %c0_i32_1 = arith.constant 0 : i32
    return %c0_i32, %c0_i32_0 : i32, i32
  }
  func.func @transform_7(%arg0: i32) -> (i32, i32) {
    %c0_i32 = arith.constant 0 : i32
    %c0_i32_0 = arith.constant 0 : i32
    %c0_i32_1 = arith.constant 0 : i32
    return %c0_i32, %c0_i32_0 : i32, i32
  }
  func.func @transform_8(%arg0: i32) -> (i32, i32) {
    %c0_i32 = arith.constant 0 : i32
    %c0_i32_0 = arith.constant 0 : i32
    %c0_i32_1 = arith.constant 0 : i32
    return %c0_i32, %c0_i32_0 : i32, i32
  }
  func.func @transform_9(%arg0: i32) -> (i32, i32) {
    %c0_i32 = arith.constant 0 : i32
    %c0_i32_0 = arith.constant 0 : i32
    %c0_i32_1 = arith.constant 0 : i32
    return %c0_i32, %c0_i32_0 : i32, i32
  }
  func.func @transform_10(%arg0: i32) -> (i32, i32) {
    %c0_i32 = arith.constant 0 : i32
    %c0_i32_0 = arith.constant 0 : i32
    %c0_i32_1 = arith.constant 0 : i32
    return %c0_i32, %c0_i32_0 : i32, i32
  }
  func.func @transform_11(%arg0: i32) -> (i32, i32) {
    %c0_i32 = arith.constant 0 : i32
    %c0_i32_0 = arith.constant 0 : i32
    %c0_i32_1 = arith.constant 0 : i32
    return %c0_i32, %c0_i32_0 : i32, i32
  }
  func.func @transform_12(%arg0: i32) -> (i32, i32) {
    %c0_i32 = arith.constant 0 : i32
    %c0_i32_0 = arith.constant 0 : i32
    %c0_i32_1 = arith.constant 0 : i32
    return %c0_i32, %c0_i32_0 : i32, i32
  }
  func.func @transform_13(%arg0: i32) -> (i32, i32) {
    %c0_i32 = arith.constant 0 : i32
    %c0_i32_0 = arith.constant 0 : i32
    %c0_i32_1 = arith.constant 0 : i32
    return %c0_i32, %c0_i32_0 : i32, i32
  }
  func.func @transform_14(%arg0: i32) -> (i32, i32) {
    %c0_i32 = arith.constant 0 : i32
    %c0_i32_0 = arith.constant 0 : i32
    %c0_i32_1 = arith.constant 0 : i32
    return %c0_i32, %c0_i32_0 : i32, i32
  }
  func.func @transform_15(%arg0: i32) -> (i32, i32) {
    %c0_i32 = arith.constant 0 : i32
    %c0_i32_0 = arith.constant 0 : i32
    %c0_i32_1 = arith.constant 0 : i32
    return %c0_i32, %c0_i32_0 : i32, i32
  }
  func.func @transform_16(%arg0: i32) -> (i32, i32) {
    %c0_i32 = arith.constant 0 : i32
    %c0_i32_0 = arith.constant 0 : i32
    %c0_i32_1 = arith.constant 0 : i32
    return %c0_i32, %c0_i32_0 : i32, i32
  }
  func.func @transform_17(%arg0: i32) -> (i32, i32) {
    %c0_i32 = arith.constant 0 : i32
    %c0_i32_0 = arith.constant 0 : i32
    %c0_i32_1 = arith.constant 0 : i32
    return %c0_i32, %c0_i32_0 : i32, i32
  }
  func.func @transform_18(%arg0: i32) -> (i32, i32) {
    %c0_i32 = arith.constant 0 : i32
    %c0_i32_0 = arith.constant 0 : i32
    %c0_i32_1 = arith.constant 0 : i32
    return %c0_i32, %c0_i32_0 : i32, i32
  }
  func.func @transform_19(%arg0: i32) -> (i32, i32) {
    %c0_i32 = arith.constant 0 : i32
    %c0_i32_0 = arith.constant 0 : i32
    %c0_i32_1 = arith.constant 0 : i32
    return %c0_i32, %c0_i32_0 : i32, i32
  }
  func.func @transform_20(%arg0: i32) -> (i32, i32, i32) {
    %c0_i32 = arith.constant 0 : i32
    %c0_i32_0 = arith.constant 0 : i32
    %c0_i32_1 = arith.constant 0 : i32
    return %arg0, %c0_i32, %c0_i32_0 : i32, i32, i32
  }
}

</mosaic_0001>

<llo_original>
// kernel: mixed_attention_forward.1
$region0: #{mixed_attention_forward.1}
  #allocation0 [shape = 'u32[]', space=smem, size = 0x4, offset = 0x4, fixed_abs, tag = 'smem constant byte address 0x4 - core index']
  #allocation1 [shape = 'u32[72,128]{1,0:T(1,128)}', space=vmem, size = 0x9000, scoped, tag = 'internal scratch']
  %s0 = inlined_call_operand.vmem [shape: f32[2,64,32], index: 0, kind: input, shape index: {}]
  %s1 = inlined_call_operand.hbm [shape: f32[576,64], index: 1, kind: input, shape index: {}]
  %s2 = inlined_call_operand.hbm [shape: f32[32,96], index: 2, kind: input, shape index: {}]
  %s3 = inlined_call_operand.hbm [shape: f32[16,64], index: 3, kind: input, shape index: {}]
  %s4 = inlined_call_operand.vmem [shape: f32[64,64], index: 4, kind: input, shape index: {}]
  %s5 = inlined_call_operand.vmem [shape: f32[64,64], index: 5, kind: input, shape index: {}]
  %s6 = inlined_call_operand.vmem [shape: f32[2,32], index: 6, kind: input, shape index: {}]
  %s7 = inlined_call_operand.hbm [shape: f32[9,96], index: 7, kind: input, shape index: {}]
  %s8 = inlined_call_operand.hbm [shape: f32[1,96], index: 8, kind: input, shape index: {}]
  %s9 = inlined_call_operand.hbm [shape: f32[1,96], index: 9, kind: input, shape index: {}]
  %s10 = inlined_call_operand.hbm [shape: f32[1,96], index: 10, kind: input, shape index: {}]
  %s11 = inlined_call_operand.vmem [shape: f32[32,32], index: 11, kind: input, shape index: {}]
  %s12 = inlined_call_operand.vmem [shape: f32[1,32], index: 12, kind: input, shape index: {}]
  %s13 = inlined_call_operand.vmem [shape: f32[64,64], index: 13, kind: input, shape index: {}]
  %s14 = inlined_call_operand.vmem [shape: f32[1,64], index: 14, kind: input, shape index: {}]
  %s15 = inlined_call_operand.vmem [shape: f32[2,32], index: 15, kind: input, shape index: {}]
  %s16 = inlined_call_operand.hbm [shape: f32[32,64], index: 16, kind: input, shape index: {}]
  %s17 = inlined_call_operand.hbm [shape: f32[1,64], index: 17, kind: input, shape index: {}]
  %s18 = inlined_call_operand.vmem [shape: f32[64,32], index: 18, kind: input, shape index: {}]
  %s19 = inlined_call_operand.hbm [shape: f32[1,32], index: 19, kind: input, shape index: {}]
  %s20 = inlined_call_operand.vmem [shape: f32[2,64,32], index: 20, kind: output, shape index: {}]
  %s21 = sld [smem:[#allocation0]]
  $region130: #{mixed_attention_forward.1} parent=0
    _
  %s23 = ssub.s32 1, %s21
  %s24 = scalar_select 0, %s23, %s21
  $region1: #{mixed_attention_forward.1} parent=0
    #allocation2 [shape = 'u8[294912]{0}', space=vmem, size = 0x48000, scoped, tag = 'input window, operand 1, single buffered']
    #allocation3 [shape = 's32[1]{0}', space=sflag, size = 0x4, scoped, tag = 'scoped memory for mixed_attention_forward.1']
    #allocation4 [shape = 'u8[16384]{0}', space=vmem, size = 0x4000, scoped, tag = 'input window, operand 2, single buffered']
    #allocation5 [shape = 's32[1]{0}', space=sflag, size = 0x4, scoped, tag = 'scoped memory for mixed_attention_forward.1']
    #allocation6 [shape = 'u8[8192]{0}', space=vmem, size = 0x2000, scoped, tag = 'input window, operand 3, single buffered']
    #allocation7 [shape = 'u8[8192]{0}', space=vmem, size = 0x2000, scoped, tag = 'input window, operand 7, single buffered']
    #allocation8 [shape = 's32[1]{0}', space=sflag, size = 0x4, scoped, tag = 'scoped memory for mixed_attention_forward.1']
    #allocation9 [shape = 'u8[512]{0}', space=vmem, size = 0x400, scoped, tag = 'input window, operand 8, single buffered']
    #allocation10 [shape = 'u8[512]{0}', space=vmem, size = 0x400, scoped, tag = 'input window, operand 9, single buffered']
    #allocation11 [shape = 's32[1]{0}', space=sflag, size = 0x4, scoped, tag = 'scoped memory for mixed_attention_forward.1']
    #allocation12 [shape = 'u8[512]{0}', space=vmem, size = 0x400, scoped, tag = 'input window, operand 10, single buffered']
    #allocation13 [shape = 'u8[16384]{0}', space=vmem, size = 0x4000, scoped, tag = 'input window, operand 16, single buffered']
    #allocation14 [shape = 's32[1]{0}', space=sflag, size = 0x4, scoped, tag = 'scoped memory for mixed_attention_forward.1']
    #allocation15 [shape = 'u8[512]{0}', space=vmem, size = 0x400, scoped, tag = 'input window, operand 17, single buffered']
    #allocation16 [shape = 'u8[512]{0}', space=vmem, size = 0x400, scoped, tag = 'input window, operand 19, single buffered']
    #allocation17 [shape = 's32[1]{0}', space=sflag, size = 0x4, scoped, tag = 'scoped memory for mixed_attention_forward.1']
    %25 = vsyncpa [#allocation3], 0
    %26 = vsyncpa [#allocation5], 0
    %27 = vsyncpa [#allocation8], 0
    %28 = vsyncpa [#allocation11], 0
    %29 = vsyncpa [#allocation14], 0
    %30 = vsyncpa [#allocation17], 0
    // Predicated region
    $region2: #{mixed_attention_forward.1} parent=1 // pred_check
      _
    $region3: #{mixed_attention_forward.1} parent=1 // pred_check_branch
      %32 = sbr.rel (0) target = $region5
    $region4: #{mixed_attention_forward.1} parent=1 // pred_region
      _
    $region5: #{mixed_attention_forward.1} parent=1 // pred_fallthru
      _
    // Predicated region
    $region6: #{mixed_attention_forward.1} parent=1 // pred_check
      _
    $region7: #{mixed_attention_forward.1} parent=1 // pred_check_branch
      %34 = sbr.rel (0) target = $region9
    $region8: #{mixed_attention_forward.1} parent=1 // pred_region
      %36 = vsyncadd [#allocation3], 0
      %s37 = sshll.u32 %s1, 4
      %s38 = int_to_ptr.hbm [resolvable:$true] %s37
      %s39 = sshll.u32 [#allocation2], 4
      %s40 = int_to_ptr.vmem [resolvable:$true] %s39
      %45 = dma.hbm_to_vmem [thread:$0]  %s38, 9216, %s40, [#allocation3], 128, 128, 8
    $region9: #{mixed_attention_forward.1} parent=1 // pred_fallthru
      _
    // Predicated region
    $region10: #{mixed_attention_forward.1} parent=1 // pred_check
      _
    $region11: #{mixed_attention_forward.1} parent=1 // pred_check_branch
      %47 = sbr.rel (0) target = $region13
    $region12: #{mixed_attention_forward.1} parent=1 // pred_region
      %49 = vsyncadd [#allocation5], 0
      %s50 = sshll.u32 %s2, 4
      %s51 = int_to_ptr.hbm [resolvable:$true] %s50
      %s52 = sshll.u32 [#allocation4], 4
      %s53 = int_to_ptr.vmem [resolvable:$true] %s52
      %58 = dma.hbm_to_vmem [thread:$0]  %s51, 512, %s53, [#allocation5], 128, 128, 8
    $region13: #{mixed_attention_forward.1} parent=1 // pred_fallthru
      _
    // Predicated region
    $region14: #{mixed_attention_forward.1} parent=1 // pred_check
      _
    $region15: #{mixed_attention_forward.1} parent=1 // pred_check_branch
      %60 = sbr.rel (0) target = $region17
    $region16: #{mixed_attention_forward.1} parent=1 // pred_region
      %62 = vsyncadd [#allocation5], 0
      %s63 = sshll.u32 %s3, 4
      %s64 = int_to_ptr.hbm [resolvable:$true] %s63
      %s65 = sshll.u32 [#allocation6], 4
      %s66 = int_to_ptr.vmem [resolvable:$true] %s65
      %71 = dma.hbm_to_vmem [thread:$0]  %s64, 256, %s66, [#allocation5], 128, 128, 8
    $region17: #{mixed_attention_forward.1} parent=1 // pred_fallthru
      _
    // Predicated region
    $region18: #{mixed_attention_forward.1} parent=1 // pred_check
      _
    $region19: #{mixed_attention_forward.1} parent=1 // pred_check_branch
      %73 = sbr.rel (0) target = $region21
    $region20: #{mixed_attention_forward.1} parent=1 // pred_region
      _
    $region21: #{mixed_attention_forward.1} parent=1 // pred_fallthru
      _
    // Predicated region
    $region22: #{mixed_attention_forward.1} parent=1 // pred_check
      _
    $region23: #{mixed_attention_forward.1} parent=1 // pred_check_branch
      %75 = sbr.rel (0) target = $region25
    $region24: #{mixed_attention_forward.1} parent=1 // pred_region
      _
    $region25: #{mixed_attention_forward.1} parent=1 // pred_fallthru
      _
    // Predicated region
    $region26: #{mixed_attention_forward.1} parent=1 // pred_check
      _
    $region27: #{mixed_attention_forward.1} parent=1 // pred_check_branch
      %77 = sbr.rel (0) target = $region29
    $region28: #{mixed_attention_forward.1} parent=1 // pred_region
      _
    $region29: #{mixed_attention_forward.1} parent=1 // pred_fallthru
      _
    // Predicated region
    $region30: #{mixed_attention_forward.1} parent=1 // pred_check
      _
    $region31: #{mixed_attention_forward.1} parent=1 // pred_check_branch
      %79 = sbr.rel (0) target = $region33
    $region32: #{mixed_attention_forward.1} parent=1 // pred_region
      %81 = vsyncadd [#allocation8], 0
      %s82 = sshll.u32 %s7, 4
      %s83 = int_to_ptr.hbm [resolvable:$true] %s82
      %s84 = sshll.u32 [#allocation7], 4
      %s85 = int_to_ptr.vmem [resolvable:$true] %s84
      %90 = dma.hbm_to_vmem [thread:$0]  %s83, 256, %s85, [#allocation8], 128, 128, 8
    $region33: #{mixed_attention_forward.1} parent=1 // pred_fallthru
      _
    // Predicated region
    $region34: #{mixed_attention_forward.1} parent=1 // pred_check
      _
    $region35: #{mixed_attention_forward.1} parent=1 // pred_check_branch
      %92 = sbr.rel (0) target = $region37
    $region36: #{mixed_attention_forward.1} parent=1 // pred_region
      %94 = vsyncadd [#allocation8], 0
      %s96 = sshll.u32 %s8, 4
      %s97 = int_to_ptr.hbm [resolvable:$true] %s96
      %s98 = sshll.u32 [#allocation9], 4
      %s99 = int_to_ptr.vmem [resolvable:$true] %s98
      %101 = dma.hbm_to_vmem [thread:$0]  %s97, 16, %s99, [#allocation8]
    $region37: #{mixed_attention_forward.1} parent=1 // pred_fallthru
      _
    // Predicated region
    $region38: #{mixed_attention_forward.1} parent=1 // pred_check
      _
    $region39: #{mixed_attention_forward.1} parent=1 // pred_check_branch
      %103 = sbr.rel (0) target = $region41
    $region40: #{mixed_attention_forward.1} parent=1 // pred_region
      %105 = vsyncadd [#allocation11], 0
      %s107 = sshll.u32 %s9, 4
      %s108 = int_to_ptr.hbm [resolvable:$true] %s107
      %s109 = sshll.u32 [#allocation10], 4
      %s110 = int_to_ptr.vmem [resolvable:$true] %s109
      %112 = dma.hbm_to_vmem [thread:$0]  %s108, 16, %s110, [#allocation11]
    $region41: #{mixed_attention_forward.1} parent=1 // pred_fallthru
      _
    // Predicated region
    $region42: #{mixed_attention_forward.1} parent=1 // pred_check
      _
    $region43: #{mixed_attention_forward.1} parent=1 // pred_check_branch
      %114 = sbr.rel (0) target = $region45
    $region44: #{mixed_attention_forward.1} parent=1 // pred_region
      %116 = vsyncadd [#allocation11], 0
      %s118 = sshll.u32 %s10, 4
      %s119 = int_to_ptr.hbm [resolvable:$true] %s118
      %s120 = sshll.u32 [#allocation12], 4
      %s121 = int_to_ptr.vmem [resolvable:$true] %s120
      %123 = dma.hbm_to_vmem [thread:$0]  %s119, 16, %s121, [#allocation11]
    $region45: #{mixed_attention_forward.1} parent=1 // pred_fallthru
      _
    // Predicated region
    $region46: #{mixed_attention_forward.1} parent=1 // pred_check
      _
    $region47: #{mixed_attention_forward.1} parent=1 // pred_check_branch
      %125 = sbr.rel (0) target = $region49
    $region48: #{mixed_attention_forward.1} parent=1 // pred_region
      _
    $region49: #{mixed_attention_forward.1} parent=1 // pred_fallthru
      _
    // Predicated region
    $region50: #{mixed_attention_forward.1} parent=1 // pred_check
      _
    $region51: #{mixed_attention_forward.1} parent=1 // pred_check_branch
      %127 = sbr.rel (0) target = $region53
    $region52: #{mixed_attention_forward.1} parent=1 // pred_region
      _
    $region53: #{mixed_attention_forward.1} parent=1 // pred_fallthru
      _
    // Predicated region
    $region54: #{mixed_attention_forward.1} parent=1 // pred_check
      _
    $region55: #{mixed_attention_forward.1} parent=1 // pred_check_branch
      %129 = sbr.rel (0) target = $region57
    $region56: #{mixed_attention_forward.1} parent=1 // pred_region
      _
    $region57: #{mixed_attention_forward.1} parent=1 // pred_fallthru
      _
    // Predicated region
    $region58: #{mixed_attention_forward.1} parent=1 // pred_check
      _
    $region59: #{mixed_attention_forward.1} parent=1 // pred_check_branch
      %131 = sbr.rel (0) target = $region61
    $region60: #{mixed_attention_forward.1} parent=1 // pred_region
      _
    $region61: #{mixed_attention_forward.1} parent=1 // pred_fallthru
      _
    // Predicated region
    $region62: #{mixed_attention_forward.1} parent=1 // pred_check
      _
    $region63: #{mixed_attention_forward.1} parent=1 // pred_check_branch
      %133 = sbr.rel (0) target = $region65
    $region64: #{mixed_attention_forward.1} parent=1 // pred_region
      _
    $region65: #{mixed_attention_forward.1} parent=1 // pred_fallthru
      _
    // Predicated region
    $region66: #{mixed_attention_forward.1} parent=1 // pred_check
      _
    $region67: #{mixed_attention_forward.1} parent=1 // pred_check_branch
      %135 = sbr.rel (0) target = $region69
    $region68: #{mixed_attention_forward.1} parent=1 // pred_region
      %137 = vsyncadd [#allocation14], 0
      %s138 = sshll.u32 %s16, 4
      %s139 = int_to_ptr.hbm [resolvable:$true] %s138
      %s140 = sshll.u32 [#allocation13], 4
      %s141 = int_to_ptr.vmem [resolvable:$true] %s140
      %146 = dma.hbm_to_vmem [thread:$0]  %s139, 512, %s141, [#allocation14], 128, 128, 8
    $region69: #{mixed_attention_forward.1} parent=1 // pred_fallthru
      _
    // Predicated region
    $region70: #{mixed_attention_forward.1} parent=1 // pred_check
      _
    $region71: #{mixed_attention_forward.1} parent=1 // pred_check_branch
      %148 = sbr.rel (0) target = $region73
    $region72: #{mixed_attention_forward.1} parent=1 // pred_region
      %150 = vsyncadd [#allocation14], 0
      %s152 = sshll.u32 %s17, 4
      %s153 = int_to_ptr.hbm [resolvable:$true] %s152
      %s154 = sshll.u32 [#allocation15], 4
      %s155 = int_to_ptr.vmem [resolvable:$true] %s154
      %157 = dma.hbm_to_vmem [thread:$0]  %s153, 16, %s155, [#allocation14]
    $region73: #{mixed_attention_forward.1} parent=1 // pred_fallthru
      _
    // Predicated region
    $region74: #{mixed_attention_forward.1} parent=1 // pred_check
      _
    $region75: #{mixed_attention_forward.1} parent=1 // pred_check_branch
      %159 = sbr.rel (0) target = $region77
    $region76: #{mixed_attention_forward.1} parent=1 // pred_region
      _
    $region77: #{mixed_attention_forward.1} parent=1 // pred_fallthru
      _
    // Predicated region
    $region78: #{mixed_attention_forward.1} parent=1 // pred_check
      _
    $region79: #{mixed_attention_forward.1} parent=1 // pred_check_branch
      %161 = sbr.rel (0) target = $region81
    $region80: #{mixed_attention_forward.1} parent=1 // pred_region
      %163 = vsyncadd [#allocation17], 0
      %s165 = sshll.u32 %s19, 4
      %s166 = int_to_ptr.hbm [resolvable:$true] %s165
      %s167 = sshll.u32 [#allocation16], 4
      %s168 = int_to_ptr.vmem [resolvable:$true] %s167
      %170 = dma.hbm_to_vmem [thread:$0]  %s166, 16, %s168, [#allocation17]
    $region81: #{mixed_attention_forward.1} parent=1 // pred_fallthru
      _
    // Predicated region
    $region82: #{mixed_attention_forward.1} parent=1 // pred_check
      _
    $region83: #{mixed_attention_forward.1} parent=1 // pred_check_branch
      %172 = sbr.rel (0) target = $region85
    $region84: #{mixed_attention_forward.1} parent=1 // pred_region
      %174 = dma.done [#allocation3], 9216
    $region85: #{mixed_attention_forward.1} parent=1 // pred_fallthru
      _
    // Predicated region
    $region86: #{mixed_attention_forward.1} parent=1 // pred_check
      _
    $region87: #{mixed_attention_forward.1} parent=1 // pred_check_branch
      %176 = sbr.rel (0) target = $region89
    $region88: #{mixed_attention_forward.1} parent=1 // pred_region
      %178 = dma.done [#allocation5], 512
    $region89: #{mixed_attention_forward.1} parent=1 // pred_fallthru
      _
    // Predicated region
    $region90: #{mixed_attention_forward.1} parent=1 // pred_check
      _
    $region91: #{mixed_attention_forward.1} parent=1 // pred_check_branch
      %180 = sbr.rel (0) target = $region93
    $region92: #{mixed_attention_forward.1} parent=1 // pred_region
      %182 = dma.done [#allocation5], 256
    $region93: #{mixed_attention_forward.1} parent=1 // pred_fallthru
      _
    // Predicated region
    $region94: #{mixed_attention_forward.1} parent=1 // pred_check
      _
    $region95: #{mixed_attention_forward.1} parent=1 // pred_check_branch
      %184 = sbr.rel (0) target = $region97
    $region96: #{mixed_attention_forward.1} parent=1 // pred_region
      %186 = dma.done [#allocation8], 256
    $region97: #{mixed_attention_forward.1} parent=1 // pred_fallthru
      _
    // Predicated region
    $region98: #{mixed_attention_forward.1} parent=1 // pred_check
      _
    $region99: #{mixed_attention_forward.1} parent=1 // pred_check_branch
      %188 = sbr.rel (0) target = $region101
    $region100: #{mixed_attention_forward.1} parent=1 // pred_region
      %190 = dma.done [#allocation8], 16
    $region101: #{mixed_attention_forward.1} parent=1 // pred_fallthru
      _
    // Predicated region
    $region102: #{mixed_attention_forward.1} parent=1 // pred_check
      _
    $region103: #{mixed_attention_forward.1} parent=1 // pred_check_branch
      %192 = sbr.rel (0) target = $region105
    $region104: #{mixed_attention_forward.1} parent=1 // pred_region
      %194 = dma.done [#allocation11], 16
    $region105: #{mixed_attention_forward.1} parent=1 // pred_fallthru
      _
    // Predicated region
    $region106: #{mixed_attention_forward.1} parent=1 // pred_check
      _
    $region107: #{mixed_attention_forward.1} parent=1 // pred_check_branch
      %196 = sbr.rel (0) target = $region109
    $region108: #{mixed_attention_forward.1} parent=1 // pred_region
      %198 = dma.done [#allocation11], 16
    $region109: #{mixed_attention_forward.1} parent=1 // pred_fallthru
      _
    // Predicated region
    $region110: #{mixed_attention_forward.1} parent=1 // pred_check
      _
    $region111: #{mixed_attention_forward.1} parent=1 // pred_check_branch
      %200 = sbr.rel (0) target = $region113
    $region112: #{mixed_attention_forward.1} parent=1 // pred_region
      %202 = dma.done [#allocation14], 512
    $region113: #{mixed_attention_forward.1} parent=1 // pred_fallthru
      _
    // Predicated region
    $region114: #{mixed_attention_forward.1} parent=1 // pred_check
      _
    $region115: #{mixed_attention_forward.1} parent=1 // pred_check_branch
      %204 = sbr.rel (0) target = $region117
    $region116: #{mixed_attention_forward.1} parent=1 // pred_region
      %206 = dma.done [#allocation14], 16
    $region117: #{mixed_attention_forward.1} parent=1 // pred_fallthru
      _
    // Predicated region
    $region118: #{mixed_attention_forward.1} parent=1 // pred_check
      _
    $region119: #{mixed_attention_forward.1} parent=1 // pred_check_branch
      %208 = sbr.rel (0) target = $region121
    $region120: #{mixed_attention_forward.1} parent=1 // pred_region
      %210 = dma.done [#allocation17], 16
    $region121: #{mixed_attention_forward.1} parent=1 // pred_fallthru
      _
    %v211 = vld [vmem:[#allocation2] sm:$0xff]
    %v212 = vld [vmem:[#allocation2 + $0x8] sm:$0xff]
    %v213 = vld [vmem:[#allocation2 + $0x10] sm:$0xff]
    %v214 = vld [vmem:[#allocation2 + $0x18] sm:$0xff]
    %v215 = vld [vmem:[#allocation2 + $0x20] sm:$0xff]
    %v216 = vld [vmem:[#allocation2 + $0x28] sm:$0xff]
    %v217 = vld [vmem:[#allocation2 + $0x30] sm:$0xff]
    %v218 = vld [vmem:[#allocation2 + $0x38] sm:$0xff]
    %v219 = vld [vmem:[#allocation2 + $0x40] sm:$0xff]
    %v220 = vld [vmem:[#allocation2 + $0x48] sm:$0xff]
    %v221 = vld [vmem:[#allocation2 + $0x50] sm:$0xff]
    %v222 = vld [vmem:[#allocation2 + $0x58] sm:$0xff]
    %v223 = vld [vmem:[#allocation2 + $0x60] sm:$0xff]
    %v224 = vld [vmem:[#allocation2 + $0x68] sm:$0xff]
    %v225 = vld [vmem:[#allocation2 + $0x70] sm:$0xff]
    %v226 = vld [vmem:[#allocation2 + $0x78] sm:$0xff]
    %v227 = vld [vmem:[#allocation2 + $0x80] sm:$0xff]
    %v228 = vld [vmem:[#allocation2 + $0x88] sm:$0xff]
    %v229 = vld [vmem:[#allocation2 + $0x90] sm:$0xff]
    %v230 = vld [vmem:[#allocation2 + $0x98] sm:$0xff]
    %v231 = vld [vmem:[#allocation2 + $0xa0] sm:$0xff]
    %v232 = vld [vmem:[#allocation2 + $0xa8] sm:$0xff]
    %v233 = vld [vmem:[#allocation2 + $0xb0] sm:$0xff]
    %v234 = vld [vmem:[#allocation2 + $0xb8] sm:$0xff]
    %v235 = vld [vmem:[#allocation2 + $0xc0] sm:$0xff]
    %v236 = vld [vmem:[#allocation2 + $0xc8] sm:$0xff]
    %v237 = vld [vmem:[#allocation2 + $0xd0] sm:$0xff]
    %v238 = vld [vmem:[#allocation2 + $0xd8] sm:$0xff]
    %v239 = vld [vmem:[#allocation2 + $0xe0] sm:$0xff]
    %v240 = vld [vmem:[#allocation2 + $0xe8] sm:$0xff]
    %v241 = vld [vmem:[#allocation2 + $0xf0] sm:$0xff]
    %v242 = vld [vmem:[#allocation2 + $0xf8] sm:$0xff]
    %v243 = vld [vmem:[#allocation2 + $0x100] sm:$0xff]
    %v244 = vld [vmem:[#allocation2 + $0x108] sm:$0xff]
    %v245 = vld [vmem:[#allocation2 + $0x110] sm:$0xff]
    %v246 = vld [vmem:[#allocation2 + $0x118] sm:$0xff]
    %v247 = vld [vmem:[#allocation2 + $0x120] sm:$0xff]
    %v248 = vld [vmem:[#allocation2 + $0x128] sm:$0xff]
    %v249 = vld [vmem:[#allocation2 + $0x130] sm:$0xff]
    %v250 = vld [vmem:[#allocation2 + $0x138] sm:$0xff]
    %v251 = vld [vmem:[#allocation2 + $0x140] sm:$0xff]
    %v252 = vld [vmem:[#allocation2 + $0x148] sm:$0xff]
    %v253 = vld [vmem:[#allocation2 + $0x150] sm:$0xff]
    %v254 = vld [vmem:[#allocation2 + $0x158] sm:$0xff]
    %v255 = vld [vmem:[#allocation2 + $0x160] sm:$0xff]
    %v256 = vld [vmem:[#allocation2 + $0x168] sm:$0xff]
    %v257 = vld [vmem:[#allocation2 + $0x170] sm:$0xff]
    %v258 = vld [vmem:[#allocation2 + $0x178] sm:$0xff]
    %v259 = vld [vmem:[#allocation2 + $0x180] sm:$0xff]
    %v260 = vld [vmem:[#allocation2 + $0x188] sm:$0xff]
    %v261 = vld [vmem:[#allocation2 + $0x190] sm:$0xff]
    %v262 = vld [vmem:[#allocation2 + $0x198] sm:$0xff]
    %v263 = vld [vmem:[#allocation2 + $0x1a0] sm:$0xff]
    %v264 = vld [vmem:[#allocation2 + $0x1a8] sm:$0xff]
    %v265 = vld [vmem:[#allocation2 + $0x1b0] sm:$0xff]
    %v266 = vld [vmem:[#allocation2 + $0x1b8] sm:$0xff]
    %v267 = vld [vmem:[#allocation2 + $0x1c0] sm:$0xff]
    %v268 = vld [vmem:[#allocation2 + $0x1c8] sm:$0xff]
    %v269 = vld [vmem:[#allocation2 + $0x1d0] sm:$0xff]
    %v270 = vld [vmem:[#allocation2 + $0x1d8] sm:$0xff]
    %v271 = vld [vmem:[#allocation2 + $0x1e0] sm:$0xff]
    %v272 = vld [vmem:[#allocation2 + $0x1e8] sm:$0xff]
    %v273 = vld [vmem:[#allocation2 + $0x1f0] sm:$0xff]
    %v274 = vld [vmem:[#allocation2 + $0x1f8] sm:$0xff]
    %v275 = vld [vmem:[#allocation2 + $0x200] sm:$0xff]
    %v276 = vld [vmem:[#allocation2 + $0x208] sm:$0xff]
    %v277 = vld [vmem:[#allocation2 + $0x210] sm:$0xff]
    %v278 = vld [vmem:[#allocation2 + $0x218] sm:$0xff]
    %v279 = vld [vmem:[#allocation2 + $0x220] sm:$0xff]
    %v280 = vld [vmem:[#allocation2 + $0x228] sm:$0xff]
    %v281 = vld [vmem:[#allocation2 + $0x230] sm:$0xff]
    %v282 = vld [vmem:[#allocation2 + $0x238] sm:$0xff]
    %v283 = vld [vmem:[#allocation4] sm:$0xff]
    %v284 = vld [vmem:[#allocation4 + $0x8] sm:$0xff]
    %v285 = vld [vmem:[#allocation4 + $0x10] sm:$0xff]
    %v286 = vld [vmem:[#allocation4 + $0x18] sm:$0xff]
    %v287 = vld [vmem:[#allocation6] sm:$0xff]
    %v288 = vld [vmem:[#allocation6 + $0x8] sm:$0xff]
    %v289 = vld [vmem:[%s4] sm:$0xff]
    %v290 = vld [vmem:[%s4 + $0x8] sm:$0xff]
    %v291 = vld [vmem:[%s4 + $0x10] sm:$0xff]
    %v292 = vld [vmem:[%s4 + $0x18] sm:$0xff]
    %v293 = vld [vmem:[%s4 + $0x20] sm:$0xff]
    %v294 = vld [vmem:[%s4 + $0x28] sm:$0xff]
    %v295 = vld [vmem:[%s4 + $0x30] sm:$0xff]
    %v296 = vld [vmem:[%s4 + $0x38] sm:$0xff]
    %v297 = vld [vmem:[%s5] sm:$0xff]
    %v298 = vld [vmem:[%s5 + $0x8] sm:$0xff]
    %v299 = vld [vmem:[%s5 + $0x10] sm:$0xff]
    %v300 = vld [vmem:[%s5 + $0x18] sm:$0xff]
    %v301 = vld [vmem:[%s5 + $0x20] sm:$0xff]
    %v302 = vld [vmem:[%s5 + $0x28] sm:$0xff]
    %v303 = vld [vmem:[%s5 + $0x30] sm:$0xff]
    %v304 = vld [vmem:[%s5 + $0x38] sm:$0xff]
    %v305 = vld [vmem:[%s6] sm:$0x3]
    %v306 = vld [vmem:[#allocation7] sm:$0xff]
    %v307 = vld [vmem:[#allocation7 + $0x8] sm:$0x1]
    %v308 = vld [vmem:[#allocation9] sm:$0x1]
    %v309 = vld [vmem:[#allocation10] sm:$0x1]
    %v310 = vld [vmem:[#allocation12] sm:$0x1]
    %v311 = vld [vmem:[%s11] sm:$0xff]
    %v312 = vld [vmem:[%s11 + $0x8] sm:$0xff]
    %v313 = vld [vmem:[%s11 + $0x10] sm:$0xff]
    %v314 = vld [vmem:[%s11 + $0x18] sm:$0xff]
    %v315 = vld [vmem:[%s12] sm:$0x1]
    %v316 = vld [vmem:[%s13] sm:$0xff]
    %v317 = vld [vmem:[%s13 + $0x8] sm:$0xff]
    %v318 = vld [vmem:[%s13 + $0x10] sm:$0xff]
    %v319 = vld [vmem:[%s13 + $0x18] sm:$0xff]
    %v320 = vld [vmem:[%s13 + $0x20] sm:$0xff]
    %v321 = vld [vmem:[%s13 + $0x28] sm:$0xff]
    %v322 = vld [vmem:[%s13 + $0x30] sm:$0xff]
    %v323 = vld [vmem:[%s13 + $0x38] sm:$0xff]
    %v324 = vld [vmem:[%s14] sm:$0x1]
    %v325 = vld [vmem:[%s15] sm:$0x3]
    %v326 = vld [vmem:[#allocation13] sm:$0xff]
    %v327 = vld [vmem:[#allocation13 + $0x8] sm:$0xff]
    %v328 = vld [vmem:[#allocation13 + $0x10] sm:$0xff]
    %v329 = vld [vmem:[#allocation13 + $0x18] sm:$0xff]
    %v330 = vld [vmem:[#allocation15] sm:$0x1]
    %v331 = vld [vmem:[%s18] sm:$0xff]
    %v332 = vld [vmem:[%s18 + $0x8] sm:$0xff]
    %v333 = vld [vmem:[%s18 + $0x10] sm:$0xff]
    %v334 = vld [vmem:[%s18 + $0x18] sm:$0xff]
    %v335 = vld [vmem:[%s18 + $0x20] sm:$0xff]
    %v336 = vld [vmem:[%s18 + $0x28] sm:$0xff]
    %v337 = vld [vmem:[%s18 + $0x30] sm:$0xff]
    %v338 = vld [vmem:[%s18 + $0x38] sm:$0xff]
    %v339 = vld [vmem:[#allocation16] sm:$0x1]
    %v340 = vld [vmem:[%s0] sm:$0xff]
    %v341 = vld [vmem:[%s0 + $0x8] sm:$0xff]
    %v342 = vld [vmem:[%s0 + $0x10] sm:$0xff]
    %v343 = vld [vmem:[%s0 + $0x18] sm:$0xff]
    %v344 = vld [vmem:[%s0 + $0x20] sm:$0xff]
    %v345 = vld [vmem:[%s0 + $0x28] sm:$0xff]
    %v346 = vld [vmem:[%s0 + $0x30] sm:$0xff]
    %v347 = vld [vmem:[%s0 + $0x38] sm:$0xff]
    %vm348 = vcmask 261120
    %v349 = vsel %vm348, %v340, 0.0
    %350 = vadd.xlane.f32.xlu0 %v349
    %v351 = vpop.xlane.xlu0 %350
    %v352 = vsel %vm348, %v341, 0.0
    %353 = vadd.xlane.f32.xlu0 %v352
    %v354 = vpop.xlane.xlu0 %353
    %v355 = vsel %vm348, %v342, 0.0
    %356 = vadd.xlane.f32.xlu0 %v355
    %v357 = vpop.xlane.xlu0 %356
    %v358 = vsel %vm348, %v343, 0.0
    %359 = vadd.xlane.f32.xlu0 %v358
    %v360 = vpop.xlane.xlu0 %359
    %v361 = vsel %vm348, %v344, 0.0
    %362 = vadd.xlane.f32.xlu0 %v361
    %v363 = vpop.xlane.xlu0 %362
    %v364 = vsel %vm348, %v345, 0.0
    %365 = vadd.xlane.f32.xlu0 %v364
    %v366 = vpop.xlane.xlu0 %365
    %v367 = vsel %vm348, %v346, 0.0
    %368 = vadd.xlane.f32.xlu0 %v367
    %v369 = vpop.xlane.xlu0 %368
    %v370 = vsel %vm348, %v347, 0.0
    %371 = vadd.xlane.f32.xlu0 %v370
    %v372 = vpop.xlane.xlu0 %371
    %v373 = vrcp.pop 32.0
    %v374 = vmul.f32 32.0, %v373
    %v375 = vsub.f32 1.0, %v374
    %v376 = vmul.f32 %v373, %v375
    %v377 = vadd.f32 %v373, %v376
    %vm378 = vweird.f32 %v373
    %v379 = vsel %vm378, %v373, %v377
    %v380 = vmul.f32 %v351, %v379
    %v381 = vmul.f32 %v354, %v379
    %v382 = vmul.f32 %v357, %v379
    %v383 = vmul.f32 %v360, %v379
    %v384 = vmul.f32 %v363, %v379
    %v385 = vmul.f32 %v366, %v379
    %v386 = vmul.f32 %v369, %v379
    %v387 = vmul.f32 %v372, %v379
    %v388 = vsub.f32 %v340, %v380
    %v389 = vsub.f32 %v341, %v381
    %v390 = vsub.f32 %v342, %v382
    %v391 = vsub.f32 %v343, %v383
    %v392 = vsub.f32 %v344, %v384
    %v393 = vsub.f32 %v345, %v385
    %v394 = vsub.f32 %v346, %v386
    %v395 = vsub.f32 %v347, %v387
    %v396 = vmul.f32 %v388, %v388
    %v397 = vmul.f32 %v389, %v389
    %v398 = vmul.f32 %v390, %v390
    %v399 = vmul.f32 %v391, %v391
    %v400 = vmul.f32 %v392, %v392
    %v401 = vmul.f32 %v393, %v393
    %v402 = vmul.f32 %v394, %v394
    %v403 = vmul.f32 %v395, %v395
    %v404 = vsel %vm348, %v396, 0.0
    %405 = vadd.xlane.f32.xlu0 %v404
    %v406 = vpop.xlane.xlu0 %405
    %v407 = vsel %vm348, %v397, 0.0
    %408 = vadd.xlane.f32.xlu0 %v407
    %v409 = vpop.xlane.xlu0 %408
    %v410 = vsel %vm348, %v398, 0.0
    %411 = vadd.xlane.f32.xlu0 %v410
    %v412 = vpop.xlane.xlu0 %411
    %v413 = vsel %vm348, %v399, 0.0
    %414 = vadd.xlane.f32.xlu0 %v413
    %v415 = vpop.xlane.xlu0 %414
    %v416 = vsel %vm348, %v400, 0.0
    %417 = vadd.xlane.f32.xlu0 %v416
    %v418 = vpop.xlane.xlu0 %417
    %v419 = vsel %vm348, %v401, 0.0
    %420 = vadd.xlane.f32.xlu0 %v419
    %v421 = vpop.xlane.xlu0 %420
    %v422 = vsel %vm348, %v402, 0.0
    %423 = vadd.xlane.f32.xlu0 %v422
    %v424 = vpop.xlane.xlu0 %423
    %v425 = vsel %vm348, %v403, 0.0
    %426 = vadd.xlane.f32.xlu0 %v425
    %v427 = vpop.xlane.xlu0 %426
    %v428 = vmul.f32 %v406, %v379
    %v429 = vmul.f32 %v409, %v379
    %v430 = vmul.f32 %v412, %v379
    %v431 = vmul.f32 %v415, %v379
    %v432 = vmul.f32 %v418, %v379
    %v433 = vmul.f32 %v421, %v379
    %v434 = vmul.f32 %v424, %v379
    %v435 = vmul.f32 %v427, %v379
    %v436 = vadd.f32 %v428, 1e-05
    %v437 = vadd.f32 %v429, 1e-05
    %v438 = vadd.f32 %v430, 1e-05
    %v439 = vadd.f32 %v431, 1e-05
    %v440 = vadd.f32 %v432, 1e-05
    %v441 = vadd.f32 %v433, 1e-05
    %v442 = vadd.f32 %v434, 1e-05
    %v443 = vadd.f32 %v435, 1e-05
    %v444 = vrsqrt.pop %v436
    %v445 = vmul.f32 %v444, %v436
    %v446 = vmul.f32 %v445, %v444
    %v447 = vmul.f32 0.5, %v446
    %v448 = vsub.f32 1.5, %v447
    %v449 = vmul.f32 %v444, %v448
    %vm450 = vweird.f32 %v436
    %vm451 = vweird.f32 %v444
    %vm452 = vmor %vm450, %vm451
    %v453 = vsel %vm452, %v444, %v449
    %v454 = vrsqrt.pop %v437
    %v455 = vmul.f32 %v454, %v437
    %v456 = vmul.f32 %v455, %v454
    %v457 = vmul.f32 0.5, %v456
    %v458 = vsub.f32 1.5, %v457
    %v459 = vmul.f32 %v454, %v458
    %vm460 = vweird.f32 %v437
    %vm461 = vweird.f32 %v454
    %vm462 = vmor %vm460, %vm461
    %v463 = vsel %vm462, %v454, %v459
    %v464 = vrsqrt.pop %v438
    %v465 = vmul.f32 %v464, %v438
    %v466 = vmul.f32 %v465, %v464
    %v467 = vmul.f32 0.5, %v466
    %v468 = vsub.f32 1.5, %v467
    %v469 = vmul.f32 %v464, %v468
    %vm470 = vweird.f32 %v438
    %vm471 = vweird.f32 %v464
    %vm472 = vmor %vm470, %vm471
    %v473 = vsel %vm472, %v464, %v469
    %v474 = vrsqrt.pop %v439
    %v475 = vmul.f32 %v474, %v439
    %v476 = vmul.f32 %v475, %v474
    %v477 = vmul.f32 0.5, %v476
    %v478 = vsub.f32 1.5, %v477
    %v479 = vmul.f32 %v474, %v478
    %vm480 = vweird.f32 %v439
    %vm481 = vweird.f32 %v474
    %vm482 = vmor %vm480, %vm481
    %v483 = vsel %vm482, %v474, %v479
    %v484 = vrsqrt.pop %v440
    %v485 = vmul.f32 %v484, %v440
    %v486 = vmul.f32 %v485, %v484
    %v487 = vmul.f32 0.5, %v486
    %v488 = vsub.f32 1.5, %v487
    %v489 = vmul.f32 %v484, %v488
    %vm490 = vweird.f32 %v440
    %vm491 = vweird.f32 %v484
    %vm492 = vmor %vm490, %vm491
    %v493 = vsel %vm492, %v484, %v489
    %v494 = vrsqrt.pop %v441
    %v495 = vmul.f32 %v494, %v441
    %v496 = vmul.f32 %v495, %v494
    %v497 = vmul.f32 0.5, %v496
    %v498 = vsub.f32 1.5, %v497
    %v499 = vmul.f32 %v494, %v498
    %vm500 = vweird.f32 %v441
    %vm501 = vweird.f32 %v494
    %vm502 = vmor %vm500, %vm501
    %v503 = vsel %vm502, %v494, %v499
    %v504 = vrsqrt.pop %v442
    %v505 = vmul.f32 %v504, %v442
    %v506 = vmul.f32 %v505, %v504
    %v507 = vmul.f32 0.5, %v506
    %v508 = vsub.f32 1.5, %v507
    %v509 = vmul.f32 %v504, %v508
    %vm510 = vweird.f32 %v442
    %vm511 = vweird.f32 %v504
    %vm512 = vmor %vm510, %vm511
    %v513 = vsel %vm512, %v504, %v509
    %v514 = vrsqrt.pop %v443
    %v515 = vmul.f32 %v514, %v443
    %v516 = vmul.f32 %v515, %v514
    %v517 = vmul.f32 0.5, %v516
    %v518 = vsub.f32 1.5, %v517
    %v519 = vmul.f32 %v514, %v518
    %vm520 = vweird.f32 %v443
    %vm521 = vweird.f32 %v514
    %vm522 = vmor %vm520, %vm521
    %v523 = vsel %vm522, %v514, %v519
    %v524 = vmul.f32 %v388, %v453
    %v525 = vmul.f32 %v389, %v463
    %v526 = vmul.f32 %v390, %v473
    %v527 = vmul.f32 %v391, %v483
    %v528 = vmul.f32 %v392, %v493
    %v529 = vmul.f32 %v393, %v503
    %v530 = vmul.f32 %v394, %v513
    %v531 = vmul.f32 %v395, %v523
    %v532 = vperm.slane %v305, 0
    %v533 = vmul.f32 %v524, %v532
    %v534 = vmul.f32 %v525, %v532
    %v535 = vmul.f32 %v526, %v532
    %v536 = vmul.f32 %v527, %v532
    %v537 = vmul.f32 %v528, %v532
    %v538 = vmul.f32 %v529, %v532
    %v539 = vmul.f32 %v530, %v532
    %v540 = vmul.f32 %v531, %v532
    %v541 = vperm.slane %v305, 1
    %v542 = vadd.f32 %v533, %v541
    %v543 = vadd.f32 %v534, %v541
    %v544 = vadd.f32 %v535, %v541
    %v545 = vadd.f32 %v536, %v541
    %v546 = vadd.f32 %v537, %v541
    %v547 = vadd.f32 %v538, %v541
    %v548 = vadd.f32 %v539, %v541
    %v549 = vadd.f32 %v540, %v541
    %v551 = vsel %vm348, %v542, 0
    %v554 = vsel %vm348, %v543, 0
    %v557 = vsel %vm348, %v544, 0
    %v560 = vsel %vm348, %v545, 0
    %v563 = vsel %vm348, %v546, 0
    %v566 = vsel %vm348, %v547, 0
    %v569 = vsel %vm348, %v548, 0
    %v572 = vsel %vm348, %v549, 0
    %574 = vmatpush.msra.mxu0 0.0
    %575 = vmatpush.msra.mxu0 0.0
    %576 = vmatpush.msra.mxu0 0.0
    %577 = vmatpush.msra.mxu0 0.0
    %578 = vmatpush.msra.mxu0 0.0
    %579 = vmatpush.msra.mxu0 0.0
    %580 = vmatpush.msra.mxu0 0.0
    %581 = vmatpush.msra.mxu0 0.0
    %582 = vmatpush.msra.mxu0 0.0
    %583 = vmatpush.msra.mxu0 0.0
    %584 = vmatpush.msra.mxu0 0.0
    %585 = vmatpush.msra.mxu0 0.0
    %586 = vmatpush.msra.mxu0 %v286
    %587 = vmatpush.msra.mxu0 %v285
    %588 = vmatpush.msra.mxu0 %v284
    %589 = vmatpush.msra.mxu0 %v283
    %590 = vmatmul.f32.gmra.mxu0 %v551
    %v591 = vpop.f32.mrf.mxu0
    %v592 = vadd.f32 0.0, %v591
    %593 = vmatmul.f32.gmra.mxu0 %v554
    %v594 = vpop.f32.mrf.mxu0
    %v595 = vadd.f32 0.0, %v594
    %596 = vmatmul.f32.gmra.mxu0 %v557
    %v597 = vpop.f32.mrf.mxu0
    %v598 = vadd.f32 0.0, %v597
    %599 = vmatmul.f32.gmra.mxu0 %v560
    %v600 = vpop.f32.mrf.mxu0
    %v601 = vadd.f32 0.0, %v600
    %602 = vmatmul.f32.gmra.mxu0 %v563
    %v603 = vpop.f32.mrf.mxu0
    %v604 = vadd.f32 0.0, %v603
    %605 = vmatmul.f32.gmra.mxu0 %v566
    %v606 = vpop.f32.mrf.mxu0
    %v607 = vadd.f32 0.0, %v606
    %608 = vmatmul.f32.gmra.mxu0 %v569
    %v609 = vpop.f32.mrf.mxu0
    %v610 = vadd.f32 0.0, %v609
    %611 = vmatmul.f32.gmra.mxu0 %v572
    %v612 = vpop.f32.mrf.mxu0
    %v613 = vadd.f32 0.0, %v612
    %614 = vdwg.mxu0
    %vm615 = vcmask 523264
    %v617 = vsel %vm615, %v211, 0
    %v620 = vsel %vm615, %v212, 0
    %v623 = vsel %vm615, %v213, 0
    %v626 = vsel %vm615, %v214, 0
    %v629 = vsel %vm615, %v215, 0
    %v632 = vsel %vm615, %v216, 0
    %v635 = vsel %vm615, %v217, 0
    %v638 = vsel %vm615, %v218, 0
    %v641 = vsel %vm615, %v219, 0
    %v644 = vsel %vm615, %v220, 0
    %v647 = vsel %vm615, %v221, 0
    %v650 = vsel %vm615, %v222, 0
    %v653 = vsel %vm615, %v223, 0
    %v656 = vsel %vm615, %v224, 0
    %v659 = vsel %vm615, %v225, 0
    %v662 = vsel %vm615, %v226, 0
    %v665 = vsel %vm615, %v227, 0
    %v668 = vsel %vm615, %v228, 0
    %v671 = vsel %vm615, %v229, 0
    %v674 = vsel %vm615, %v230, 0
    %v677 = vsel %vm615, %v231, 0
    %v680 = vsel %vm615, %v232, 0
    %v683 = vsel %vm615, %v233, 0
    %v686 = vsel %vm615, %v234, 0
    %v689 = vsel %vm615, %v235, 0
    %v692 = vsel %vm615, %v236, 0
    %v695 = vsel %vm615, %v237, 0
    %v698 = vsel %vm615, %v238, 0
    %v701 = vsel %vm615, %v239, 0
    %v704 = vsel %vm615, %v240, 0
    %v707 = vsel %vm615, %v241, 0
    %v710 = vsel %vm615, %v242, 0
    %v713 = vsel %vm615, %v243, 0
    %v716 = vsel %vm615, %v244, 0
    %v719 = vsel %vm615, %v245, 0
    %v722 = vsel %vm615, %v246, 0
    %v725 = vsel %vm615, %v247, 0
    %v728 = vsel %vm615, %v248, 0
    %v731 = vsel %vm615, %v249, 0
    %v734 = vsel %vm615, %v250, 0
    %v737 = vsel %vm615, %v251, 0
    %v740 = vsel %vm615, %v252, 0
    %v743 = vsel %vm615, %v253, 0
    %v746 = vsel %vm615, %v254, 0
    %v749 = vsel %vm615, %v255, 0
    %v752 = vsel %vm615, %v256, 0
    %v755 = vsel %vm615, %v257, 0
    %v758 = vsel %vm615, %v258, 0
    %v761 = vsel %vm615, %v259, 0
    %v764 = vsel %vm615, %v260, 0
    %v767 = vsel %vm615, %v261, 0
    %v770 = vsel %vm615, %v262, 0
    %v773 = vsel %vm615, %v263, 0
    %v776 = vsel %vm615, %v264, 0
    %v779 = vsel %vm615, %v265, 0
    %v782 = vsel %vm615, %v266, 0
    %v785 = vsel %vm615, %v267, 0
    %v788 = vsel %vm615, %v268, 0
    %v791 = vsel %vm615, %v269, 0
    %v794 = vsel %vm615, %v270, 0
    %v797 = vsel %vm615, %v271, 0
    %v800 = vsel %vm615, %v272, 0
    %v803 = vsel %vm615, %v273, 0
    %v806 = vsel %vm615, %v274, 0
    %v809 = vsel %vm615, %v275, 0
    %v812 = vsel %vm615, %v276, 0
    %v815 = vsel %vm615, %v277, 0
    %v818 = vsel %vm615, %v278, 0
    %v821 = vsel %vm615, %v279, 0
    %v824 = vsel %vm615, %v280, 0
    %v827 = vsel %vm615, %v281, 0
    %v830 = vsel %vm615, %v282, 0
    %832 = vmatpush.msra.mxu0 0.0
    %833 = vmatpush.msra.mxu0 0.0
    %834 = vmatpush.msra.mxu0 0.0
    %835 = vmatpush.msra.mxu0 0.0
    %836 = vmatpush.msra.mxu0 0.0
    %837 = vmatpush.msra.mxu0 0.0
    %838 = vmatpush.msra.mxu0 0.0
    %839 = vmatpush.msra.mxu0 0.0
    %840 = vmatpush.msra.mxu0 %v613
    %841 = vmatpush.msra.mxu0 %v610
    %842 = vmatpush.msra.mxu0 %v607
    %843 = vmatpush.msra.mxu0 %v604
    %844 = vmatpush.msra.mxu0 %v601
    %845 = vmatpush.msra.mxu0 %v598
    %846 = vmatpush.msra.mxu0 %v595
    %847 = vmatpush.msra.mxu0 %v592
    %848 = vmatmul.f32.gmra.mxu0 %v617
    %v849 = vpop.f32.mrf.mxu0
    %v850 = vadd.f32 0.0, %v849
    %851 = vmatmul.f32.gmra.mxu0 %v620
    %v852 = vpop.f32.mrf.mxu0
    %v853 = vadd.f32 0.0, %v852
    %854 = vmatmul.f32.gmra.mxu0 %v623
    %v855 = vpop.f32.mrf.mxu0
    %v856 = vadd.f32 0.0, %v855
    %857 = vmatmul.f32.gmra.mxu0 %v626
    %v858 = vpop.f32.mrf.mxu0
    %v859 = vadd.f32 0.0, %v858
    %860 = vmatmul.f32.gmra.mxu0 %v629
    %v861 = vpop.f32.mrf.mxu0
    %v862 = vadd.f32 0.0, %v861
    %863 = vmatmul.f32.gmra.mxu0 %v632
    %v864 = vpop.f32.mrf.mxu0
    %v865 = vadd.f32 0.0, %v864
    %866 = vmatmul.f32.gmra.mxu0 %v635
    %v867 = vpop.f32.mrf.mxu0
    %v868 = vadd.f32 0.0, %v867
    %869 = vmatmul.f32.gmra.mxu0 %v638
    %v870 = vpop.f32.mrf.mxu0
    %v871 = vadd.f32 0.0, %v870
    %872 = vmatmul.f32.gmra.mxu0 %v641
    %v873 = vpop.f32.mrf.mxu0
    %v874 = vadd.f32 0.0, %v873
    %875 = vmatmul.f32.gmra.mxu0 %v644
    %v876 = vpop.f32.mrf.mxu0
    %v877 = vadd.f32 0.0, %v876
    %878 = vmatmul.f32.gmra.mxu0 %v647
    %v879 = vpop.f32.mrf.mxu0
    %v880 = vadd.f32 0.0, %v879
    %881 = vmatmul.f32.gmra.mxu0 %v650
    %v882 = vpop.f32.mrf.mxu0
    %v883 = vadd.f32 0.0, %v882
    %884 = vmatmul.f32.gmra.mxu0 %v653
    %v885 = vpop.f32.mrf.mxu0
    %v886 = vadd.f32 0.0, %v885
    %887 = vmatmul.f32.gmra.mxu0 %v656
    %v888 = vpop.f32.mrf.mxu0
    %v889 = vadd.f32 0.0, %v888
    %890 = vmatmul.f32.gmra.mxu0 %v659
    %v891 = vpop.f32.mrf.mxu0
    %v892 = vadd.f32 0.0, %v891
    %893 = vmatmul.f32.gmra.mxu0 %v662
    %v894 = vpop.f32.mrf.mxu0
    %v895 = vadd.f32 0.0, %v894
    %896 = vmatmul.f32.gmra.mxu0 %v665
    %v897 = vpop.f32.mrf.mxu0
    %v898 = vadd.f32 0.0, %v897
    %899 = vmatmul.f32.gmra.mxu0 %v668
    %v900 = vpop.f32.mrf.mxu0
    %v901 = vadd.f32 0.0, %v900
    %902 = vmatmul.f32.gmra.mxu0 %v671
    %v903 = vpop.f32.mrf.mxu0
    %v904 = vadd.f32 0.0, %v903
    %905 = vmatmul.f32.gmra.mxu0 %v674
    %v906 = vpop.f32.mrf.mxu0
    %v907 = vadd.f32 0.0, %v906
    %908 = vmatmul.f32.gmra.mxu0 %v677
    %v909 = vpop.f32.mrf.mxu0
    %v910 = vadd.f32 0.0, %v909
    %911 = vmatmul.f32.gmra.mxu0 %v680
    %v912 = vpop.f32.mrf.mxu0
    %v913 = vadd.f32 0.0, %v912
    %914 = vmatmul.f32.gmra.mxu0 %v683
    %v915 = vpop.f32.mrf.mxu0
    %v916 = vadd.f32 0.0, %v915
    %917 = vmatmul.f32.gmra.mxu0 %v686
    %v918 = vpop.f32.mrf.mxu0
    %v919 = vadd.f32 0.0, %v918
    %920 = vmatmul.f32.gmra.mxu0 %v689
    %v921 = vpop.f32.mrf.mxu0
    %v922 = vadd.f32 0.0, %v921
    %923 = vmatmul.f32.gmra.mxu0 %v692
    %v924 = vpop.f32.mrf.mxu0
    %v925 = vadd.f32 0.0, %v924
    %926 = vmatmul.f32.gmra.mxu0 %v695
    %v927 = vpop.f32.mrf.mxu0
    %v928 = vadd.f32 0.0, %v927
    %929 = vmatmul.f32.gmra.mxu0 %v698
    %v930 = vpop.f32.mrf.mxu0
    %v931 = vadd.f32 0.0, %v930
    %932 = vmatmul.f32.gmra.mxu0 %v701
    %v933 = vpop.f32.mrf.mxu0
    %v934 = vadd.f32 0.0, %v933
    %935 = vmatmul.f32.gmra.mxu0 %v704
    %v936 = vpop.f32.mrf.mxu0
    %v937 = vadd.f32 0.0, %v936
    %938 = vmatmul.f32.gmra.mxu0 %v707
    %v939 = vpop.f32.mrf.mxu0
    %v940 = vadd.f32 0.0, %v939
    %941 = vmatmul.f32.gmra.mxu0 %v710
    %v942 = vpop.f32.mrf.mxu0
    %v943 = vadd.f32 0.0, %v942
    %944 = vmatmul.f32.gmra.mxu0 %v713
    %v945 = vpop.f32.mrf.mxu0
    %v946 = vadd.f32 0.0, %v945
    %947 = vmatmul.f32.gmra.mxu0 %v716
    %v948 = vpop.f32.mrf.mxu0
    %v949 = vadd.f32 0.0, %v948
    %950 = vmatmul.f32.gmra.mxu0 %v719
    %v951 = vpop.f32.mrf.mxu0
    %v952 = vadd.f32 0.0, %v951
    %953 = vmatmul.f32.gmra.mxu0 %v722
    %v954 = vpop.f32.mrf.mxu0
    %v955 = vadd.f32 0.0, %v954
    %956 = vmatmul.f32.gmra.mxu0 %v725
    %v957 = vpop.f32.mrf.mxu0
    %v958 = vadd.f32 0.0, %v957
    %959 = vmatmul.f32.gmra.mxu0 %v728
    %v960 = vpop.f32.mrf.mxu0
    %v961 = vadd.f32 0.0, %v960
    %962 = vmatmul.f32.gmra.mxu0 %v731
    %v963 = vpop.f32.mrf.mxu0
    %v964 = vadd.f32 0.0, %v963
    %965 = vmatmul.f32.gmra.mxu0 %v734
    %v966 = vpop.f32.mrf.mxu0
    %v967 = vadd.f32 0.0, %v966
    %968 = vmatmul.f32.gmra.mxu0 %v737
    %v969 = vpop.f32.mrf.mxu0
    %v970 = vadd.f32 0.0, %v969
    %971 = vmatmul.f32.gmra.mxu0 %v740
    %v972 = vpop.f32.mrf.mxu0
    %v973 = vadd.f32 0.0, %v972
    %974 = vmatmul.f32.gmra.mxu0 %v743
    %v975 = vpop.f32.mrf.mxu0
    %v976 = vadd.f32 0.0, %v975
    %977 = vmatmul.f32.gmra.mxu0 %v746
    %v978 = vpop.f32.mrf.mxu0
    %v979 = vadd.f32 0.0, %v978
    %980 = vmatmul.f32.gmra.mxu0 %v749
    %v981 = vpop.f32.mrf.mxu0
    %v982 = vadd.f32 0.0, %v981
    %983 = vmatmul.f32.gmra.mxu0 %v752
    %v984 = vpop.f32.mrf.mxu0
    %v985 = vadd.f32 0.0, %v984
    %986 = vmatmul.f32.gmra.mxu0 %v755
    %v987 = vpop.f32.mrf.mxu0
    %v988 = vadd.f32 0.0, %v987
    %989 = vmatmul.f32.gmra.mxu0 %v758
    %v990 = vpop.f32.mrf.mxu0
    %v991 = vadd.f32 0.0, %v990
    %992 = vmatmul.f32.gmra.mxu0 %v761
    %v993 = vpop.f32.mrf.mxu0
    %v994 = vadd.f32 0.0, %v993
    %995 = vmatmul.f32.gmra.mxu0 %v764
    %v996 = vpop.f32.mrf.mxu0
    %v997 = vadd.f32 0.0, %v996
    %998 = vmatmul.f32.gmra.mxu0 %v767
    %v999 = vpop.f32.mrf.mxu0
    %v1000 = vadd.f32 0.0, %v999
    %1001 = vmatmul.f32.gmra.mxu0 %v770
    %v1002 = vpop.f32.mrf.mxu0
    %v1003 = vadd.f32 0.0, %v1002
    %1004 = vmatmul.f32.gmra.mxu0 %v773
    %v1005 = vpop.f32.mrf.mxu0
    %v1006 = vadd.f32 0.0, %v1005
    %1007 = vmatmul.f32.gmra.mxu0 %v776
    %v1008 = vpop.f32.mrf.mxu0
    %v1009 = vadd.f32 0.0, %v1008
    %1010 = vmatmul.f32.gmra.mxu0 %v779
    %v1011 = vpop.f32.mrf.mxu0
    %v1012 = vadd.f32 0.0, %v1011
    %1013 = vmatmul.f32.gmra.mxu0 %v782
    %v1014 = vpop.f32.mrf.mxu0
    %v1015 = vadd.f32 0.0, %v1014
    %1016 = vmatmul.f32.gmra.mxu0 %v785
    %v1017 = vpop.f32.mrf.mxu0
    %v1018 = vadd.f32 0.0, %v1017
    %1019 = vmatmul.f32.gmra.mxu0 %v788
    %v1020 = vpop.f32.mrf.mxu0
    %v1021 = vadd.f32 0.0, %v1020
    %1022 = vmatmul.f32.gmra.mxu0 %v791
    %v1023 = vpop.f32.mrf.mxu0
    %v1024 = vadd.f32 0.0, %v1023
    %1025 = vmatmul.f32.gmra.mxu0 %v794
    %v1026 = vpop.f32.mrf.mxu0
    %v1027 = vadd.f32 0.0, %v1026
    %1028 = vmatmul.f32.gmra.mxu0 %v797
    %v1029 = vpop.f32.mrf.mxu0
    %v1030 = vadd.f32 0.0, %v1029
    %1031 = vmatmul.f32.gmra.mxu0 %v800
    %v1032 = vpop.f32.mrf.mxu0
    %v1033 = vadd.f32 0.0, %v1032
    %1034 = vmatmul.f32.gmra.mxu0 %v803
    %v1035 = vpop.f32.mrf.mxu0
    %v1036 = vadd.f32 0.0, %v1035
    %1037 = vmatmul.f32.gmra.mxu0 %v806
    %v1038 = vpop.f32.mrf.mxu0
    %v1039 = vadd.f32 0.0, %v1038
    %1040 = vmatmul.f32.gmra.mxu0 %v809
    %v1041 = vpop.f32.mrf.mxu0
    %v1042 = vadd.f32 0.0, %v1041
    %1043 = vmatmul.f32.gmra.mxu0 %v812
    %v1044 = vpop.f32.mrf.mxu0
    %v1045 = vadd.f32 0.0, %v1044
    %1046 = vmatmul.f32.gmra.mxu0 %v815
    %v1047 = vpop.f32.mrf.mxu0
    %v1048 = vadd.f32 0.0, %v1047
    %1049 = vmatmul.f32.gmra.mxu0 %v818
    %v1050 = vpop.f32.mrf.mxu0
    %v1051 = vadd.f32 0.0, %v1050
    %1052 = vmatmul.f32.gmra.mxu0 %v821
    %v1053 = vpop.f32.mrf.mxu0
    %v1054 = vadd.f32 0.0, %v1053
    %1055 = vmatmul.f32.gmra.mxu0 %v824
    %v1056 = vpop.f32.mrf.mxu0
    %v1057 = vadd.f32 0.0, %v1056
    %1058 = vmatmul.f32.gmra.mxu0 %v827
    %v1059 = vpop.f32.mrf.mxu0
    %v1060 = vadd.f32 0.0, %v1059
    %1061 = vmatmul.f32.gmra.mxu0 %v830
    %v1062 = vpop.f32.mrf.mxu0
    %v1063 = vadd.f32 0.0, %v1062
    %1064 = vdwg.mxu0
    %v1065 = vperm.slane %v306, 0
    %v1066 = vmul.f32 %v850, %v1065
    %v1067 = vmul.f32 %v853, %v1065
    %v1068 = vmul.f32 %v856, %v1065
    %v1069 = vmul.f32 %v859, %v1065
    %v1070 = vmul.f32 %v862, %v1065
    %v1071 = vmul.f32 %v865, %v1065
    %v1072 = vmul.f32 %v868, %v1065
    %v1073 = vmul.f32 %v871, %v1065
    %v1074 = vadd.f32 %v1066, 0.0
    %v1075 = vadd.f32 %v1067, 0.0
    %v1076 = vadd.f32 %v1068, 0.0
    %v1077 = vadd.f32 %v1069, 0.0
    %v1078 = vadd.f32 %v1070, 0.0
    %v1079 = vadd.f32 %v1071, 0.0
    %v1080 = vadd.f32 %v1072, 0.0
    %v1081 = vadd.f32 %v1073, 0.0
    %v1082 = vperm.slane %v306, 1
    %v1083 = vmul.f32 %v874, %v1082
    %v1084 = vmul.f32 %v877, %v1082
    %v1085 = vmul.f32 %v880, %v1082
    %v1086 = vmul.f32 %v883, %v1082
    %v1087 = vmul.f32 %v886, %v1082
    %v1088 = vmul.f32 %v889, %v1082
    %v1089 = vmul.f32 %v892, %v1082
    %v1090 = vmul.f32 %v895, %v1082
    %v1091 = vadd.f32 %v1074, %v1083
    %v1092 = vadd.f32 %v1075, %v1084
    %v1093 = vadd.f32 %v1076, %v1085
    %v1094 = vadd.f32 %v1077, %v1086
    %v1095 = vadd.f32 %v1078, %v1087
    %v1096 = vadd.f32 %v1079, %v1088
    %v1097 = vadd.f32 %v1080, %v1089
    %v1098 = vadd.f32 %v1081, %v1090
    %v1099 = vperm.slane %v306, 2
    %v1100 = vmul.f32 %v898, %v1099
    %v1101 = vmul.f32 %v901, %v1099
    %v1102 = vmul.f32 %v904, %v1099
    %v1103 = vmul.f32 %v907, %v1099
    %v1104 = vmul.f32 %v910, %v1099
    %v1105 = vmul.f32 %v913, %v1099
    %v1106 = vmul.f32 %v916, %v1099
    %v1107 = vmul.f32 %v919, %v1099
    %v1108 = vadd.f32 %v1091, %v1100
    %v1109 = vadd.f32 %v1092, %v1101
    %v1110 = vadd.f32 %v1093, %v1102
    %v1111 = vadd.f32 %v1094, %v1103
    %v1112 = vadd.f32 %v1095, %v1104
    %v1113 = vadd.f32 %v1096, %v1105
    %v1114 = vadd.f32 %v1097, %v1106
    %v1115 = vadd.f32 %v1098, %v1107
    %v1116 = vperm.slane %v306, 3
    %v1117 = vmul.f32 %v922, %v1116
    %v1118 = vmul.f32 %v925, %v1116
    %v1119 = vmul.f32 %v928, %v1116
    %v1120 = vmul.f32 %v931, %v1116
    %v1121 = vmul.f32 %v934, %v1116
    %v1122 = vmul.f32 %v937, %v1116
    %v1123 = vmul.f32 %v940, %v1116
    %v1124 = vmul.f32 %v943, %v1116
    %v1125 = vadd.f32 %v1108, %v1117
    %v1126 = vadd.f32 %v1109, %v1118
    %v1127 = vadd.f32 %v1110, %v1119
    %v1128 = vadd.f32 %v1111, %v1120
    %v1129 = vadd.f32 %v1112, %v1121
    %v1130 = vadd.f32 %v1113, %v1122
    %v1131 = vadd.f32 %v1114, %v1123
    %v1132 = vadd.f32 %v1115, %v1124
    %v1133 = vperm.slane %v306, 4
    %v1134 = vmul.f32 %v946, %v1133
    %v1135 = vmul.f32 %v949, %v1133
    %v1136 = vmul.f32 %v952, %v1133
    %v1137 = vmul.f32 %v955, %v1133
    %v1138 = vmul.f32 %v958, %v1133
    %v1139 = vmul.f32 %v961, %v1133
    %v1140 = vmul.f32 %v964, %v1133
    %v1141 = vmul.f32 %v967, %v1133
    %v1142 = vadd.f32 %v1125, %v1134
    %v1143 = vadd.f32 %v1126, %v1135
    %v1144 = vadd.f32 %v1127, %v1136
    %v1145 = vadd.f32 %v1128, %v1137
    %v1146 = vadd.f32 %v1129, %v1138
    %v1147 = vadd.f32 %v1130, %v1139
    %v1148 = vadd.f32 %v1131, %v1140
    %v1149 = vadd.f32 %v1132, %v1141
    %v1150 = vperm.slane %v306, 5
    %v1151 = vmul.f32 %v970, %v1150
    %v1152 = vmul.f32 %v973, %v1150
    %v1153 = vmul.f32 %v976, %v1150
    %v1154 = vmul.f32 %v979, %v1150
    %v1155 = vmul.f32 %v982, %v1150
    %v1156 = vmul.f32 %v985, %v1150
    %v1157 = vmul.f32 %v988, %v1150
    %v1158 = vmul.f32 %v991, %v1150
    %v1159 = vadd.f32 %v1142, %v1151
    %v1160 = vadd.f32 %v1143, %v1152
    %v1161 = vadd.f32 %v1144, %v1153
    %v1162 = vadd.f32 %v1145, %v1154
    %v1163 = vadd.f32 %v1146, %v1155
    %v1164 = vadd.f32 %v1147, %v1156
    %v1165 = vadd.f32 %v1148, %v1157
    %v1166 = vadd.f32 %v1149, %v1158
    %v1167 = vperm.slane %v306, 6
    %v1168 = vmul.f32 %v994, %v1167
    %v1169 = vmul.f32 %v997, %v1167
    %v1170 = vmul.f32 %v1000, %v1167
    %v1171 = vmul.f32 %v1003, %v1167
    %v1172 = vmul.f32 %v1006, %v1167
    %v1173 = vmul.f32 %v1009, %v1167
    %v1174 = vmul.f32 %v1012, %v1167
    %v1175 = vmul.f32 %v1015, %v1167
    %v1176 = vadd.f32 %v1159, %v1168
    %v1177 = vadd.f32 %v1160, %v1169
    %v1178 = vadd.f32 %v1161, %v1170
    %v1179 = vadd.f32 %v1162, %v1171
    %v1180 = vadd.f32 %v1163, %v1172
    %v1181 = vadd.f32 %v1164, %v1173
    %v1182 = vadd.f32 %v1165, %v1174
    %v1183 = vadd.f32 %v1166, %v1175
    %v1184 = vperm.slane %v306, 7
    %v1185 = vmul.f32 %v1018, %v1184
    %v1186 = vmul.f32 %v1021, %v1184
    %v1187 = vmul.f32 %v1024, %v1184
    %v1188 = vmul.f32 %v1027, %v1184
    %v1189 = vmul.f32 %v1030, %v1184
    %v1190 = vmul.f32 %v1033, %v1184
    %v1191 = vmul.f32 %v1036, %v1184
    %v1192 = vmul.f32 %v1039, %v1184
    %v1193 = vadd.f32 %v1176, %v1185
    %v1194 = vadd.f32 %v1177, %v1186
    %v1195 = vadd.f32 %v1178, %v1187
    %v1196 = vadd.f32 %v1179, %v1188
    %v1197 = vadd.f32 %v1180, %v1189
    %v1198 = vadd.f32 %v1181, %v1190
    %v1199 = vadd.f32 %v1182, %v1191
    %v1200 = vadd.f32 %v1183, %v1192
    %v1201 = vperm.slane %v307, 0
    %v1202 = vmul.f32 %v1042, %v1201
    %v1203 = vmul.f32 %v1045, %v1201
    %v1204 = vmul.f32 %v1048, %v1201
    %v1205 = vmul.f32 %v1051, %v1201
    %v1206 = vmul.f32 %v1054, %v1201
    %v1207 = vmul.f32 %v1057, %v1201
    %v1208 = vmul.f32 %v1060, %v1201
    %v1209 = vmul.f32 %v1063, %v1201
    %v1210 = vadd.f32 %v1193, %v1202
    %v1211 = vadd.f32 %v1194, %v1203
    %v1212 = vadd.f32 %v1195, %v1204
    %v1213 = vadd.f32 %v1196, %v1205
    %v1214 = vadd.f32 %v1197, %v1206
    %v1215 = vadd.f32 %v1198, %v1207
    %v1216 = vadd.f32 %v1199, %v1208
    %v1217 = vadd.f32 %v1200, %v1209
    %v1219 = vperm.slane %v308, 0
    %v1221 = vadd.f32 %v1210, %v1219
    %v1222 = vadd.f32 %v1211, %v1219
    %v1223 = vadd.f32 %v1212, %v1219
    %v1224 = vadd.f32 %v1213, %v1219
    %v1225 = vadd.f32 %v1214, %v1219
    %v1226 = vadd.f32 %v1215, %v1219
    %v1227 = vadd.f32 %v1216, %v1219
    %v1228 = vadd.f32 %v1217, %v1219
    %vm1229 = vcmp.gt.f32.partialorder %v1221, 0.0
    %vm1230 = vcmp.gt.f32.partialorder %v1222, 0.0
    %vm1231 = vcmp.gt.f32.partialorder %v1223, 0.0
    %vm1232 = vcmp.gt.f32.partialorder %v1224, 0.0
    %vm1233 = vcmp.gt.f32.partialorder %v1225, 0.0
    %vm1234 = vcmp.gt.f32.partialorder %v1226, 0.0
    %vm1235 = vcmp.gt.f32.partialorder %v1227, 0.0
    %vm1236 = vcmp.gt.f32.partialorder %v1228, 0.0
    %v1237 = vmin.f32 %v1221, 0.0
    %v1238 = vmin.f32 %v1222, 0.0
    %v1239 = vmin.f32 %v1223, 0.0
    %v1240 = vmin.f32 %v1224, 0.0
    %v1241 = vmin.f32 %v1225, 0.0
    %v1242 = vmin.f32 %v1226, 0.0
    %v1243 = vmin.f32 %v1227, 0.0
    %v1244 = vmin.f32 %v1228, 0.0
    %v1245 = vmul.f32 %v1237, 1.442695
    %v1246 = vpow.pop %v1245
    %v1247 = vmul.f32 %v1238, 1.442695
    %v1248 = vpow.pop %v1247
    %v1249 = vmul.f32 %v1239, 1.442695
    %v1250 = vpow.pop %v1249
    %v1251 = vmul.f32 %v1240, 1.442695
    %v1252 = vpow.pop %v1251
    %v1253 = vmul.f32 %v1241, 1.442695
    %v1254 = vpow.pop %v1253
    %v1255 = vmul.f32 %v1242, 1.442695
    %v1256 = vpow.pop %v1255
    %v1257 = vmul.f32 %v1243, 1.442695
    %v1258 = vpow.pop %v1257
    %v1259 = vmul.f32 %v1244, 1.442695
    %v1260 = vpow.pop %v1259
    %v1261 = vsub.f32 %v1246, 1.0
    %v1262 = vsub.f32 %v1248, 1.0
    %v1263 = vsub.f32 %v1250, 1.0
    %v1264 = vsub.f32 %v1252, 1.0
    %v1265 = vsub.f32 %v1254, 1.0
    %v1266 = vsub.f32 %v1256, 1.0
    %v1267 = vsub.f32 %v1258, 1.0
    %v1268 = vsub.f32 %v1260, 1.0
    %v1269 = vsel %vm1229, %v1221, %v1261
    %v1270 = vsel %vm1230, %v1222, %v1262
    %v1271 = vsel %vm1231, %v1223, %v1263
    %v1272 = vsel %vm1232, %v1224, %v1264
    %v1273 = vsel %vm1233, %v1225, %v1265
    %v1274 = vsel %vm1234, %v1226, %v1266
    %v1275 = vsel %vm1235, %v1227, %v1267
    %v1276 = vsel %vm1236, %v1228, %v1268
    %v1278 = vperm.slane %v309, 0
    %v1280 = vmul.f32 %v1269, %v1278
    %v1281 = vmul.f32 %v1270, %v1278
    %v1282 = vmul.f32 %v1271, %v1278
    %v1283 = vmul.f32 %v1272, %v1278
    %v1284 = vmul.f32 %v1273, %v1278
    %v1285 = vmul.f32 %v1274, %v1278
    %v1286 = vmul.f32 %v1275, %v1278
    %v1287 = vmul.f32 %v1276, %v1278
    %v1289 = vperm.slane %v310, 0
    %v1291 = vadd.f32 %v1280, %v1289
    %v1292 = vadd.f32 %v1281, %v1289
    %v1293 = vadd.f32 %v1282, %v1289
    %v1294 = vadd.f32 %v1283, %v1289
    %v1295 = vadd.f32 %v1284, %v1289
    %v1296 = vadd.f32 %v1285, %v1289
    %v1297 = vadd.f32 %v1286, %v1289
    %v1298 = vadd.f32 %v1287, %v1289
    %v1300 = vsel %vm615, %v287, 0
    %v1303 = vsel %vm615, %v288, 0
    %1305 = vmatpush.msra.mxu0 0.0
    %1306 = vmatpush.msra.mxu0 0.0
    %1307 = vmatpush.msra.mxu0 0.0
    %1308 = vmatpush.msra.mxu0 0.0
    %1309 = vmatpush.msra.mxu0 0.0
    %1310 = vmatpush.msra.mxu0 0.0
    %1311 = vmatpush.msra.mxu0 0.0
    %1312 = vmatpush.msra.mxu0 0.0
    %1313 = vmatpush.msra.mxu0 %v1298
    %1314 = vmatpush.msra.mxu0 %v1297
    %1315 = vmatpush.msra.mxu0 %v1296
    %1316 = vmatpush.msra.mxu0 %v1295
    %1317 = vmatpush.msra.mxu0 %v1294
    %1318 = vmatpush.msra.mxu0 %v1293
    %1319 = vmatpush.msra.mxu0 %v1292
    %1320 = vmatpush.msra.mxu0 %v1291
    %1321 = vmatmul.f32.gmra.mxu0 %v1300
    %v1322 = vpop.f32.mrf.mxu0
    %v1323 = vadd.f32 0.0, %v1322
    %1324 = vmatmul.f32.gmra.mxu0 %v1303
    %v1325 = vpop.f32.mrf.mxu0
    %v1326 = vadd.f32 0.0, %v1325
    %1327 = vdwg.mxu0
    %v1329 = vperm.slane %v315, 0
    %v1332 = vsel %vm348, %v1291, 0
    %v1335 = vsel %vm348, %v1292, 0
    %v1338 = vsel %vm348, %v1293, 0
    %v1341 = vsel %vm348, %v1294, 0
    %v1344 = vsel %vm348, %v1295, 0
    %v1347 = vsel %vm348, %v1296, 0
    %v1350 = vsel %vm348, %v1297, 0
    %v1353 = vsel %vm348, %v1298, 0
    %1355 = vmatpush.msra.mxu0 0.0
    %1356 = vmatpush.msra.mxu0 0.0
    %1357 = vmatpush.msra.mxu0 0.0
    %1358 = vmatpush.msra.mxu0 0.0
    %1359 = vmatpush.msra.mxu0 0.0
    %1360 = vmatpush.msra.mxu0 0.0
    %1361 = vmatpush.msra.mxu0 0.0
    %1362 = vmatpush.msra.mxu0 0.0
    %1363 = vmatpush.msra.mxu0 0.0
    %1364 = vmatpush.msra.mxu0 0.0
    %1365 = vmatpush.msra.mxu0 0.0
    %1366 = vmatpush.msra.mxu0 0.0
    %1367 = vmatpush.msra.mxu0 %v314
    %1368 = vmatpush.msra.mxu0 %v313
    %1369 = vmatpush.msra.mxu0 %v312
    %1370 = vmatpush.msra.mxu0 %v311
    %1371 = vmatmul.f32.gmra.mxu0 %v1332
    %v1372 = vpop.f32.mrf.mxu0
    %v1373 = vadd.f32 %v1329, %v1372
    %1374 = vmatmul.f32.gmra.mxu0 %v1335
    %v1375 = vpop.f32.mrf.mxu0
    %v1376 = vadd.f32 %v1329, %v1375
    %1377 = vmatmul.f32.gmra.mxu0 %v1338
    %v1378 = vpop.f32.mrf.mxu0
    %v1379 = vadd.f32 %v1329, %v1378
    %1380 = vmatmul.f32.gmra.mxu0 %v1341
    %v1381 = vpop.f32.mrf.mxu0
    %v1382 = vadd.f32 %v1329, %v1381
    %1383 = vmatmul.f32.gmra.mxu0 %v1344
    %v1384 = vpop.f32.mrf.mxu0
    %v1385 = vadd.f32 %v1329, %v1384
    %1386 = vmatmul.f32.gmra.mxu0 %v1347
    %v1387 = vpop.f32.mrf.mxu0
    %v1388 = vadd.f32 %v1329, %v1387
    %1389 = vmatmul.f32.gmra.mxu0 %v1350
    %v1390 = vpop.f32.mrf.mxu0
    %v1391 = vadd.f32 %v1329, %v1390
    %1392 = vmatmul.f32.gmra.mxu0 %v1353
    %v1393 = vpop.f32.mrf.mxu0
    %v1394 = vadd.f32 %v1329, %v1393
    %1395 = vdwg.mxu0
    %v1397 = vperm.slane %v324, 0
    %1401 = vrot.lane.b32.xlu0 %v1323, 96
    %v1402 = vpop.permute.xlu0 %1401
    %1403 = vrot.lane.b32.xlu0 %v1326, 96
    %v1404 = vpop.permute.xlu0 %1403
    %v1405 = vsel %vm615, %v1402, 0
    %v1407 = vsel %vm615, %v1404, 0
    %1409 = vmatpush.msra.mxu0 0.0
    %1410 = vmatpush.msra.mxu0 0.0
    %1411 = vmatpush.msra.mxu0 0.0
    %1412 = vmatpush.msra.mxu0 0.0
    %1413 = vmatpush.msra.mxu0 0.0
    %1414 = vmatpush.msra.mxu0 0.0
    %1415 = vmatpush.msra.mxu0 0.0
    %1416 = vmatpush.msra.mxu0 0.0
    %1417 = vmatpush.msra.mxu0 %v323
    %1418 = vmatpush.msra.mxu0 %v322
    %1419 = vmatpush.msra.mxu0 %v321
    %1420 = vmatpush.msra.mxu0 %v320
    %1421 = vmatpush.msra.mxu0 %v319
    %1422 = vmatpush.msra.mxu0 %v318
    %1423 = vmatpush.msra.mxu0 %v317
    %1424 = vmatpush.msra.mxu0 %v316
    %1425 = vmatmul.f32.gmra.mxu0 %v1405
    %v1426 = vpop.f32.mrf.mxu0
    %v1427 = vadd.f32 %v1397, %v1426
    %1428 = vmatmul.f32.gmra.mxu0 %v1407
    %v1429 = vpop.f32.mrf.mxu0
    %v1430 = vadd.f32 %v1397, %v1429
    %1431 = vdwg.mxu0
    %v1432 = vmul.f32 %v1427, %v289
    %v1433 = vmul.f32 %v1430, %v290
    %v1434 = vmul.f32 %v1427, %v291
    %v1435 = vmul.f32 %v1430, %v292
    %v1436 = vmul.f32 %v1427, %v293
    %v1437 = vmul.f32 %v1430, %v294
    %v1438 = vmul.f32 %v1427, %v295
    %v1439 = vmul.f32 %v1430, %v296
    %v1440 = vmul.f32 %v1373, 0.35355338
    %v1441 = vmul.f32 %v1376, 0.35355338
    %v1442 = vmul.f32 %v1379, 0.35355338
    %v1443 = vmul.f32 %v1382, 0.35355338
    %v1444 = vmul.f32 %v1385, 0.35355338
    %v1445 = vmul.f32 %v1388, 0.35355338
    %v1446 = vmul.f32 %v1391, 0.35355338
    %v1447 = vmul.f32 %v1394, 0.35355338
    %v1449 = vsel %vm348, %v1440, 0
    %v1452 = vsel %vm348, %v1441, 0
    %v1455 = vsel %vm348, %v1442, 0
    %v1458 = vsel %vm348, %v1443, 0
    %v1461 = vsel %vm348, %v1444, 0
    %v1464 = vsel %vm348, %v1445, 0
    %v1467 = vsel %vm348, %v1446, 0
    %v1470 = vsel %vm348, %v1447, 0
    %v1473 = vsel %vm348, %v1432, 0
    %v1476 = vsel %vm348, %v1433, 0
    %v1479 = vsel %vm348, %v1434, 0
    %v1482 = vsel %vm348, %v1435, 0
    %v1485 = vsel %vm348, %v1436, 0
    %v1488 = vsel %vm348, %v1437, 0
    %v1491 = vsel %vm348, %v1438, 0
    %v1494 = vsel %vm348, %v1439, 0
    %1496 = vmatpush.xpose.msra.mxu0 0.0
    %1497 = vmatpush.xpose.msra.mxu0 0.0
    %1498 = vmatpush.xpose.msra.mxu0 0.0
    %1499 = vmatpush.xpose.msra.mxu0 0.0
    %1500 = vmatpush.xpose.msra.mxu0 0.0
    %1501 = vmatpush.xpose.msra.mxu0 0.0
    %1502 = vmatpush.xpose.msra.mxu0 0.0
    %1503 = vmatpush.xpose.msra.mxu0 0.0
    %1504 = vmatpush.xpose.msra.mxu0 %v1494
    %1505 = vmatpush.xpose.msra.mxu0 %v1491
    %1506 = vmatpush.xpose.msra.mxu0 %v1488
    %1507 = vmatpush.xpose.msra.mxu0 %v1485
    %1508 = vmatpush.xpose.msra.mxu0 %v1482
    %1509 = vmatpush.xpose.msra.mxu0 %v1479
    %1510 = vmatpush.xpose.msra.mxu0 %v1476
    %1511 = vmatpush.xpose.msra.mxu0 %v1473
    %1512 = vmatmul.f32.gmra.mxu0 %v1449
    %v1513 = vpop.f32.mrf.mxu0
    %v1514 = vadd.f32 0.0, %v1513
    %1515 = vmatmul.f32.gmra.mxu0 %v1452
    %v1516 = vpop.f32.mrf.mxu0
    %v1517 = vadd.f32 0.0, %v1516
    %1518 = vmatmul.f32.gmra.mxu0 %v1455
    %v1519 = vpop.f32.mrf.mxu0
    %v1520 = vadd.f32 0.0, %v1519
    %1521 = vmatmul.f32.gmra.mxu0 %v1458
    %v1522 = vpop.f32.mrf.mxu0
    %v1523 = vadd.f32 0.0, %v1522
    %1524 = vmatmul.f32.gmra.mxu0 %v1461
    %v1525 = vpop.f32.mrf.mxu0
    %v1526 = vadd.f32 0.0, %v1525
    %1527 = vmatmul.f32.gmra.mxu0 %v1464
    %v1528 = vpop.f32.mrf.mxu0
    %v1529 = vadd.f32 0.0, %v1528
    %1530 = vmatmul.f32.gmra.mxu0 %v1467
    %v1531 = vpop.f32.mrf.mxu0
    %v1532 = vadd.f32 0.0, %v1531
    %1533 = vmatmul.f32.gmra.mxu0 %v1470
    %v1534 = vpop.f32.mrf.mxu0
    %v1535 = vadd.f32 0.0, %v1534
    %1536 = vdwg.mxu0
    %v1537 = vsel %vm615, %v1514, -inf
    %1538 = vmax.xlane.f32.xlu0 %v1537
    %v1539 = vpop.xlane.xlu0 %1538
    %v1540 = vsel %vm615, %v1517, -inf
    %1541 = vmax.xlane.f32.xlu0 %v1540
    %v1542 = vpop.xlane.xlu0 %1541
    %v1543 = vsel %vm615, %v1520, -inf
    %1544 = vmax.xlane.f32.xlu0 %v1543
    %v1545 = vpop.xlane.xlu0 %1544
    %v1546 = vsel %vm615, %v1523, -inf
    %1547 = vmax.xlane.f32.xlu0 %v1546
    %v1548 = vpop.xlane.xlu0 %1547
    %v1549 = vsel %vm615, %v1526, -inf
    %1550 = vmax.xlane.f32.xlu0 %v1549
    %v1551 = vpop.xlane.xlu0 %1550
    %v1552 = vsel %vm615, %v1529, -inf
    %1553 = vmax.xlane.f32.xlu0 %v1552
    %v1554 = vpop.xlane.xlu0 %1553
    %v1555 = vsel %vm615, %v1532, -inf
    %1556 = vmax.xlane.f32.xlu0 %v1555
    %v1557 = vpop.xlane.xlu0 %1556
    %v1558 = vsel %vm615, %v1535, -inf
    %1559 = vmax.xlane.f32.xlu0 %v1558
    %v1560 = vpop.xlane.xlu0 %1559
    %v1561 = vsub.f32 %v1514, %v1539
    %v1562 = vsub.f32 %v1517, %v1542
    %v1563 = vsub.f32 %v1520, %v1545
    %v1564 = vsub.f32 %v1523, %v1548
    %v1565 = vsub.f32 %v1526, %v1551
    %v1566 = vsub.f32 %v1529, %v1554
    %v1567 = vsub.f32 %v1532, %v1557
    %v1568 = vsub.f32 %v1535, %v1560
    %v1569 = vmul.f32 %v1561, 1.442695
    %v1570 = vpow.pop %v1569
    %v1571 = vmul.f32 %v1562, 1.442695
    %v1572 = vpow.pop %v1571
    %v1573 = vmul.f32 %v1563, 1.442695
    %v1574 = vpow.pop %v1573
    %v1575 = vmul.f32 %v1564, 1.442695
    %v1576 = vpow.pop %v1575
    %v1577 = vmul.f32 %v1565, 1.442695
    %v1578 = vpow.pop %v1577
    %v1579 = vmul.f32 %v1566, 1.442695
    %v1580 = vpow.pop %v1579
    %v1581 = vmul.f32 %v1567, 1.442695
    %v1582 = vpow.pop %v1581
    %v1583 = vmul.f32 %v1568, 1.442695
    %v1584 = vpow.pop %v1583
    %v1586 = vsel %vm615, %v1570, 0
    %v1589 = vsel %vm615, %v1572, 0
    %v1592 = vsel %vm615, %v1574, 0
    %v1595 = vsel %vm615, %v1576, 0
    %v1598 = vsel %vm615, %v1578, 0
    %v1601 = vsel %vm615, %v1580, 0
    %v1604 = vsel %vm615, %v1582, 0
    %v1607 = vsel %vm615, %v1584, 0
    %1609 = vmatpush.msra.mxu0 0.0
    %1610 = vmatpush.msra.mxu0 0.0
    %1611 = vmatpush.msra.mxu0 0.0
    %1612 = vmatpush.msra.mxu0 0.0
    %1613 = vmatpush.msra.mxu0 0.0
    %1614 = vmatpush.msra.mxu0 0.0
    %1615 = vmatpush.msra.mxu0 0.0
    %1616 = vmatpush.msra.mxu0 0.0
    %1617 = vmatpush.msra.mxu0 %v304
    %1618 = vmatpush.msra.mxu0 %v303
    %1619 = vmatpush.msra.mxu0 %v302
    %1620 = vmatpush.msra.mxu0 %v301
    %1621 = vmatpush.msra.mxu0 %v300
    %1622 = vmatpush.msra.mxu0 %v299
    %1623 = vmatpush.msra.mxu0 %v298
    %1624 = vmatpush.msra.mxu0 %v297
    %1625 = vmatmul.f32.gmra.mxu0 %v1586
    %v1626 = vpop.f32.mrf.mxu0
    %v1627 = vadd.f32 0.0, %v1626
    %1628 = vmatmul.f32.gmra.mxu0 %v1589
    %v1629 = vpop.f32.mrf.mxu0
    %v1630 = vadd.f32 0.0, %v1629
    %1631 = vmatmul.f32.gmra.mxu0 %v1592
    %v1632 = vpop.f32.mrf.mxu0
    %v1633 = vadd.f32 0.0, %v1632
    %1634 = vmatmul.f32.gmra.mxu0 %v1595
    %v1635 = vpop.f32.mrf.mxu0
    %v1636 = vadd.f32 0.0, %v1635
    %1637 = vmatmul.f32.gmra.mxu0 %v1598
    %v1638 = vpop.f32.mrf.mxu0
    %v1639 = vadd.f32 0.0, %v1638
    %1640 = vmatmul.f32.gmra.mxu0 %v1601
    %v1641 = vpop.f32.mrf.mxu0
    %v1642 = vadd.f32 0.0, %v1641
    %1643 = vmatmul.f32.gmra.mxu0 %v1604
    %v1644 = vpop.f32.mrf.mxu0
    %v1645 = vadd.f32 0.0, %v1644
    %1646 = vmatmul.f32.gmra.mxu0 %v1607
    %v1647 = vpop.f32.mrf.mxu0
    %v1648 = vadd.f32 0.0, %v1647
    %1649 = vdwg.mxu0
    %v1650 = vrcp.pop %v1627
    %v1651 = vmul.f32 %v1627, %v1650
    %v1652 = vsub.f32 1.0, %v1651
    %v1653 = vmul.f32 %v1650, %v1652
    %v1654 = vadd.f32 %v1650, %v1653
    %vm1655 = vweird.f32 %v1627
    %vm1656 = vweird.f32 %v1650
    %vm1657 = vmor %vm1655, %vm1656
    %v1658 = vsel %vm1657, %v1650, %v1654
    %v1659 = vand.u32 2147483647, %v1627
    %vm1660 = vcmp.eq.f32.partialorder %v1659, 8.507059e+37
    %v1661 = vand.u32 %v1627, 2147483648
    %v1662 = vor.u32 1.1754944e-38, %v1661
    %v1663 = vsel %vm1660, %v1662, %v1658
    %v1664 = vmul.f32 %v1570, %v1663
    %v1665 = vrcp.pop %v1630
    %v1666 = vmul.f32 %v1630, %v1665
    %v1667 = vsub.f32 1.0, %v1666
    %v1668 = vmul.f32 %v1665, %v1667
    %v1669 = vadd.f32 %v1665, %v1668
    %vm1670 = vweird.f32 %v1630
    %vm1671 = vweird.f32 %v1665
    %vm1672 = vmor %vm1670, %vm1671
    %v1673 = vsel %vm1672, %v1665, %v1669
    %v1674 = vand.u32 2147483647, %v1630
    %vm1675 = vcmp.eq.f32.partialorder %v1674, 8.507059e+37
    %v1676 = vand.u32 %v1630, 2147483648
    %v1677 = vor.u32 1.1754944e-38, %v1676
    %v1678 = vsel %vm1675, %v1677, %v1673
    %v1679 = vmul.f32 %v1572, %v1678
    %v1680 = vrcp.pop %v1633
    %v1681 = vmul.f32 %v1633, %v1680
    %v1682 = vsub.f32 1.0, %v1681
    %v1683 = vmul.f32 %v1680, %v1682
    %v1684 = vadd.f32 %v1680, %v1683
    %vm1685 = vweird.f32 %v1633
    %vm1686 = vweird.f32 %v1680
    %vm1687 = vmor %vm1685, %vm1686
    %v1688 = vsel %vm1687, %v1680, %v1684
    %v1689 = vand.u32 2147483647, %v1633
    %vm1690 = vcmp.eq.f32.partialorder %v1689, 8.507059e+37
    %v1691 = vand.u32 %v1633, 2147483648
    %v1692 = vor.u32 1.1754944e-38, %v1691
    %v1693 = vsel %vm1690, %v1692, %v1688
    %v1694 = vmul.f32 %v1574, %v1693
    %v1695 = vrcp.pop %v1636
    %v1696 = vmul.f32 %v1636, %v1695
    %v1697 = vsub.f32 1.0, %v1696
    %v1698 = vmul.f32 %v1695, %v1697
    %v1699 = vadd.f32 %v1695, %v1698
    %vm1700 = vweird.f32 %v1636
    %vm1701 = vweird.f32 %v1695
    %vm1702 = vmor %vm1700, %vm1701
    %v1703 = vsel %vm1702, %v1695, %v1699
    %v1704 = vand.u32 2147483647, %v1636
    %vm1705 = vcmp.eq.f32.partialorder %v1704, 8.507059e+37
    %v1706 = vand.u32 %v1636, 2147483648
    %v1707 = vor.u32 1.1754944e-38, %v1706
    %v1708 = vsel %vm1705, %v1707, %v1703
    %v1709 = vmul.f32 %v1576, %v1708
    %v1710 = vrcp.pop %v1639
    %v1711 = vmul.f32 %v1639, %v1710
    %v1712 = vsub.f32 1.0, %v1711
    %v1713 = vmul.f32 %v1710, %v1712
    %v1714 = vadd.f32 %v1710, %v1713
    %vm1715 = vweird.f32 %v1639
    %vm1716 = vweird.f32 %v1710
    %vm1717 = vmor %vm1715, %vm1716
    %v1718 = vsel %vm1717, %v1710, %v1714
    %v1719 = vand.u32 2147483647, %v1639
    %vm1720 = vcmp.eq.f32.partialorder %v1719, 8.507059e+37
    %v1721 = vand.u32 %v1639, 2147483648
    %v1722 = vor.u32 1.1754944e-38, %v1721
    %v1723 = vsel %vm1720, %v1722, %v1718
    %v1724 = vmul.f32 %v1578, %v1723
    %v1725 = vrcp.pop %v1642
    %v1726 = vmul.f32 %v1642, %v1725
    %v1727 = vsub.f32 1.0, %v1726
    %v1728 = vmul.f32 %v1725, %v1727
    %v1729 = vadd.f32 %v1725, %v1728
    %vm1730 = vweird.f32 %v1642
    %vm1731 = vweird.f32 %v1725
    %vm1732 = vmor %vm1730, %vm1731
    %v1733 = vsel %vm1732, %v1725, %v1729
    %v1734 = vand.u32 2147483647, %v1642
    %vm1735 = vcmp.eq.f32.partialorder %v1734, 8.507059e+37
    %v1736 = vand.u32 %v1642, 2147483648
    %v1737 = vor.u32 1.1754944e-38, %v1736
    %v1738 = vsel %vm1735, %v1737, %v1733
    %v1739 = vmul.f32 %v1580, %v1738
    %v1740 = vrcp.pop %v1645
    %v1741 = vmul.f32 %v1645, %v1740
    %v1742 = vsub.f32 1.0, %v1741
    %v1743 = vmul.f32 %v1740, %v1742
    %v1744 = vadd.f32 %v1740, %v1743
    %vm1745 = vweird.f32 %v1645
    %vm1746 = vweird.f32 %v1740
    %vm1747 = vmor %vm1745, %vm1746
    %v1748 = vsel %vm1747, %v1740, %v1744
    %v1749 = vand.u32 2147483647, %v1645
    %vm1750 = vcmp.eq.f32.partialorder %v1749, 8.507059e+37
    %v1751 = vand.u32 %v1645, 2147483648
    %v1752 = vor.u32 1.1754944e-38, %v1751
    %v1753 = vsel %vm1750, %v1752, %v1748
    %v1754 = vmul.f32 %v1582, %v1753
    %v1755 = vrcp.pop %v1648
    %v1756 = vmul.f32 %v1648, %v1755
    %v1757 = vsub.f32 1.0, %v1756
    %v1758 = vmul.f32 %v1755, %v1757
    %v1759 = vadd.f32 %v1755, %v1758
    %vm1760 = vweird.f32 %v1648
    %vm1761 = vweird.f32 %v1755
    %vm1762 = vmor %vm1760, %vm1761
    %v1763 = vsel %vm1762, %v1755, %v1759
    %v1764 = vand.u32 2147483647, %v1648
    %vm1765 = vcmp.eq.f32.partialorder %v1764, 8.507059e+37
    %v1766 = vand.u32 %v1648, 2147483648
    %v1767 = vor.u32 1.1754944e-38, %v1766
    %v1768 = vsel %vm1765, %v1767, %v1763
    %v1769 = vmul.f32 %v1584, %v1768
    %1770 = vrot.lane.b32.xlu0 %v1432, 96
    %v1771 = vpop.permute.xlu0 %1770
    %1772 = vrot.lane.b32.xlu0 %v1433, 96
    %v1773 = vpop.permute.xlu0 %1772
    %1774 = vrot.lane.b32.xlu0 %v1434, 96
    %v1775 = vpop.permute.xlu0 %1774
    %1776 = vrot.lane.b32.xlu0 %v1435, 96
    %v1777 = vpop.permute.xlu0 %1776
    %1778 = vrot.lane.b32.xlu0 %v1436, 96
    %v1779 = vpop.permute.xlu0 %1778
    %1780 = vrot.lane.b32.xlu0 %v1437, 96
    %v1781 = vpop.permute.xlu0 %1780
    %1782 = vrot.lane.b32.xlu0 %v1438, 96
    %v1783 = vpop.permute.xlu0 %1782
    %1784 = vrot.lane.b32.xlu0 %v1439, 96
    %v1785 = vpop.permute.xlu0 %1784
    %v1795 = vsel %vm615, %v1664, 0
    %v1798 = vsel %vm615, %v1679, 0
    %v1801 = vsel %vm615, %v1694, 0
    %v1804 = vsel %vm615, %v1709, 0
    %v1807 = vsel %vm615, %v1724, 0
    %v1810 = vsel %vm615, %v1739, 0
    %v1813 = vsel %vm615, %v1754, 0
    %v1816 = vsel %vm615, %v1769, 0
    %1818 = vmatpush.msra.mxu0 0.0
    %1819 = vmatpush.msra.mxu0 0.0
    %1820 = vmatpush.msra.mxu0 0.0
    %1821 = vmatpush.msra.mxu0 0.0
    %1822 = vmatpush.msra.mxu0 0.0
    %1823 = vmatpush.msra.mxu0 0.0
    %1824 = vmatpush.msra.mxu0 0.0
    %1825 = vmatpush.msra.mxu0 0.0
    %1826 = vmatpush.msra.mxu0 %v1785
    %1827 = vmatpush.msra.mxu0 %v1783
    %1828 = vmatpush.msra.mxu0 %v1781
    %1829 = vmatpush.msra.mxu0 %v1779
    %1830 = vmatpush.msra.mxu0 %v1777
    %1831 = vmatpush.msra.mxu0 %v1775
    %1832 = vmatpush.msra.mxu0 %v1773
    %1833 = vmatpush.msra.mxu0 %v1771
    %1834 = vmatmul.f32.gmra.mxu0 %v1795
    %v1835 = vpop.f32.mrf.mxu0
    %v1836 = vadd.f32 0.0, %v1835
    %1837 = vmatmul.f32.gmra.mxu0 %v1798
    %v1838 = vpop.f32.mrf.mxu0
    %v1839 = vadd.f32 0.0, %v1838
    %1840 = vmatmul.f32.gmra.mxu0 %v1801
    %v1841 = vpop.f32.mrf.mxu0
    %v1842 = vadd.f32 0.0, %v1841
    %1843 = vmatmul.f32.gmra.mxu0 %v1804
    %v1844 = vpop.f32.mrf.mxu0
    %v1845 = vadd.f32 0.0, %v1844
    %1846 = vmatmul.f32.gmra.mxu0 %v1807
    %v1847 = vpop.f32.mrf.mxu0
    %v1848 = vadd.f32 0.0, %v1847
    %1849 = vmatmul.f32.gmra.mxu0 %v1810
    %v1850 = vpop.f32.mrf.mxu0
    %v1851 = vadd.f32 0.0, %v1850
    %1852 = vmatmul.f32.gmra.mxu0 %v1813
    %v1853 = vpop.f32.mrf.mxu0
    %v1854 = vadd.f32 0.0, %v1853
    %1855 = vmatmul.f32.gmra.mxu0 %v1816
    %v1856 = vpop.f32.mrf.mxu0
    %v1857 = vadd.f32 0.0, %v1856
    %1858 = vdwg.mxu0
    %v1859 = vadd.f32 %v340, %v1836
    %v1860 = vadd.f32 %v341, %v1839
    %v1861 = vadd.f32 %v342, %v1842
    %v1862 = vadd.f32 %v343, %v1845
    %v1863 = vadd.f32 %v344, %v1848
    %v1864 = vadd.f32 %v345, %v1851
    %v1865 = vadd.f32 %v346, %v1854
    %v1866 = vadd.f32 %v347, %v1857
    %v1867 = vsel %vm348, %v1859, 0.0
    %1868 = vadd.xlane.f32.xlu0 %v1867
    %v1869 = vpop.xlane.xlu0 %1868
    %v1870 = vsel %vm348, %v1860, 0.0
    %1871 = vadd.xlane.f32.xlu0 %v1870
    %v1872 = vpop.xlane.xlu0 %1871
    %v1873 = vsel %vm348, %v1861, 0.0
    %1874 = vadd.xlane.f32.xlu0 %v1873
    %v1875 = vpop.xlane.xlu0 %1874
    %v1876 = vsel %vm348, %v1862, 0.0
    %1877 = vadd.xlane.f32.xlu0 %v1876
    %v1878 = vpop.xlane.xlu0 %1877
    %v1879 = vsel %vm348, %v1863, 0.0
    %1880 = vadd.xlane.f32.xlu0 %v1879
    %v1881 = vpop.xlane.xlu0 %1880
    %v1882 = vsel %vm348, %v1864, 0.0
    %1883 = vadd.xlane.f32.xlu0 %v1882
    %v1884 = vpop.xlane.xlu0 %1883
    %v1885 = vsel %vm348, %v1865, 0.0
    %1886 = vadd.xlane.f32.xlu0 %v1885
    %v1887 = vpop.xlane.xlu0 %1886
    %v1888 = vsel %vm348, %v1866, 0.0
    %1889 = vadd.xlane.f32.xlu0 %v1888
    %v1890 = vpop.xlane.xlu0 %1889
    %v1891 = vmul.f32 %v1869, %v379
    %v1892 = vmul.f32 %v1872, %v379
    %v1893 = vmul.f32 %v1875, %v379
    %v1894 = vmul.f32 %v1878, %v379
    %v1895 = vmul.f32 %v1881, %v379
    %v1896 = vmul.f32 %v1884, %v379
    %v1897 = vmul.f32 %v1887, %v379
    %v1898 = vmul.f32 %v1890, %v379
    %v1899 = vsub.f32 %v1859, %v1891
    %v1900 = vsub.f32 %v1860, %v1892
    %v1901 = vsub.f32 %v1861, %v1893
    %v1902 = vsub.f32 %v1862, %v1894
    %v1903 = vsub.f32 %v1863, %v1895
    %v1904 = vsub.f32 %v1864, %v1896
    %v1905 = vsub.f32 %v1865, %v1897
    %v1906 = vsub.f32 %v1866, %v1898
    %v1907 = vmul.f32 %v1899, %v1899
    %v1908 = vmul.f32 %v1900, %v1900
    %v1909 = vmul.f32 %v1901, %v1901
    %v1910 = vmul.f32 %v1902, %v1902
    %v1911 = vmul.f32 %v1903, %v1903
    %v1912 = vmul.f32 %v1904, %v1904
    %v1913 = vmul.f32 %v1905, %v1905
    %v1914 = vmul.f32 %v1906, %v1906
    %v1915 = vsel %vm348, %v1907, 0.0
    %1916 = vadd.xlane.f32.xlu0 %v1915
    %v1917 = vpop.xlane.xlu0 %1916
    %v1918 = vsel %vm348, %v1908, 0.0
    %1919 = vadd.xlane.f32.xlu0 %v1918
    %v1920 = vpop.xlane.xlu0 %1919
    %v1921 = vsel %vm348, %v1909, 0.0
    %1922 = vadd.xlane.f32.xlu0 %v1921
    %v1923 = vpop.xlane.xlu0 %1922
    %v1924 = vsel %vm348, %v1910, 0.0
    %1925 = vadd.xlane.f32.xlu0 %v1924
    %v1926 = vpop.xlane.xlu0 %1925
    %v1927 = vsel %vm348, %v1911, 0.0
    %1928 = vadd.xlane.f32.xlu0 %v1927
    %v1929 = vpop.xlane.xlu0 %1928
    %v1930 = vsel %vm348, %v1912, 0.0
    %1931 = vadd.xlane.f32.xlu0 %v1930
    %v1932 = vpop.xlane.xlu0 %1931
    %v1933 = vsel %vm348, %v1913, 0.0
    %1934 = vadd.xlane.f32.xlu0 %v1933
    %v1935 = vpop.xlane.xlu0 %1934
    %v1936 = vsel %vm348, %v1914, 0.0
    %1937 = vadd.xlane.f32.xlu0 %v1936
    %v1938 = vpop.xlane.xlu0 %1937
    %v1939 = vmul.f32 %v1917, %v379
    %v1940 = vmul.f32 %v1920, %v379
    %v1941 = vmul.f32 %v1923, %v379
    %v1942 = vmul.f32 %v1926, %v379
    %v1943 = vmul.f32 %v1929, %v379
    %v1944 = vmul.f32 %v1932, %v379
    %v1945 = vmul.f32 %v1935, %v379
    %v1946 = vmul.f32 %v1938, %v379
    %v1947 = vadd.f32 %v1939, 1e-05
    %v1948 = vadd.f32 %v1940, 1e-05
    %v1949 = vadd.f32 %v1941, 1e-05
    %v1950 = vadd.f32 %v1942, 1e-05
    %v1951 = vadd.f32 %v1943, 1e-05
    %v1952 = vadd.f32 %v1944, 1e-05
    %v1953 = vadd.f32 %v1945, 1e-05
    %v1954 = vadd.f32 %v1946, 1e-05
    %v1955 = vrsqrt.pop %v1947
    %v1956 = vmul.f32 %v1955, %v1947
    %v1957 = vmul.f32 %v1956, %v1955
    %v1958 = vmul.f32 0.5, %v1957
    %v1959 = vsub.f32 1.5, %v1958
    %v1960 = vmul.f32 %v1955, %v1959
    %vm1961 = vweird.f32 %v1947
    %vm1962 = vweird.f32 %v1955
    %vm1963 = vmor %vm1961, %vm1962
    %v1964 = vsel %vm1963, %v1955, %v1960
    %v1965 = vrsqrt.pop %v1948
    %v1966 = vmul.f32 %v1965, %v1948
    %v1967 = vmul.f32 %v1966, %v1965
    %v1968 = vmul.f32 0.5, %v1967
    %v1969 = vsub.f32 1.5, %v1968
    %v1970 = vmul.f32 %v1965, %v1969
    %vm1971 = vweird.f32 %v1948
    %vm1972 = vweird.f32 %v1965
    %vm1973 = vmor %vm1971, %vm1972
    %v1974 = vsel %vm1973, %v1965, %v1970
    %v1975 = vrsqrt.pop %v1949
    %v1976 = vmul.f32 %v1975, %v1949
    %v1977 = vmul.f32 %v1976, %v1975
    %v1978 = vmul.f32 0.5, %v1977
    %v1979 = vsub.f32 1.5, %v1978
    %v1980 = vmul.f32 %v1975, %v1979
    %vm1981 = vweird.f32 %v1949
    %vm1982 = vweird.f32 %v1975
    %vm1983 = vmor %vm1981, %vm1982
    %v1984 = vsel %vm1983, %v1975, %v1980
    %v1985 = vrsqrt.pop %v1950
    %v1986 = vmul.f32 %v1985, %v1950
    %v1987 = vmul.f32 %v1986, %v1985
    %v1988 = vmul.f32 0.5, %v1987
    %v1989 = vsub.f32 1.5, %v1988
    %v1990 = vmul.f32 %v1985, %v1989
    %vm1991 = vweird.f32 %v1950
    %vm1992 = vweird.f32 %v1985
    %vm1993 = vmor %vm1991, %vm1992
    %v1994 = vsel %vm1993, %v1985, %v1990
    %v1995 = vrsqrt.pop %v1951
    %v1996 = vmul.f32 %v1995, %v1951
    %v1997 = vmul.f32 %v1996, %v1995
    %v1998 = vmul.f32 0.5, %v1997
    %v1999 = vsub.f32 1.5, %v1998
    %v2000 = vmul.f32 %v1995, %v1999
    %vm2001 = vweird.f32 %v1951
    %vm2002 = vweird.f32 %v1995
    %vm2003 = vmor %vm2001, %vm2002
    %v2004 = vsel %vm2003, %v1995, %v2000
    %v2005 = vrsqrt.pop %v1952
    %v2006 = vmul.f32 %v2005, %v1952
    %v2007 = vmul.f32 %v2006, %v2005
    %v2008 = vmul.f32 0.5, %v2007
    %v2009 = vsub.f32 1.5, %v2008
    %v2010 = vmul.f32 %v2005, %v2009
    %vm2011 = vweird.f32 %v1952
    %vm2012 = vweird.f32 %v2005
    %vm2013 = vmor %vm2011, %vm2012
    %v2014 = vsel %vm2013, %v2005, %v2010
    %v2015 = vrsqrt.pop %v1953
    %v2016 = vmul.f32 %v2015, %v1953
    %v2017 = vmul.f32 %v2016, %v2015
    %v2018 = vmul.f32 0.5, %v2017
    %v2019 = vsub.f32 1.5, %v2018
    %v2020 = vmul.f32 %v2015, %v2019
    %vm2021 = vweird.f32 %v1953
    %vm2022 = vweird.f32 %v2015
    %vm2023 = vmor %vm2021, %vm2022
    %v2024 = vsel %vm2023, %v2015, %v2020
    %v2025 = vrsqrt.pop %v1954
    %v2026 = vmul.f32 %v2025, %v1954
    %v2027 = vmul.f32 %v2026, %v2025
    %v2028 = vmul.f32 0.5, %v2027
    %v2029 = vsub.f32 1.5, %v2028
    %v2030 = vmul.f32 %v2025, %v2029
    %vm2031 = vweird.f32 %v1954
    %vm2032 = vweird.f32 %v2025
    %vm2033 = vmor %vm2031, %vm2032
    %v2034 = vsel %vm2033, %v2025, %v2030
    %v2035 = vmul.f32 %v1899, %v1964
    %v2036 = vmul.f32 %v1900, %v1974
    %v2037 = vmul.f32 %v1901, %v1984
    %v2038 = vmul.f32 %v1902, %v1994
    %v2039 = vmul.f32 %v1903, %v2004
    %v2040 = vmul.f32 %v1904, %v2014
    %v2041 = vmul.f32 %v1905, %v2024
    %v2042 = vmul.f32 %v1906, %v2034
    %v2043 = vperm.slane %v325, 0
    %v2044 = vmul.f32 %v2035, %v2043
    %v2045 = vmul.f32 %v2036, %v2043
    %v2046 = vmul.f32 %v2037, %v2043
    %v2047 = vmul.f32 %v2038, %v2043
    %v2048 = vmul.f32 %v2039, %v2043
    %v2049 = vmul.f32 %v2040, %v2043
    %v2050 = vmul.f32 %v2041, %v2043
    %v2051 = vmul.f32 %v2042, %v2043
    %v2052 = vperm.slane %v325, 1
    %v2053 = vadd.f32 %v2044, %v2052
    %v2054 = vadd.f32 %v2045, %v2052
    %v2055 = vadd.f32 %v2046, %v2052
    %v2056 = vadd.f32 %v2047, %v2052
    %v2057 = vadd.f32 %v2048, %v2052
    %v2058 = vadd.f32 %v2049, %v2052
    %v2059 = vadd.f32 %v2050, %v2052
    %v2060 = vadd.f32 %v2051, %v2052
    %v2062 = vperm.slane %v330, 0
    %v2065 = vsel %vm348, %v2053, 0
    %v2068 = vsel %vm348, %v2054, 0
    %v2071 = vsel %vm348, %v2055, 0
    %v2074 = vsel %vm348, %v2056, 0
    %v2077 = vsel %vm348, %v2057, 0
    %v2080 = vsel %vm348, %v2058, 0
    %v2083 = vsel %vm348, %v2059, 0
    %v2086 = vsel %vm348, %v2060, 0
    %2088 = vmatpush.msra.mxu0 0.0
    %2089 = vmatpush.msra.mxu0 0.0
    %2090 = vmatpush.msra.mxu0 0.0
    %2091 = vmatpush.msra.mxu0 0.0
    %2092 = vmatpush.msra.mxu0 0.0
    %2093 = vmatpush.msra.mxu0 0.0
    %2094 = vmatpush.msra.mxu0 0.0
    %2095 = vmatpush.msra.mxu0 0.0
    %2096 = vmatpush.msra.mxu0 0.0
    %2097 = vmatpush.msra.mxu0 0.0
    %2098 = vmatpush.msra.mxu0 0.0
    %2099 = vmatpush.msra.mxu0 0.0
    %2100 = vmatpush.msra.mxu0 %v329
    %2101 = vmatpush.msra.mxu0 %v328
    %2102 = vmatpush.msra.mxu0 %v327
    %2103 = vmatpush.msra.mxu0 %v326
    %2104 = vmatmul.f32.gmra.mxu0 %v2065
    %v2105 = vpop.f32.mrf.mxu0
    %v2106 = vadd.f32 %v2062, %v2105
    %2107 = vmatmul.f32.gmra.mxu0 %v2068
    %v2108 = vpop.f32.mrf.mxu0
    %v2109 = vadd.f32 %v2062, %v2108
    %2110 = vmatmul.f32.gmra.mxu0 %v2071
    %v2111 = vpop.f32.mrf.mxu0
    %v2112 = vadd.f32 %v2062, %v2111
    %2113 = vmatmul.f32.gmra.mxu0 %v2074
    %v2114 = vpop.f32.mrf.mxu0
    %v2115 = vadd.f32 %v2062, %v2114
    %2116 = vmatmul.f32.gmra.mxu0 %v2077
    %v2117 = vpop.f32.mrf.mxu0
    %v2118 = vadd.f32 %v2062, %v2117
    %2119 = vmatmul.f32.gmra.mxu0 %v2080
    %v2120 = vpop.f32.mrf.mxu0
    %v2121 = vadd.f32 %v2062, %v2120
    %2122 = vmatmul.f32.gmra.mxu0 %v2083
    %v2123 = vpop.f32.mrf.mxu0
    %v2124 = vadd.f32 %v2062, %v2123
    %2125 = vmatmul.f32.gmra.mxu0 %v2086
    %v2126 = vpop.f32.mrf.mxu0
    %v2127 = vadd.f32 %v2062, %v2126
    %2128 = vdwg.mxu0
    %v2129 = vmul.f32 %v2106, 0.5
    %v2130 = vmul.f32 %v2109, 0.5
    %v2131 = vmul.f32 %v2112, 0.5
    %v2132 = vmul.f32 %v2115, 0.5
    %v2133 = vmul.f32 %v2118, 0.5
    %v2134 = vmul.f32 %v2121, 0.5
    %v2135 = vmul.f32 %v2124, 0.5
    %v2136 = vmul.f32 %v2127, 0.5
    %v2137 = vmul.f32 %v2106, 0.70710677
    %v2138 = vmul.f32 %v2109, 0.70710677
    %v2139 = vmul.f32 %v2112, 0.70710677
    %v2140 = vmul.f32 %v2115, 0.70710677
    %v2141 = vmul.f32 %v2118, 0.70710677
    %v2142 = vmul.f32 %v2121, 0.70710677
    %v2143 = vmul.f32 %v2124, 0.70710677
    %v2144 = vmul.f32 %v2127, 0.70710677
    %vm2145 = vcmp.ge.f32.partialorder %v2137, 0.0
    %vm2146 = vcmp.ge.f32.partialorder %v2138, 0.0
    %vm2147 = vcmp.ge.f32.partialorder %v2139, 0.0
    %vm2148 = vcmp.ge.f32.partialorder %v2140, 0.0
    %vm2149 = vcmp.ge.f32.partialorder %v2141, 0.0
    %vm2150 = vcmp.ge.f32.partialorder %v2142, 0.0
    %vm2151 = vcmp.ge.f32.partialorder %v2143, 0.0
    %vm2152 = vcmp.ge.f32.partialorder %v2144, 0.0
    %v2153 = vsel %vm2145, 1.0, -1.0
    %v2154 = vsel %vm2146, 1.0, -1.0
    %v2155 = vsel %vm2147, 1.0, -1.0
    %v2156 = vsel %vm2148, 1.0, -1.0
    %v2157 = vsel %vm2149, 1.0, -1.0
    %v2158 = vsel %vm2150, 1.0, -1.0
    %v2159 = vsel %vm2151, 1.0, -1.0
    %v2160 = vsel %vm2152, 1.0, -1.0
    %v2161 = vand.u32 2147483647, %v2137
    %v2162 = vand.u32 2147483647, %v2138
    %v2163 = vand.u32 2147483647, %v2139
    %v2164 = vand.u32 2147483647, %v2140
    %v2165 = vand.u32 2147483647, %v2141
    %v2166 = vand.u32 2147483647, %v2142
    %v2167 = vand.u32 2147483647, %v2143
    %v2168 = vand.u32 2147483647, %v2144
    %v2169 = vmul.f32 %v2161, 0.3275911
    %v2170 = vmul.f32 %v2162, 0.3275911
    %v2171 = vmul.f32 %v2163, 0.3275911
    %v2172 = vmul.f32 %v2164, 0.3275911
    %v2173 = vmul.f32 %v2165, 0.3275911
    %v2174 = vmul.f32 %v2166, 0.3275911
    %v2175 = vmul.f32 %v2167, 0.3275911
    %v2176 = vmul.f32 %v2168, 0.3275911
    %v2177 = vadd.f32 %v2169, 1.0
    %v2178 = vadd.f32 %v2170, 1.0
    %v2179 = vadd.f32 %v2171, 1.0
    %v2180 = vadd.f32 %v2172, 1.0
    %v2181 = vadd.f32 %v2173, 1.0
    %v2182 = vadd.f32 %v2174, 1.0
    %v2183 = vadd.f32 %v2175, 1.0
    %v2184 = vadd.f32 %v2176, 1.0
    %v2185 = vrcp.pop %v2177
    %v2186 = vmul.f32 %v2177, %v2185
    %v2187 = vsub.f32 1.0, %v2186
    %v2188 = vmul.f32 %v2185, %v2187
    %v2189 = vadd.f32 %v2185, %v2188
    %vm2190 = vweird.f32 %v2177
    %vm2191 = vweird.f32 %v2185
    %vm2192 = vmor %vm2190, %vm2191
    %v2193 = vsel %vm2192, %v2185, %v2189
    %v2194 = vand.u32 2147483647, %v2177
    %vm2195 = vcmp.eq.f32.partialorder %v2194, 8.507059e+37
    %v2196 = vand.u32 %v2177, 2147483648
    %v2197 = vor.u32 1.1754944e-38, %v2196
    %v2198 = vsel %vm2195, %v2197, %v2193
    %v2199 = vmul.f32 1.0, %v2198
    %v2200 = vrcp.pop %v2178
    %v2201 = vmul.f32 %v2178, %v2200
    %v2202 = vsub.f32 1.0, %v2201
    %v2203 = vmul.f32 %v2200, %v2202
    %v2204 = vadd.f32 %v2200, %v2203
    %vm2205 = vweird.f32 %v2178
    %vm2206 = vweird.f32 %v2200
    %vm2207 = vmor %vm2205, %vm2206
    %v2208 = vsel %vm2207, %v2200, %v2204
    %v2209 = vand.u32 2147483647, %v2178
    %vm2210 = vcmp.eq.f32.partialorder %v2209, 8.507059e+37
    %v2211 = vand.u32 %v2178, 2147483648
    %v2212 = vor.u32 1.1754944e-38, %v2211
    %v2213 = vsel %vm2210, %v2212, %v2208
    %v2214 = vmul.f32 1.0, %v2213
    %v2215 = vrcp.pop %v2179
    %v2216 = vmul.f32 %v2179, %v2215
    %v2217 = vsub.f32 1.0, %v2216
    %v2218 = vmul.f32 %v2215, %v2217
    %v2219 = vadd.f32 %v2215, %v2218
    %vm2220 = vweird.f32 %v2179
    %vm2221 = vweird.f32 %v2215
    %vm2222 = vmor %vm2220, %vm2221
    %v2223 = vsel %vm2222, %v2215, %v2219
    %v2224 = vand.u32 2147483647, %v2179
    %vm2225 = vcmp.eq.f32.partialorder %v2224, 8.507059e+37
    %v2226 = vand.u32 %v2179, 2147483648
    %v2227 = vor.u32 1.1754944e-38, %v2226
    %v2228 = vsel %vm2225, %v2227, %v2223
    %v2229 = vmul.f32 1.0, %v2228
    %v2230 = vrcp.pop %v2180
    %v2231 = vmul.f32 %v2180, %v2230
    %v2232 = vsub.f32 1.0, %v2231
    %v2233 = vmul.f32 %v2230, %v2232
    %v2234 = vadd.f32 %v2230, %v2233
    %vm2235 = vweird.f32 %v2180
    %vm2236 = vweird.f32 %v2230
    %vm2237 = vmor %vm2235, %vm2236
    %v2238 = vsel %vm2237, %v2230, %v2234
    %v2239 = vand.u32 2147483647, %v2180
    %vm2240 = vcmp.eq.f32.partialorder %v2239, 8.507059e+37
    %v2241 = vand.u32 %v2180, 2147483648
    %v2242 = vor.u32 1.1754944e-38, %v2241
    %v2243 = vsel %vm2240, %v2242, %v2238
    %v2244 = vmul.f32 1.0, %v2243
    %v2245 = vrcp.pop %v2181
    %v2246 = vmul.f32 %v2181, %v2245
    %v2247 = vsub.f32 1.0, %v2246
    %v2248 = vmul.f32 %v2245, %v2247
    %v2249 = vadd.f32 %v2245, %v2248
    %vm2250 = vweird.f32 %v2181
    %vm2251 = vweird.f32 %v2245
    %vm2252 = vmor %vm2250, %vm2251
    %v2253 = vsel %vm2252, %v2245, %v2249
    %v2254 = vand.u32 2147483647, %v2181
    %vm2255 = vcmp.eq.f32.partialorder %v2254, 8.507059e+37
    %v2256 = vand.u32 %v2181, 2147483648
    %v2257 = vor.u32 1.1754944e-38, %v2256
    %v2258 = vsel %vm2255, %v2257, %v2253
    %v2259 = vmul.f32 1.0, %v2258
    %v2260 = vrcp.pop %v2182
    %v2261 = vmul.f32 %v2182, %v2260
    %v2262 = vsub.f32 1.0, %v2261
    %v2263 = vmul.f32 %v2260, %v2262
    %v2264 = vadd.f32 %v2260, %v2263
    %vm2265 = vweird.f32 %v2182
    %vm2266 = vweird.f32 %v2260
    %vm2267 = vmor %vm2265, %vm2266
    %v2268 = vsel %vm2267, %v2260, %v2264
    %v2269 = vand.u32 2147483647, %v2182
    %vm2270 = vcmp.eq.f32.partialorder %v2269, 8.507059e+37
    %v2271 = vand.u32 %v2182, 2147483648
    %v2272 = vor.u32 1.1754944e-38, %v2271
    %v2273 = vsel %vm2270, %v2272, %v2268
    %v2274 = vmul.f32 1.0, %v2273
    %v2275 = vrcp.pop %v2183
    %v2276 = vmul.f32 %v2183, %v2275
    %v2277 = vsub.f32 1.0, %v2276
    %v2278 = vmul.f32 %v2275, %v2277
    %v2279 = vadd.f32 %v2275, %v2278
    %vm2280 = vweird.f32 %v2183
    %vm2281 = vweird.f32 %v2275
    %vm2282 = vmor %vm2280, %vm2281
    %v2283 = vsel %vm2282, %v2275, %v2279
    %v2284 = vand.u32 2147483647, %v2183
    %vm2285 = vcmp.eq.f32.partialorder %v2284, 8.507059e+37
    %v2286 = vand.u32 %v2183, 2147483648
    %v2287 = vor.u32 1.1754944e-38, %v2286
    %v2288 = vsel %vm2285, %v2287, %v2283
    %v2289 = vmul.f32 1.0, %v2288
    %v2290 = vrcp.pop %v2184
    %v2291 = vmul.f32 %v2184, %v2290
    %v2292 = vsub.f32 1.0, %v2291
    %v2293 = vmul.f32 %v2290, %v2292
    %v2294 = vadd.f32 %v2290, %v2293
    %vm2295 = vweird.f32 %v2184
    %vm2296 = vweird.f32 %v2290
    %vm2297 = vmor %vm2295, %vm2296
    %v2298 = vsel %vm2297, %v2290, %v2294
    %v2299 = vand.u32 2147483647, %v2184
    %vm2300 = vcmp.eq.f32.partialorder %v2299, 8.507059e+37
    %v2301 = vand.u32 %v2184, 2147483648
    %v2302 = vor.u32 1.1754944e-38, %v2301
    %v2303 = vsel %vm2300, %v2302, %v2298
    %v2304 = vmul.f32 1.0, %v2303
    %v2305 = vmul.f32 %v2199, 1.0614054
    %v2306 = vmul.f32 %v2214, 1.0614054
    %v2307 = vmul.f32 %v2229, 1.0614054
    %v2308 = vmul.f32 %v2244, 1.0614054
    %v2309 = vmul.f32 %v2259, 1.0614054
    %v2310 = vmul.f32 %v2274, 1.0614054
    %v2311 = vmul.f32 %v2289, 1.0614054
    %v2312 = vmul.f32 %v2304, 1.0614054
    %v2313 = vadd.f32 %v2305, -1.4531521
    %v2314 = vadd.f32 %v2306, -1.4531521
    %v2315 = vadd.f32 %v2307, -1.4531521
    %v2316 = vadd.f32 %v2308, -1.4531521
    %v2317 = vadd.f32 %v2309, -1.4531521
    %v2318 = vadd.f32 %v2310, -1.4531521
    %v2319 = vadd.f32 %v2311, -1.4531521
    %v2320 = vadd.f32 %v2312, -1.4531521
    %v2321 = vmul.f32 %v2313, %v2199
    %v2322 = vmul.f32 %v2314, %v2214
    %v2323 = vmul.f32 %v2315, %v2229
    %v2324 = vmul.f32 %v2316, %v2244
    %v2325 = vmul.f32 %v2317, %v2259
    %v2326 = vmul.f32 %v2318, %v2274
    %v2327 = vmul.f32 %v2319, %v2289
    %v2328 = vmul.f32 %v2320, %v2304
    %v2329 = vadd.f32 %v2321, 1.4214138
    %v2330 = vadd.f32 %v2322, 1.4214138
    %v2331 = vadd.f32 %v2323, 1.4214138
    %v2332 = vadd.f32 %v2324, 1.4214138
    %v2333 = vadd.f32 %v2325, 1.4214138
    %v2334 = vadd.f32 %v2326, 1.4214138
    %v2335 = vadd.f32 %v2327, 1.4214138
    %v2336 = vadd.f32 %v2328, 1.4214138
    %v2337 = vmul.f32 %v2329, %v2199
    %v2338 = vmul.f32 %v2330, %v2214
    %v2339 = vmul.f32 %v2331, %v2229
    %v2340 = vmul.f32 %v2332, %v2244
    %v2341 = vmul.f32 %v2333, %v2259
    %v2342 = vmul.f32 %v2334, %v2274
    %v2343 = vmul.f32 %v2335, %v2289
    %v2344 = vmul.f32 %v2336, %v2304
    %v2345 = vadd.f32 %v2337, -0.28449672
    %v2346 = vadd.f32 %v2338, -0.28449672
    %v2347 = vadd.f32 %v2339, -0.28449672
    %v2348 = vadd.f32 %v2340, -0.28449672
    %v2349 = vadd.f32 %v2341, -0.28449672
    %v2350 = vadd.f32 %v2342, -0.28449672
    %v2351 = vadd.f32 %v2343, -0.28449672
    %v2352 = vadd.f32 %v2344, -0.28449672
    %v2353 = vmul.f32 %v2345, %v2199
    %v2354 = vmul.f32 %v2346, %v2214
    %v2355 = vmul.f32 %v2347, %v2229
    %v2356 = vmul.f32 %v2348, %v2244
    %v2357 = vmul.f32 %v2349, %v2259
    %v2358 = vmul.f32 %v2350, %v2274
    %v2359 = vmul.f32 %v2351, %v2289
    %v2360 = vmul.f32 %v2352, %v2304
    %v2361 = vadd.f32 %v2353, 0.2548296
    %v2362 = vadd.f32 %v2354, 0.2548296
    %v2363 = vadd.f32 %v2355, 0.2548296
    %v2364 = vadd.f32 %v2356, 0.2548296
    %v2365 = vadd.f32 %v2357, 0.2548296
    %v2366 = vadd.f32 %v2358, 0.2548296
    %v2367 = vadd.f32 %v2359, 0.2548296
    %v2368 = vadd.f32 %v2360, 0.2548296
    %v2369 = vmul.f32 %v2361, %v2199
    %v2370 = vmul.f32 %v2362, %v2214
    %v2371 = vmul.f32 %v2363, %v2229
    %v2372 = vmul.f32 %v2364, %v2244
    %v2373 = vmul.f32 %v2365, %v2259
    %v2374 = vmul.f32 %v2366, %v2274
    %v2375 = vmul.f32 %v2367, %v2289
    %v2376 = vmul.f32 %v2368, %v2304
    %v2377 = vsub.f32 0.0, %v2161
    %v2378 = vsub.f32 0.0, %v2162
    %v2379 = vsub.f32 0.0, %v2163
    %v2380 = vsub.f32 0.0, %v2164
    %v2381 = vsub.f32 0.0, %v2165
    %v2382 = vsub.f32 0.0, %v2166
    %v2383 = vsub.f32 0.0, %v2167
    %v2384 = vsub.f32 0.0, %v2168
    %v2385 = vmul.f32 %v2377, %v2161
    %v2386 = vmul.f32 %v2378, %v2162
    %v2387 = vmul.f32 %v2379, %v2163
    %v2388 = vmul.f32 %v2380, %v2164
    %v2389 = vmul.f32 %v2381, %v2165
    %v2390 = vmul.f32 %v2382, %v2166
    %v2391 = vmul.f32 %v2383, %v2167
    %v2392 = vmul.f32 %v2384, %v2168
    %v2393 = vmul.f32 %v2385, 1.442695
    %v2394 = vpow.pop %v2393
    %v2395 = vmul.f32 %v2386, 1.442695
    %v2396 = vpow.pop %v2395
    %v2397 = vmul.f32 %v2387, 1.442695
    %v2398 = vpow.pop %v2397
    %v2399 = vmul.f32 %v2388, 1.442695
    %v2400 = vpow.pop %v2399
    %v2401 = vmul.f32 %v2389, 1.442695
    %v2402 = vpow.pop %v2401
    %v2403 = vmul.f32 %v2390, 1.442695
    %v2404 = vpow.pop %v2403
    %v2405 = vmul.f32 %v2391, 1.442695
    %v2406 = vpow.pop %v2405
    %v2407 = vmul.f32 %v2392, 1.442695
    %v2408 = vpow.pop %v2407
    %v2409 = vmul.f32 %v2369, %v2394
    %v2410 = vmul.f32 %v2370, %v2396
    %v2411 = vmul.f32 %v2371, %v2398
    %v2412 = vmul.f32 %v2372, %v2400
    %v2413 = vmul.f32 %v2373, %v2402
    %v2414 = vmul.f32 %v2374, %v2404
    %v2415 = vmul.f32 %v2375, %v2406
    %v2416 = vmul.f32 %v2376, %v2408
    %v2417 = vsub.f32 1.0, %v2409
    %v2418 = vsub.f32 1.0, %v2410
    %v2419 = vsub.f32 1.0, %v2411
    %v2420 = vsub.f32 1.0, %v2412
    %v2421 = vsub.f32 1.0, %v2413
    %v2422 = vsub.f32 1.0, %v2414
    %v2423 = vsub.f32 1.0, %v2415
    %v2424 = vsub.f32 1.0, %v2416
    %v2425 = vmul.f32 %v2153, %v2417
    %v2426 = vmul.f32 %v2154, %v2418
    %v2427 = vmul.f32 %v2155, %v2419
    %v2428 = vmul.f32 %v2156, %v2420
    %v2429 = vmul.f32 %v2157, %v2421
    %v2430 = vmul.f32 %v2158, %v2422
    %v2431 = vmul.f32 %v2159, %v2423
    %v2432 = vmul.f32 %v2160, %v2424
    %v2433 = vadd.f32 %v2425, 1.0
    %v2434 = vadd.f32 %v2426, 1.0
    %v2435 = vadd.f32 %v2427, 1.0
    %v2436 = vadd.f32 %v2428, 1.0
    %v2437 = vadd.f32 %v2429, 1.0
    %v2438 = vadd.f32 %v2430, 1.0
    %v2439 = vadd.f32 %v2431, 1.0
    %v2440 = vadd.f32 %v2432, 1.0
    %v2441 = vmul.f32 %v2129, %v2433
    %v2442 = vmul.f32 %v2130, %v2434
    %v2443 = vmul.f32 %v2131, %v2435
    %v2444 = vmul.f32 %v2132, %v2436
    %v2445 = vmul.f32 %v2133, %v2437
    %v2446 = vmul.f32 %v2134, %v2438
    %v2447 = vmul.f32 %v2135, %v2439
    %v2448 = vmul.f32 %v2136, %v2440
    %v2450 = vperm.slane %v339, 0
    %v2453 = vsel %vm615, %v2441, 0
    %v2456 = vsel %vm615, %v2442, 0
    %v2459 = vsel %vm615, %v2443, 0
    %v2462 = vsel %vm615, %v2444, 0
    %v2465 = vsel %vm615, %v2445, 0
    %v2468 = vsel %vm615, %v2446, 0
    %v2471 = vsel %vm615, %v2447, 0
    %v2474 = vsel %vm615, %v2448, 0
    %2476 = vmatpush.msra.mxu0 0.0
    %2477 = vmatpush.msra.mxu0 0.0
    %2478 = vmatpush.msra.mxu0 0.0
    %2479 = vmatpush.msra.mxu0 0.0
    %2480 = vmatpush.msra.mxu0 0.0
    %2481 = vmatpush.msra.mxu0 0.0
    %2482 = vmatpush.msra.mxu0 0.0
    %2483 = vmatpush.msra.mxu0 0.0
    %2484 = vmatpush.msra.mxu0 %v338
    %2485 = vmatpush.msra.mxu0 %v337
    %2486 = vmatpush.msra.mxu0 %v336
    %2487 = vmatpush.msra.mxu0 %v335
    %2488 = vmatpush.msra.mxu0 %v334
    %2489 = vmatpush.msra.mxu0 %v333
    %2490 = vmatpush.msra.mxu0 %v332
    %2491 = vmatpush.msra.mxu0 %v331
    %2492 = vmatmul.f32.gmra.mxu0 %v2453
    %v2493 = vpop.f32.mrf.mxu0
    %v2494 = vadd.f32 %v2450, %v2493
    %2495 = vmatmul.f32.gmra.mxu0 %v2456
    %v2496 = vpop.f32.mrf.mxu0
    %v2497 = vadd.f32 %v2450, %v2496
    %2498 = vmatmul.f32.gmra.mxu0 %v2459
    %v2499 = vpop.f32.mrf.mxu0
    %v2500 = vadd.f32 %v2450, %v2499
    %2501 = vmatmul.f32.gmra.mxu0 %v2462
    %v2502 = vpop.f32.mrf.mxu0
    %v2503 = vadd.f32 %v2450, %v2502
    %2504 = vmatmul.f32.gmra.mxu0 %v2465
    %v2505 = vpop.f32.mrf.mxu0
    %v2506 = vadd.f32 %v2450, %v2505
    %2507 = vmatmul.f32.gmra.mxu0 %v2468
    %v2508 = vpop.f32.mrf.mxu0
    %v2509 = vadd.f32 %v2450, %v2508
    %2510 = vmatmul.f32.gmra.mxu0 %v2471
    %v2511 = vpop.f32.mrf.mxu0
    %v2512 = vadd.f32 %v2450, %v2511
    %2513 = vmatmul.f32.gmra.mxu0 %v2474
    %v2514 = vpop.f32.mrf.mxu0
    %v2515 = vadd.f32 %v2450, %v2514
    %2516 = vdwg.mxu0
    %v2517 = vadd.f32 %v1859, %v2494
    %v2518 = vadd.f32 %v1860, %v2497
    %v2519 = vadd.f32 %v1861, %v2500
    %v2520 = vadd.f32 %v1862, %v2503
    %v2521 = vadd.f32 %v1863, %v2506
    %v2522 = vadd.f32 %v1864, %v2509
    %v2523 = vadd.f32 %v1865, %v2512
    %v2524 = vadd.f32 %v1866, %v2515
    %2525 = vst.msk [vmem:[%s20] sm:$0xff] %vm348, %v2517
    %2526 = vst.msk [vmem:[%s20 + $0x8] sm:$0xff] %vm348, %v2518
    %2527 = vst.msk [vmem:[%s20 + $0x10] sm:$0xff] %vm348, %v2519
    %2528 = vst.msk [vmem:[%s20 + $0x18] sm:$0xff] %vm348, %v2520
    %2529 = vst.msk [vmem:[%s20 + $0x20] sm:$0xff] %vm348, %v2521
    %2530 = vst.msk [vmem:[%s20 + $0x28] sm:$0xff] %vm348, %v2522
    %2531 = vst.msk [vmem:[%s20 + $0x30] sm:$0xff] %vm348, %v2523
    %2532 = vst.msk [vmem:[%s20 + $0x38] sm:$0xff] %vm348, %v2524
    %s2533 = scalar_lea.vmem %s0, 64
    %v2534 = vld [vmem:[%s2533] sm:$0xff]
    %v2535 = vld [vmem:[%s2533 + $0x8] sm:$0xff]
    %v2536 = vld [vmem:[%s2533 + $0x10] sm:$0xff]
    %v2537 = vld [vmem:[%s2533 + $0x18] sm:$0xff]
    %v2538 = vld [vmem:[%s2533 + $0x20] sm:$0xff]
    %v2539 = vld [vmem:[%s2533 + $0x28] sm:$0xff]
    %v2540 = vld [vmem:[%s2533 + $0x30] sm:$0xff]
    %v2541 = vld [vmem:[%s2533 + $0x38] sm:$0xff]
    %v2542 = vsel %vm348, %v2534, 0.0
    %2543 = vadd.xlane.f32.xlu0 %v2542
    %v2544 = vpop.xlane.xlu0 %2543
    %v2545 = vsel %vm348, %v2535, 0.0
    %2546 = vadd.xlane.f32.xlu0 %v2545
    %v2547 = vpop.xlane.xlu0 %2546
    %v2548 = vsel %vm348, %v2536, 0.0
    %2549 = vadd.xlane.f32.xlu0 %v2548
    %v2550 = vpop.xlane.xlu0 %2549
    %v2551 = vsel %vm348, %v2537, 0.0
    %2552 = vadd.xlane.f32.xlu0 %v2551
    %v2553 = vpop.xlane.xlu0 %2552
    %v2554 = vsel %vm348, %v2538, 0.0
    %2555 = vadd.xlane.f32.xlu0 %v2554
    %v2556 = vpop.xlane.xlu0 %2555
    %v2557 = vsel %vm348, %v2539, 0.0
    %2558 = vadd.xlane.f32.xlu0 %v2557
    %v2559 = vpop.xlane.xlu0 %2558
    %v2560 = vsel %vm348, %v2540, 0.0
    %2561 = vadd.xlane.f32.xlu0 %v2560
    %v2562 = vpop.xlane.xlu0 %2561
    %v2563 = vsel %vm348, %v2541, 0.0
    %2564 = vadd.xlane.f32.xlu0 %v2563
    %v2565 = vpop.xlane.xlu0 %2564
    %v2566 = vmul.f32 %v2544, %v379
    %v2567 = vmul.f32 %v2547, %v379
    %v2568 = vmul.f32 %v2550, %v379
    %v2569 = vmul.f32 %v2553, %v379
    %v2570 = vmul.f32 %v2556, %v379
    %v2571 = vmul.f32 %v2559, %v379
    %v2572 = vmul.f32 %v2562, %v379
    %v2573 = vmul.f32 %v2565, %v379
    %v2574 = vsub.f32 %v2534, %v2566
    %v2575 = vsub.f32 %v2535, %v2567
    %v2576 = vsub.f32 %v2536, %v2568
    %v2577 = vsub.f32 %v2537, %v2569
    %v2578 = vsub.f32 %v2538, %v2570
    %v2579 = vsub.f32 %v2539, %v2571
    %v2580 = vsub.f32 %v2540, %v2572
    %v2581 = vsub.f32 %v2541, %v2573
    %v2582 = vmul.f32 %v2574, %v2574
    %v2583 = vmul.f32 %v2575, %v2575
    %v2584 = vmul.f32 %v2576, %v2576
    %v2585 = vmul.f32 %v2577, %v2577
    %v2586 = vmul.f32 %v2578, %v2578
    %v2587 = vmul.f32 %v2579, %v2579
    %v2588 = vmul.f32 %v2580, %v2580
    %v2589 = vmul.f32 %v2581, %v2581
    %v2590 = vsel %vm348, %v2582, 0.0
    %2591 = vadd.xlane.f32.xlu0 %v2590
    %v2592 = vpop.xlane.xlu0 %2591
    %v2593 = vsel %vm348, %v2583, 0.0
    %2594 = vadd.xlane.f32.xlu0 %v2593
    %v2595 = vpop.xlane.xlu0 %2594
    %v2596 = vsel %vm348, %v2584, 0.0
    %2597 = vadd.xlane.f32.xlu0 %v2596
    %v2598 = vpop.xlane.xlu0 %2597
    %v2599 = vsel %vm348, %v2585, 0.0
    %2600 = vadd.xlane.f32.xlu0 %v2599
    %v2601 = vpop.xlane.xlu0 %2600
    %v2602 = vsel %vm348, %v2586, 0.0
    %2603 = vadd.xlane.f32.xlu0 %v2602
    %v2604 = vpop.xlane.xlu0 %2603
    %v2605 = vsel %vm348, %v2587, 0.0
    %2606 = vadd.xlane.f32.xlu0 %v2605
    %v2607 = vpop.xlane.xlu0 %2606
    %v2608 = vsel %vm348, %v2588, 0.0
    %2609 = vadd.xlane.f32.xlu0 %v2608
    %v2610 = vpop.xlane.xlu0 %2609
    %v2611 = vsel %vm348, %v2589, 0.0
    %2612 = vadd.xlane.f32.xlu0 %v2611
    %v2613 = vpop.xlane.xlu0 %2612
    %v2614 = vmul.f32 %v2592, %v379
    %v2615 = vmul.f32 %v2595, %v379
    %v2616 = vmul.f32 %v2598, %v379
    %v2617 = vmul.f32 %v2601, %v379
    %v2618 = vmul.f32 %v2604, %v379
    %v2619 = vmul.f32 %v2607, %v379
    %v2620 = vmul.f32 %v2610, %v379
    %v2621 = vmul.f32 %v2613, %v379
    %v2622 = vadd.f32 %v2614, 1e-05
    %v2623 = vadd.f32 %v2615, 1e-05
    %v2624 = vadd.f32 %v2616, 1e-05
    %v2625 = vadd.f32 %v2617, 1e-05
    %v2626 = vadd.f32 %v2618, 1e-05
    %v2627 = vadd.f32 %v2619, 1e-05
    %v2628 = vadd.f32 %v2620, 1e-05
    %v2629 = vadd.f32 %v2621, 1e-05
    %v2630 = vrsqrt.pop %v2622
    %v2631 = vmul.f32 %v2630, %v2622
    %v2632 = vmul.f32 %v2631, %v2630
    %v2633 = vmul.f32 0.5, %v2632
    %v2634 = vsub.f32 1.5, %v2633
    %v2635 = vmul.f32 %v2630, %v2634
    %vm2636 = vweird.f32 %v2622
    %vm2637 = vweird.f32 %v2630
    %vm2638 = vmor %vm2636, %vm2637
    %v2639 = vsel %vm2638, %v2630, %v2635
    %v2640 = vrsqrt.pop %v2623
    %v2641 = vmul.f32 %v2640, %v2623
    %v2642 = vmul.f32 %v2641, %v2640
    %v2643 = vmul.f32 0.5, %v2642
    %v2644 = vsub.f32 1.5, %v2643
    %v2645 = vmul.f32 %v2640, %v2644
    %vm2646 = vweird.f32 %v2623
    %vm2647 = vweird.f32 %v2640
    %vm2648 = vmor %vm2646, %vm2647
    %v2649 = vsel %vm2648, %v2640, %v2645
    %v2650 = vrsqrt.pop %v2624
    %v2651 = vmul.f32 %v2650, %v2624
    %v2652 = vmul.f32 %v2651, %v2650
    %v2653 = vmul.f32 0.5, %v2652
    %v2654 = vsub.f32 1.5, %v2653
    %v2655 = vmul.f32 %v2650, %v2654
    %vm2656 = vweird.f32 %v2624
    %vm2657 = vweird.f32 %v2650
    %vm2658 = vmor %vm2656, %vm2657
    %v2659 = vsel %vm2658, %v2650, %v2655
    %v2660 = vrsqrt.pop %v2625
    %v2661 = vmul.f32 %v2660, %v2625
    %v2662 = vmul.f32 %v2661, %v2660
    %v2663 = vmul.f32 0.5, %v2662
    %v2664 = vsub.f32 1.5, %v2663
    %v2665 = vmul.f32 %v2660, %v2664
    %vm2666 = vweird.f32 %v2625
    %vm2667 = vweird.f32 %v2660
    %vm2668 = vmor %vm2666, %vm2667
    %v2669 = vsel %vm2668, %v2660, %v2665
    %v2670 = vrsqrt.pop %v2626
    %v2671 = vmul.f32 %v2670, %v2626
    %v2672 = vmul.f32 %v2671, %v2670
    %v2673 = vmul.f32 0.5, %v2672
    %v2674 = vsub.f32 1.5, %v2673
    %v2675 = vmul.f32 %v2670, %v2674
    %vm2676 = vweird.f32 %v2626
    %vm2677 = vweird.f32 %v2670
    %vm2678 = vmor %vm2676, %vm2677
    %v2679 = vsel %vm2678, %v2670, %v2675
    %v2680 = vrsqrt.pop %v2627
    %v2681 = vmul.f32 %v2680, %v2627
    %v2682 = vmul.f32 %v2681, %v2680
    %v2683 = vmul.f32 0.5, %v2682
    %v2684 = vsub.f32 1.5, %v2683
    %v2685 = vmul.f32 %v2680, %v2684
    %vm2686 = vweird.f32 %v2627
    %vm2687 = vweird.f32 %v2680
    %vm2688 = vmor %vm2686, %vm2687
    %v2689 = vsel %vm2688, %v2680, %v2685
    %v2690 = vrsqrt.pop %v2628
    %v2691 = vmul.f32 %v2690, %v2628
    %v2692 = vmul.f32 %v2691, %v2690
    %v2693 = vmul.f32 0.5, %v2692
    %v2694 = vsub.f32 1.5, %v2693
    %v2695 = vmul.f32 %v2690, %v2694
    %vm2696 = vweird.f32 %v2628
    %vm2697 = vweird.f32 %v2690
    %vm2698 = vmor %vm2696, %vm2697
    %v2699 = vsel %vm2698, %v2690, %v2695
    %v2700 = vrsqrt.pop %v2629
    %v2701 = vmul.f32 %v2700, %v2629
    %v2702 = vmul.f32 %v2701, %v2700
    %v2703 = vmul.f32 0.5, %v2702
    %v2704 = vsub.f32 1.5, %v2703
    %v2705 = vmul.f32 %v2700, %v2704
    %vm2706 = vweird.f32 %v2629
    %vm2707 = vweird.f32 %v2700
    %vm2708 = vmor %vm2706, %vm2707
    %v2709 = vsel %vm2708, %v2700, %v2705
    %v2710 = vmul.f32 %v2574, %v2639
    %v2711 = vmul.f32 %v2575, %v2649
    %v2712 = vmul.f32 %v2576, %v2659
    %v2713 = vmul.f32 %v2577, %v2669
    %v2714 = vmul.f32 %v2578, %v2679
    %v2715 = vmul.f32 %v2579, %v2689
    %v2716 = vmul.f32 %v2580, %v2699
    %v2717 = vmul.f32 %v2581, %v2709
    %v2718 = vmul.f32 %v2710, %v532
    %v2719 = vmul.f32 %v2711, %v532
    %v2720 = vmul.f32 %v2712, %v532
    %v2721 = vmul.f32 %v2713, %v532
    %v2722 = vmul.f32 %v2714, %v532
    %v2723 = vmul.f32 %v2715, %v532
    %v2724 = vmul.f32 %v2716, %v532
    %v2725 = vmul.f32 %v2717, %v532
    %v2726 = vadd.f32 %v2718, %v541
    %v2727 = vadd.f32 %v2719, %v541
    %v2728 = vadd.f32 %v2720, %v541
    %v2729 = vadd.f32 %v2721, %v541
    %v2730 = vadd.f32 %v2722, %v541
    %v2731 = vadd.f32 %v2723, %v541
    %v2732 = vadd.f32 %v2724, %v541
    %v2733 = vadd.f32 %v2725, %v541
    %v2735 = vsel %vm348, %v2726, 0
    %v2738 = vsel %vm348, %v2727, 0
    %v2741 = vsel %vm348, %v2728, 0
    %v2744 = vsel %vm348, %v2729, 0
    %v2747 = vsel %vm348, %v2730, 0
    %v2750 = vsel %vm348, %v2731, 0
    %v2753 = vsel %vm348, %v2732, 0
    %v2756 = vsel %vm348, %v2733, 0
    %2758 = vmatpush.msra.mxu0 0.0
    %2759 = vmatpush.msra.mxu0 0.0
    %2760 = vmatpush.msra.mxu0 0.0
    %2761 = vmatpush.msra.mxu0 0.0
    %2762 = vmatpush.msra.mxu0 0.0
    %2763 = vmatpush.msra.mxu0 0.0
    %2764 = vmatpush.msra.mxu0 0.0
    %2765 = vmatpush.msra.mxu0 0.0
    %2766 = vmatpush.msra.mxu0 0.0
    %2767 = vmatpush.msra.mxu0 0.0
    %2768 = vmatpush.msra.mxu0 0.0
    %2769 = vmatpush.msra.mxu0 0.0
    %2770 = vmatpush.msra.mxu0 %v286
    %2771 = vmatpush.msra.mxu0 %v285
    %2772 = vmatpush.msra.mxu0 %v284
    %2773 = vmatpush.msra.mxu0 %v283
    %2774 = vmatmul.f32.gmra.mxu0 %v2735
    %v2775 = vpop.f32.mrf.mxu0
    %v2776 = vadd.f32 0.0, %v2775
    %2777 = vmatmul.f32.gmra.mxu0 %v2738
    %v2778 = vpop.f32.mrf.mxu0
    %v2779 = vadd.f32 0.0, %v2778
    %2780 = vmatmul.f32.gmra.mxu0 %v2741
    %v2781 = vpop.f32.mrf.mxu0
    %v2782 = vadd.f32 0.0, %v2781
    %2783 = vmatmul.f32.gmra.mxu0 %v2744
    %v2784 = vpop.f32.mrf.mxu0
    %v2785 = vadd.f32 0.0, %v2784
    %2786 = vmatmul.f32.gmra.mxu0 %v2747
    %v2787 = vpop.f32.mrf.mxu0
    %v2788 = vadd.f32 0.0, %v2787
    %2789 = vmatmul.f32.gmra.mxu0 %v2750
    %v2790 = vpop.f32.mrf.mxu0
    %v2791 = vadd.f32 0.0, %v2790
    %2792 = vmatmul.f32.gmra.mxu0 %v2753
    %v2793 = vpop.f32.mrf.mxu0
    %v2794 = vadd.f32 0.0, %v2793
    %2795 = vmatmul.f32.gmra.mxu0 %v2756
    %v2796 = vpop.f32.mrf.mxu0
    %v2797 = vadd.f32 0.0, %v2796
    %2798 = vdwg.mxu0
    %2799 = vmatpush.msra.mxu0 0.0
    %2800 = vmatpush.msra.mxu0 0.0
    %2801 = vmatpush.msra.mxu0 0.0
    %2802 = vmatpush.msra.mxu0 0.0
    %2803 = vmatpush.msra.mxu0 0.0
    %2804 = vmatpush.msra.mxu0 0.0
    %2805 = vmatpush.msra.mxu0 0.0
    %2806 = vmatpush.msra.mxu0 0.0
    %2807 = vmatpush.msra.mxu0 %v2797
    %2808 = vmatpush.msra.mxu0 %v2794
    %2809 = vmatpush.msra.mxu0 %v2791
    %2810 = vmatpush.msra.mxu0 %v2788
    %2811 = vmatpush.msra.mxu0 %v2785
    %2812 = vmatpush.msra.mxu0 %v2782
    %2813 = vmatpush.msra.mxu0 %v2779
    %2814 = vmatpush.msra.mxu0 %v2776
    %2815 = vmatmul.f32.gmra.mxu0 %v617
    %v2816 = vpop.f32.mrf.mxu0
    %v2817 = vadd.f32 0.0, %v2816
    %2818 = vmatmul.f32.gmra.mxu0 %v620
    %v2819 = vpop.f32.mrf.mxu0
    %v2820 = vadd.f32 0.0, %v2819
    %2821 = vmatmul.f32.gmra.mxu0 %v623
    %v2822 = vpop.f32.mrf.mxu0
    %v2823 = vadd.f32 0.0, %v2822
    %2824 = vmatmul.f32.gmra.mxu0 %v626
    %v2825 = vpop.f32.mrf.mxu0
    %v2826 = vadd.f32 0.0, %v2825
    %2827 = vmatmul.f32.gmra.mxu0 %v629
    %v2828 = vpop.f32.mrf.mxu0
    %v2829 = vadd.f32 0.0, %v2828
    %2830 = vmatmul.f32.gmra.mxu0 %v632
    %v2831 = vpop.f32.mrf.mxu0
    %v2832 = vadd.f32 0.0, %v2831
    %2833 = vmatmul.f32.gmra.mxu0 %v635
    %v2834 = vpop.f32.mrf.mxu0
    %v2835 = vadd.f32 0.0, %v2834
    %2836 = vmatmul.f32.gmra.mxu0 %v638
    %v2837 = vpop.f32.mrf.mxu0
    %v2838 = vadd.f32 0.0, %v2837
    %2839 = vmatmul.f32.gmra.mxu0 %v641
    %v2840 = vpop.f32.mrf.mxu0
    %v2841 = vadd.f32 0.0, %v2840
    %2842 = vmatmul.f32.gmra.mxu0 %v644
    %v2843 = vpop.f32.mrf.mxu0
    %v2844 = vadd.f32 0.0, %v2843
    %2845 = vmatmul.f32.gmra.mxu0 %v647
    %v2846 = vpop.f32.mrf.mxu0
    %v2847 = vadd.f32 0.0, %v2846
    %2848 = vmatmul.f32.gmra.mxu0 %v650
    %v2849 = vpop.f32.mrf.mxu0
    %v2850 = vadd.f32 0.0, %v2849
    %2851 = vmatmul.f32.gmra.mxu0 %v653
    %v2852 = vpop.f32.mrf.mxu0
    %v2853 = vadd.f32 0.0, %v2852
    %2854 = vmatmul.f32.gmra.mxu0 %v656
    %v2855 = vpop.f32.mrf.mxu0
    %v2856 = vadd.f32 0.0, %v2855
    %2857 = vmatmul.f32.gmra.mxu0 %v659
    %v2858 = vpop.f32.mrf.mxu0
    %v2859 = vadd.f32 0.0, %v2858
    %2860 = vmatmul.f32.gmra.mxu0 %v662
    %v2861 = vpop.f32.mrf.mxu0
    %v2862 = vadd.f32 0.0, %v2861
    %2863 = vmatmul.f32.gmra.mxu0 %v665
    %v2864 = vpop.f32.mrf.mxu0
    %v2865 = vadd.f32 0.0, %v2864
    %2866 = vmatmul.f32.gmra.mxu0 %v668
    %v2867 = vpop.f32.mrf.mxu0
    %v2868 = vadd.f32 0.0, %v2867
    %2869 = vmatmul.f32.gmra.mxu0 %v671
    %v2870 = vpop.f32.mrf.mxu0
    %v2871 = vadd.f32 0.0, %v2870
    %2872 = vmatmul.f32.gmra.mxu0 %v674
    %v2873 = vpop.f32.mrf.mxu0
    %v2874 = vadd.f32 0.0, %v2873
    %2875 = vmatmul.f32.gmra.mxu0 %v677
    %v2876 = vpop.f32.mrf.mxu0
    %v2877 = vadd.f32 0.0, %v2876
    %2878 = vmatmul.f32.gmra.mxu0 %v680
    %v2879 = vpop.f32.mrf.mxu0
    %v2880 = vadd.f32 0.0, %v2879
    %2881 = vmatmul.f32.gmra.mxu0 %v683
    %v2882 = vpop.f32.mrf.mxu0
    %v2883 = vadd.f32 0.0, %v2882
    %2884 = vmatmul.f32.gmra.mxu0 %v686
    %v2885 = vpop.f32.mrf.mxu0
    %v2886 = vadd.f32 0.0, %v2885
    %2887 = vmatmul.f32.gmra.mxu0 %v689
    %v2888 = vpop.f32.mrf.mxu0
    %v2889 = vadd.f32 0.0, %v2888
    %2890 = vmatmul.f32.gmra.mxu0 %v692
    %v2891 = vpop.f32.mrf.mxu0
    %v2892 = vadd.f32 0.0, %v2891
    %2893 = vmatmul.f32.gmra.mxu0 %v695
    %v2894 = vpop.f32.mrf.mxu0
    %v2895 = vadd.f32 0.0, %v2894
    %2896 = vmatmul.f32.gmra.mxu0 %v698
    %v2897 = vpop.f32.mrf.mxu0
    %v2898 = vadd.f32 0.0, %v2897
    %2899 = vmatmul.f32.gmra.mxu0 %v701
    %v2900 = vpop.f32.mrf.mxu0
    %v2901 = vadd.f32 0.0, %v2900
    %2902 = vmatmul.f32.gmra.mxu0 %v704
    %v2903 = vpop.f32.mrf.mxu0
    %v2904 = vadd.f32 0.0, %v2903
    %2905 = vmatmul.f32.gmra.mxu0 %v707
    %v2906 = vpop.f32.mrf.mxu0
    %v2907 = vadd.f32 0.0, %v2906
    %2908 = vmatmul.f32.gmra.mxu0 %v710
    %v2909 = vpop.f32.mrf.mxu0
    %v2910 = vadd.f32 0.0, %v2909
    %2911 = vmatmul.f32.gmra.mxu0 %v713
    %v2912 = vpop.f32.mrf.mxu0
    %v2913 = vadd.f32 0.0, %v2912
    %2914 = vmatmul.f32.gmra.mxu0 %v716
    %v2915 = vpop.f32.mrf.mxu0
    %v2916 = vadd.f32 0.0, %v2915
    %2917 = vmatmul.f32.gmra.mxu0 %v719
    %v2918 = vpop.f32.mrf.mxu0
    %v2919 = vadd.f32 0.0, %v2918
    %2920 = vmatmul.f32.gmra.mxu0 %v722
    %v2921 = vpop.f32.mrf.mxu0
    %v2922 = vadd.f32 0.0, %v2921
    %2923 = vmatmul.f32.gmra.mxu0 %v725
    %v2924 = vpop.f32.mrf.mxu0
    %v2925 = vadd.f32 0.0, %v2924
    %2926 = vmatmul.f32.gmra.mxu0 %v728
    %v2927 = vpop.f32.mrf.mxu0
    %v2928 = vadd.f32 0.0, %v2927
    %2929 = vmatmul.f32.gmra.mxu0 %v731
    %v2930 = vpop.f32.mrf.mxu0
    %v2931 = vadd.f32 0.0, %v2930
    %2932 = vmatmul.f32.gmra.mxu0 %v734
    %v2933 = vpop.f32.mrf.mxu0
    %v2934 = vadd.f32 0.0, %v2933
    %2935 = vmatmul.f32.gmra.mxu0 %v737
    %v2936 = vpop.f32.mrf.mxu0
    %v2937 = vadd.f32 0.0, %v2936
    %2938 = vmatmul.f32.gmra.mxu0 %v740
    %v2939 = vpop.f32.mrf.mxu0
    %v2940 = vadd.f32 0.0, %v2939
    %2941 = vmatmul.f32.gmra.mxu0 %v743
    %v2942 = vpop.f32.mrf.mxu0
    %v2943 = vadd.f32 0.0, %v2942
    %2944 = vmatmul.f32.gmra.mxu0 %v746
    %v2945 = vpop.f32.mrf.mxu0
    %v2946 = vadd.f32 0.0, %v2945
    %2947 = vmatmul.f32.gmra.mxu0 %v749
    %v2948 = vpop.f32.mrf.mxu0
    %v2949 = vadd.f32 0.0, %v2948
    %2950 = vmatmul.f32.gmra.mxu0 %v752
    %v2951 = vpop.f32.mrf.mxu0
    %v2952 = vadd.f32 0.0, %v2951
    %2953 = vmatmul.f32.gmra.mxu0 %v755
    %v2954 = vpop.f32.mrf.mxu0
    %v2955 = vadd.f32 0.0, %v2954
    %2956 = vmatmul.f32.gmra.mxu0 %v758
    %v2957 = vpop.f32.mrf.mxu0
    %v2958 = vadd.f32 0.0, %v2957
    %2959 = vmatmul.f32.gmra.mxu0 %v761
    %v2960 = vpop.f32.mrf.mxu0
    %v2961 = vadd.f32 0.0, %v2960
    %2962 = vmatmul.f32.gmra.mxu0 %v764
    %v2963 = vpop.f32.mrf.mxu0
    %v2964 = vadd.f32 0.0, %v2963
    %2965 = vmatmul.f32.gmra.mxu0 %v767
    %v2966 = vpop.f32.mrf.mxu0
    %v2967 = vadd.f32 0.0, %v2966
    %2968 = vmatmul.f32.gmra.mxu0 %v770
    %v2969 = vpop.f32.mrf.mxu0
    %v2970 = vadd.f32 0.0, %v2969
    %2971 = vmatmul.f32.gmra.mxu0 %v773
    %v2972 = vpop.f32.mrf.mxu0
    %v2973 = vadd.f32 0.0, %v2972
    %2974 = vmatmul.f32.gmra.mxu0 %v776
    %v2975 = vpop.f32.mrf.mxu0
    %v2976 = vadd.f32 0.0, %v2975
    %2977 = vmatmul.f32.gmra.mxu0 %v779
    %v2978 = vpop.f32.mrf.mxu0
    %v2979 = vadd.f32 0.0, %v2978
    %2980 = vmatmul.f32.gmra.mxu0 %v782
    %v2981 = vpop.f32.mrf.mxu0
    %v2982 = vadd.f32 0.0, %v2981
    %2983 = vmatmul.f32.gmra.mxu0 %v785
    %v2984 = vpop.f32.mrf.mxu0
    %v2985 = vadd.f32 0.0, %v2984
    %2986 = vmatmul.f32.gmra.mxu0 %v788
    %v2987 = vpop.f32.mrf.mxu0
    %v2988 = vadd.f32 0.0, %v2987
    %2989 = vmatmul.f32.gmra.mxu0 %v791
    %v2990 = vpop.f32.mrf.mxu0
    %v2991 = vadd.f32 0.0, %v2990
    %2992 = vmatmul.f32.gmra.mxu0 %v794
    %v2993 = vpop.f32.mrf.mxu0
    %v2994 = vadd.f32 0.0, %v2993
    %2995 = vmatmul.f32.gmra.mxu0 %v797
    %v2996 = vpop.f32.mrf.mxu0
    %v2997 = vadd.f32 0.0, %v2996
    %2998 = vmatmul.f32.gmra.mxu0 %v800
    %v2999 = vpop.f32.mrf.mxu0
    %v3000 = vadd.f32 0.0, %v2999
    %3001 = vmatmul.f32.gmra.mxu0 %v803
    %v3002 = vpop.f32.mrf.mxu0
    %v3003 = vadd.f32 0.0, %v3002
    %3004 = vmatmul.f32.gmra.mxu0 %v806
    %v3005 = vpop.f32.mrf.mxu0
    %v3006 = vadd.f32 0.0, %v3005
    %3007 = vmatmul.f32.gmra.mxu0 %v809
    %v3008 = vpop.f32.mrf.mxu0
    %v3009 = vadd.f32 0.0, %v3008
    %3010 = vmatmul.f32.gmra.mxu0 %v812
    %v3011 = vpop.f32.mrf.mxu0
    %v3012 = vadd.f32 0.0, %v3011
    %3013 = vmatmul.f32.gmra.mxu0 %v815
    %v3014 = vpop.f32.mrf.mxu0
    %v3015 = vadd.f32 0.0, %v3014
    %3016 = vmatmul.f32.gmra.mxu0 %v818
    %v3017 = vpop.f32.mrf.mxu0
    %v3018 = vadd.f32 0.0, %v3017
    %3019 = vmatmul.f32.gmra.mxu0 %v821
    %v3020 = vpop.f32.mrf.mxu0
    %v3021 = vadd.f32 0.0, %v3020
    %3022 = vmatmul.f32.gmra.mxu0 %v824
    %v3023 = vpop.f32.mrf.mxu0
    %v3024 = vadd.f32 0.0, %v3023
    %3025 = vmatmul.f32.gmra.mxu0 %v827
    %v3026 = vpop.f32.mrf.mxu0
    %v3027 = vadd.f32 0.0, %v3026
    %3028 = vmatmul.f32.gmra.mxu0 %v830
    %v3029 = vpop.f32.mrf.mxu0
    %v3030 = vadd.f32 0.0, %v3029
    %3031 = vdwg.mxu0
    %v3032 = vmul.f32 %v2817, %v1065
    %v3033 = vmul.f32 %v2820, %v1065
    %v3034 = vmul.f32 %v2823, %v1065
    %v3035 = vmul.f32 %v2826, %v1065
    %v3036 = vmul.f32 %v2829, %v1065
    %v3037 = vmul.f32 %v2832, %v1065
    %v3038 = vmul.f32 %v2835, %v1065
    %v3039 = vmul.f32 %v2838, %v1065
    %v3040 = vadd.f32 %v3032, 0.0
    %v3041 = vadd.f32 %v3033, 0.0
    %v3042 = vadd.f32 %v3034, 0.0
    %v3043 = vadd.f32 %v3035, 0.0
    %v3044 = vadd.f32 %v3036, 0.0
    %v3045 = vadd.f32 %v3037, 0.0
    %v3046 = vadd.f32 %v3038, 0.0
    %v3047 = vadd.f32 %v3039, 0.0
    %v3048 = vmul.f32 %v2841, %v1082
    %v3049 = vmul.f32 %v2844, %v1082
    %v3050 = vmul.f32 %v2847, %v1082
    %v3051 = vmul.f32 %v2850, %v1082
    %v3052 = vmul.f32 %v2853, %v1082
    %v3053 = vmul.f32 %v2856, %v1082
    %v3054 = vmul.f32 %v2859, %v1082
    %v3055 = vmul.f32 %v2862, %v1082
    %v3056 = vadd.f32 %v3040, %v3048
    %v3057 = vadd.f32 %v3041, %v3049
    %v3058 = vadd.f32 %v3042, %v3050
    %v3059 = vadd.f32 %v3043, %v3051
    %v3060 = vadd.f32 %v3044, %v3052
    %v3061 = vadd.f32 %v3045, %v3053
    %v3062 = vadd.f32 %v3046, %v3054
    %v3063 = vadd.f32 %v3047, %v3055
    %v3064 = vmul.f32 %v2865, %v1099
    %v3065 = vmul.f32 %v2868, %v1099
    %v3066 = vmul.f32 %v2871, %v1099
    %v3067 = vmul.f32 %v2874, %v1099
    %v3068 = vmul.f32 %v2877, %v1099
    %v3069 = vmul.f32 %v2880, %v1099
    %v3070 = vmul.f32 %v2883, %v1099
    %v3071 = vmul.f32 %v2886, %v1099
    %v3072 = vadd.f32 %v3056, %v3064
    %v3073 = vadd.f32 %v3057, %v3065
    %v3074 = vadd.f32 %v3058, %v3066
    %v3075 = vadd.f32 %v3059, %v3067
    %v3076 = vadd.f32 %v3060, %v3068
    %v3077 = vadd.f32 %v3061, %v3069
    %v3078 = vadd.f32 %v3062, %v3070
    %v3079 = vadd.f32 %v3063, %v3071
    %v3080 = vmul.f32 %v2889, %v1116
    %v3081 = vmul.f32 %v2892, %v1116
    %v3082 = vmul.f32 %v2895, %v1116
    %v3083 = vmul.f32 %v2898, %v1116
    %v3084 = vmul.f32 %v2901, %v1116
    %v3085 = vmul.f32 %v2904, %v1116
    %v3086 = vmul.f32 %v2907, %v1116
    %v3087 = vmul.f32 %v2910, %v1116
    %v3088 = vadd.f32 %v3072, %v3080
    %v3089 = vadd.f32 %v3073, %v3081
    %v3090 = vadd.f32 %v3074, %v3082
    %v3091 = vadd.f32 %v3075, %v3083
    %v3092 = vadd.f32 %v3076, %v3084
    %v3093 = vadd.f32 %v3077, %v3085
    %v3094 = vadd.f32 %v3078, %v3086
    %v3095 = vadd.f32 %v3079, %v3087
    %v3096 = vmul.f32 %v2913, %v1133
    %v3097 = vmul.f32 %v2916, %v1133
    %v3098 = vmul.f32 %v2919, %v1133
    %v3099 = vmul.f32 %v2922, %v1133
    %v3100 = vmul.f32 %v2925, %v1133
    %v3101 = vmul.f32 %v2928, %v1133
    %v3102 = vmul.f32 %v2931, %v1133
    %v3103 = vmul.f32 %v2934, %v1133
    %v3104 = vadd.f32 %v3088, %v3096
    %v3105 = vadd.f32 %v3089, %v3097
    %v3106 = vadd.f32 %v3090, %v3098
    %v3107 = vadd.f32 %v3091, %v3099
    %v3108 = vadd.f32 %v3092, %v3100
    %v3109 = vadd.f32 %v3093, %v3101
    %v3110 = vadd.f32 %v3094, %v3102
    %v3111 = vadd.f32 %v3095, %v3103
    %v3112 = vmul.f32 %v2937, %v1150
    %v3113 = vmul.f32 %v2940, %v1150
    %v3114 = vmul.f32 %v2943, %v1150
    %v3115 = vmul.f32 %v2946, %v1150
    %v3116 = vmul.f32 %v2949, %v1150
    %v3117 = vmul.f32 %v2952, %v1150
    %v3118 = vmul.f32 %v2955, %v1150
    %v3119 = vmul.f32 %v2958, %v1150
    %v3120 = vadd.f32 %v3104, %v3112
    %v3121 = vadd.f32 %v3105, %v3113
    %v3122 = vadd.f32 %v3106, %v3114
    %v3123 = vadd.f32 %v3107, %v3115
    %v3124 = vadd.f32 %v3108, %v3116
    %v3125 = vadd.f32 %v3109, %v3117
    %v3126 = vadd.f32 %v3110, %v3118
    %v3127 = vadd.f32 %v3111, %v3119
    %v3128 = vmul.f32 %v2961, %v1167
    %v3129 = vmul.f32 %v2964, %v1167
    %v3130 = vmul.f32 %v2967, %v1167
    %v3131 = vmul.f32 %v2970, %v1167
    %v3132 = vmul.f32 %v2973, %v1167
    %v3133 = vmul.f32 %v2976, %v1167
    %v3134 = vmul.f32 %v2979, %v1167
    %v3135 = vmul.f32 %v2982, %v1167
    %v3136 = vadd.f32 %v3120, %v3128
    %v3137 = vadd.f32 %v3121, %v3129
    %v3138 = vadd.f32 %v3122, %v3130
    %v3139 = vadd.f32 %v3123, %v3131
    %v3140 = vadd.f32 %v3124, %v3132
    %v3141 = vadd.f32 %v3125, %v3133
    %v3142 = vadd.f32 %v3126, %v3134
    %v3143 = vadd.f32 %v3127, %v3135
    %v3144 = vmul.f32 %v2985, %v1184
    %v3145 = vmul.f32 %v2988, %v1184
    %v3146 = vmul.f32 %v2991, %v1184
    %v3147 = vmul.f32 %v2994, %v1184
    %v3148 = vmul.f32 %v2997, %v1184
    %v3149 = vmul.f32 %v3000, %v1184
    %v3150 = vmul.f32 %v3003, %v1184
    %v3151 = vmul.f32 %v3006, %v1184
    %v3152 = vadd.f32 %v3136, %v3144
    %v3153 = vadd.f32 %v3137, %v3145
    %v3154 = vadd.f32 %v3138, %v3146
    %v3155 = vadd.f32 %v3139, %v3147
    %v3156 = vadd.f32 %v3140, %v3148
    %v3157 = vadd.f32 %v3141, %v3149
    %v3158 = vadd.f32 %v3142, %v3150
    %v3159 = vadd.f32 %v3143, %v3151
    %v3160 = vmul.f32 %v3009, %v1201
    %v3161 = vmul.f32 %v3012, %v1201
    %v3162 = vmul.f32 %v3015, %v1201
    %v3163 = vmul.f32 %v3018, %v1201
    %v3164 = vmul.f32 %v3021, %v1201
    %v3165 = vmul.f32 %v3024, %v1201
    %v3166 = vmul.f32 %v3027, %v1201
    %v3167 = vmul.f32 %v3030, %v1201
    %v3168 = vadd.f32 %v3152, %v3160
    %v3169 = vadd.f32 %v3153, %v3161
    %v3170 = vadd.f32 %v3154, %v3162
    %v3171 = vadd.f32 %v3155, %v3163
    %v3172 = vadd.f32 %v3156, %v3164
    %v3173 = vadd.f32 %v3157, %v3165
    %v3174 = vadd.f32 %v3158, %v3166
    %v3175 = vadd.f32 %v3159, %v3167
    %v3176 = vadd.f32 %v3168, %v1219
    %v3177 = vadd.f32 %v3169, %v1219
    %v3178 = vadd.f32 %v3170, %v1219
    %v3179 = vadd.f32 %v3171, %v1219
    %v3180 = vadd.f32 %v3172, %v1219
    %v3181 = vadd.f32 %v3173, %v1219
    %v3182 = vadd.f32 %v3174, %v1219
    %v3183 = vadd.f32 %v3175, %v1219
    %vm3184 = vcmp.gt.f32.partialorder %v3176, 0.0
    %vm3185 = vcmp.gt.f32.partialorder %v3177, 0.0
    %vm3186 = vcmp.gt.f32.partialorder %v3178, 0.0
    %vm3187 = vcmp.gt.f32.partialorder %v3179, 0.0
    %vm3188 = vcmp.gt.f32.partialorder %v3180, 0.0
    %vm3189 = vcmp.gt.f32.partialorder %v3181, 0.0
    %vm3190 = vcmp.gt.f32.partialorder %v3182, 0.0
    %vm3191 = vcmp.gt.f32.partialorder %v3183, 0.0
    %v3192 = vmin.f32 %v3176, 0.0
    %v3193 = vmin.f32 %v3177, 0.0
    %v3194 = vmin.f32 %v3178, 0.0
    %v3195 = vmin.f32 %v3179, 0.0
    %v3196 = vmin.f32 %v3180, 0.0
    %v3197 = vmin.f32 %v3181, 0.0
    %v3198 = vmin.f32 %v3182, 0.0
    %v3199 = vmin.f32 %v3183, 0.0
    %v3200 = vmul.f32 %v3192, 1.442695
    %v3201 = vpow.pop %v3200
    %v3202 = vmul.f32 %v3193, 1.442695
    %v3203 = vpow.pop %v3202
    %v3204 = vmul.f32 %v3194, 1.442695
    %v3205 = vpow.pop %v3204
    %v3206 = vmul.f32 %v3195, 1.442695
    %v3207 = vpow.pop %v3206
    %v3208 = vmul.f32 %v3196, 1.442695
    %v3209 = vpow.pop %v3208
    %v3210 = vmul.f32 %v3197, 1.442695
    %v3211 = vpow.pop %v3210
    %v3212 = vmul.f32 %v3198, 1.442695
    %v3213 = vpow.pop %v3212
    %v3214 = vmul.f32 %v3199, 1.442695
    %v3215 = vpow.pop %v3214
    %v3216 = vsub.f32 %v3201, 1.0
    %v3217 = vsub.f32 %v3203, 1.0
    %v3218 = vsub.f32 %v3205, 1.0
    %v3219 = vsub.f32 %v3207, 1.0
    %v3220 = vsub.f32 %v3209, 1.0
    %v3221 = vsub.f32 %v3211, 1.0
    %v3222 = vsub.f32 %v3213, 1.0
    %v3223 = vsub.f32 %v3215, 1.0
    %v3224 = vsel %vm3184, %v3176, %v3216
    %v3225 = vsel %vm3185, %v3177, %v3217
    %v3226 = vsel %vm3186, %v3178, %v3218
    %v3227 = vsel %vm3187, %v3179, %v3219
    %v3228 = vsel %vm3188, %v3180, %v3220
    %v3229 = vsel %vm3189, %v3181, %v3221
    %v3230 = vsel %vm3190, %v3182, %v3222
    %v3231 = vsel %vm3191, %v3183, %v3223
    %v3232 = vmul.f32 %v3224, %v1278
    %v3233 = vmul.f32 %v3225, %v1278
    %v3234 = vmul.f32 %v3226, %v1278
    %v3235 = vmul.f32 %v3227, %v1278
    %v3236 = vmul.f32 %v3228, %v1278
    %v3237 = vmul.f32 %v3229, %v1278
    %v3238 = vmul.f32 %v3230, %v1278
    %v3239 = vmul.f32 %v3231, %v1278
    %v3240 = vadd.f32 %v3232, %v1289
    %v3241 = vadd.f32 %v3233, %v1289
    %v3242 = vadd.f32 %v3234, %v1289
    %v3243 = vadd.f32 %v3235, %v1289
    %v3244 = vadd.f32 %v3236, %v1289
    %v3245 = vadd.f32 %v3237, %v1289
    %v3246 = vadd.f32 %v3238, %v1289
    %v3247 = vadd.f32 %v3239, %v1289
    %3248 = vmatpush.msra.mxu0 0.0
    %3249 = vmatpush.msra.mxu0 0.0
    %3250 = vmatpush.msra.mxu0 0.0
    %3251 = vmatpush.msra.mxu0 0.0
    %3252 = vmatpush.msra.mxu0 0.0
    %3253 = vmatpush.msra.mxu0 0.0
    %3254 = vmatpush.msra.mxu0 0.0
    %3255 = vmatpush.msra.mxu0 0.0
    %3256 = vmatpush.msra.mxu0 %v3247
    %3257 = vmatpush.msra.mxu0 %v3246
    %3258 = vmatpush.msra.mxu0 %v3245
    %3259 = vmatpush.msra.mxu0 %v3244
    %3260 = vmatpush.msra.mxu0 %v3243
    %3261 = vmatpush.msra.mxu0 %v3242
    %3262 = vmatpush.msra.mxu0 %v3241
    %3263 = vmatpush.msra.mxu0 %v3240
    %3264 = vmatmul.f32.gmra.mxu0 %v1300
    %v3265 = vpop.f32.mrf.mxu0
    %v3266 = vadd.f32 0.0, %v3265
    %3267 = vmatmul.f32.gmra.mxu0 %v1303
    %v3268 = vpop.f32.mrf.mxu0
    %v3269 = vadd.f32 0.0, %v3268
    %3270 = vdwg.mxu0
    %v3272 = vsel %vm348, %v3240, 0
    %v3275 = vsel %vm348, %v3241, 0
    %v3278 = vsel %vm348, %v3242, 0
    %v3281 = vsel %vm348, %v3243, 0
    %v3284 = vsel %vm348, %v3244, 0
    %v3287 = vsel %vm348, %v3245, 0
    %v3290 = vsel %vm348, %v3246, 0
    %v3293 = vsel %vm348, %v3247, 0
    %3295 = vmatpush.msra.mxu0 0.0
    %3296 = vmatpush.msra.mxu0 0.0
    %3297 = vmatpush.msra.mxu0 0.0
    %3298 = vmatpush.msra.mxu0 0.0
    %3299 = vmatpush.msra.mxu0 0.0
    %3300 = vmatpush.msra.mxu0 0.0
    %3301 = vmatpush.msra.mxu0 0.0
    %3302 = vmatpush.msra.mxu0 0.0
    %3303 = vmatpush.msra.mxu0 0.0
    %3304 = vmatpush.msra.mxu0 0.0
    %3305 = vmatpush.msra.mxu0 0.0
    %3306 = vmatpush.msra.mxu0 0.0
    %3307 = vmatpush.msra.mxu0 %v314
    %3308 = vmatpush.msra.mxu0 %v313
    %3309 = vmatpush.msra.mxu0 %v312
    %3310 = vmatpush.msra.mxu0 %v311
    %3311 = vmatmul.f32.gmra.mxu0 %v3272
    %v3312 = vpop.f32.mrf.mxu0
    %v3313 = vadd.f32 %v1329, %v3312
    %3314 = vmatmul.f32.gmra.mxu0 %v3275
    %v3315 = vpop.f32.mrf.mxu0
    %v3316 = vadd.f32 %v1329, %v3315
    %3317 = vmatmul.f32.gmra.mxu0 %v3278
    %v3318 = vpop.f32.mrf.mxu0
    %v3319 = vadd.f32 %v1329, %v3318
    %3320 = vmatmul.f32.gmra.mxu0 %v3281
    %v3321 = vpop.f32.mrf.mxu0
    %v3322 = vadd.f32 %v1329, %v3321
    %3323 = vmatmul.f32.gmra.mxu0 %v3284
    %v3324 = vpop.f32.mrf.mxu0
    %v3325 = vadd.f32 %v1329, %v3324
    %3326 = vmatmul.f32.gmra.mxu0 %v3287
    %v3327 = vpop.f32.mrf.mxu0
    %v3328 = vadd.f32 %v1329, %v3327
    %3329 = vmatmul.f32.gmra.mxu0 %v3290
    %v3330 = vpop.f32.mrf.mxu0
    %v3331 = vadd.f32 %v1329, %v3330
    %3332 = vmatmul.f32.gmra.mxu0 %v3293
    %v3333 = vpop.f32.mrf.mxu0
    %v3334 = vadd.f32 %v1329, %v3333
    %3335 = vdwg.mxu0
    %3338 = vrot.lane.b32.xlu0 %v3266, 96
    %v3339 = vpop.permute.xlu0 %3338
    %3340 = vrot.lane.b32.xlu0 %v3269, 96
    %v3341 = vpop.permute.xlu0 %3340
    %v3342 = vsel %vm615, %v3339, 0
    %v3344 = vsel %vm615, %v3341, 0
    %3346 = vmatpush.msra.mxu0 0.0
    %3347 = vmatpush.msra.mxu0 0.0
    %3348 = vmatpush.msra.mxu0 0.0
    %3349 = vmatpush.msra.mxu0 0.0
    %3350 = vmatpush.msra.mxu0 0.0
    %3351 = vmatpush.msra.mxu0 0.0
    %3352 = vmatpush.msra.mxu0 0.0
    %3353 = vmatpush.msra.mxu0 0.0
    %3354 = vmatpush.msra.mxu0 %v323
    %3355 = vmatpush.msra.mxu0 %v322
    %3356 = vmatpush.msra.mxu0 %v321
    %3357 = vmatpush.msra.mxu0 %v320
    %3358 = vmatpush.msra.mxu0 %v319
    %3359 = vmatpush.msra.mxu0 %v318
    %3360 = vmatpush.msra.mxu0 %v317
    %3361 = vmatpush.msra.mxu0 %v316
    %3362 = vmatmul.f32.gmra.mxu0 %v3342
    %v3363 = vpop.f32.mrf.mxu0
    %v3364 = vadd.f32 %v1397, %v3363
    %3365 = vmatmul.f32.gmra.mxu0 %v3344
    %v3366 = vpop.f32.mrf.mxu0
    %v3367 = vadd.f32 %v1397, %v3366
    %3368 = vdwg.mxu0
    %v3369 = vmul.f32 %v3364, %v289
    %v3370 = vmul.f32 %v3367, %v290
    %v3371 = vmul.f32 %v3364, %v291
    %v3372 = vmul.f32 %v3367, %v292
    %v3373 = vmul.f32 %v3364, %v293
    %v3374 = vmul.f32 %v3367, %v294
    %v3375 = vmul.f32 %v3364, %v295
    %v3376 = vmul.f32 %v3367, %v296
    %v3377 = vmul.f32 %v3313, 0.35355338
    %v3378 = vmul.f32 %v3316, 0.35355338
    %v3379 = vmul.f32 %v3319, 0.35355338
    %v3380 = vmul.f32 %v3322, 0.35355338
    %v3381 = vmul.f32 %v3325, 0.35355338
    %v3382 = vmul.f32 %v3328, 0.35355338
    %v3383 = vmul.f32 %v3331, 0.35355338
    %v3384 = vmul.f32 %v3334, 0.35355338
    %v3386 = vsel %vm348, %v3377, 0
    %v3389 = vsel %vm348, %v3378, 0
    %v3392 = vsel %vm348, %v3379, 0
    %v3395 = vsel %vm348, %v3380, 0
    %v3398 = vsel %vm348, %v3381, 0
    %v3401 = vsel %vm348, %v3382, 0
    %v3404 = vsel %vm348, %v3383, 0
    %v3407 = vsel %vm348, %v3384, 0
    %v3410 = vsel %vm348, %v3369, 0
    %v3413 = vsel %vm348, %v3370, 0
    %v3416 = vsel %vm348, %v3371, 0
    %v3419 = vsel %vm348, %v3372, 0
    %v3422 = vsel %vm348, %v3373, 0
    %v3425 = vsel %vm348, %v3374, 0
    %v3428 = vsel %vm348, %v3375, 0
    %v3431 = vsel %vm348, %v3376, 0
    %3433 = vmatpush.xpose.msra.mxu0 0.0
    %3434 = vmatpush.xpose.msra.mxu0 0.0
    %3435 = vmatpush.xpose.msra.mxu0 0.0
    %3436 = vmatpush.xpose.msra.mxu0 0.0
    %3437 = vmatpush.xpose.msra.mxu0 0.0
    %3438 = vmatpush.xpose.msra.mxu0 0.0
    %3439 = vmatpush.xpose.msra.mxu0 0.0
    %3440 = vmatpush.xpose.msra.mxu0 0.0
    %3441 = vmatpush.xpose.msra.mxu0 %v3431
    %3442 = vmatpush.xpose.msra.mxu0 %v3428
    %3443 = vmatpush.xpose.msra.mxu0 %v3425
    %3444 = vmatpush.xpose.msra.mxu0 %v3422
    %3445 = vmatpush.xpose.msra.mxu0 %v3419
    %3446 = vmatpush.xpose.msra.mxu0 %v3416
    %3447 = vmatpush.xpose.msra.mxu0 %v3413
    %3448 = vmatpush.xpose.msra.mxu0 %v3410
    %3449 = vmatmul.f32.gmra.mxu0 %v3386
    %v3450 = vpop.f32.mrf.mxu0
    %v3451 = vadd.f32 0.0, %v3450
    %3452 = vmatmul.f32.gmra.mxu0 %v3389
    %v3453 = vpop.f32.mrf.mxu0
    %v3454 = vadd.f32 0.0, %v3453
    %3455 = vmatmul.f32.gmra.mxu0 %v3392
    %v3456 = vpop.f32.mrf.mxu0
    %v3457 = vadd.f32 0.0, %v3456
    %3458 = vmatmul.f32.gmra.mxu0 %v3395
    %v3459 = vpop.f32.mrf.mxu0
    %v3460 = vadd.f32 0.0, %v3459
    %3461 = vmatmul.f32.gmra.mxu0 %v3398
    %v3462 = vpop.f32.mrf.mxu0
    %v3463 = vadd.f32 0.0, %v3462
    %3464 = vmatmul.f32.gmra.mxu0 %v3401
    %v3465 = vpop.f32.mrf.mxu0
    %v3466 = vadd.f32 0.0, %v3465
    %3467 = vmatmul.f32.gmra.mxu0 %v3404
    %v3468 = vpop.f32.mrf.mxu0
    %v3469 = vadd.f32 0.0, %v3468
    %3470 = vmatmul.f32.gmra.mxu0 %v3407
    %v3471 = vpop.f32.mrf.mxu0
    %v3472 = vadd.f32 0.0, %v3471
    %3473 = vdwg.mxu0
    %v3474 = vsel %vm615, %v3451, -inf
    %3475 = vmax.xlane.f32.xlu0 %v3474
    %v3476 = vpop.xlane.xlu0 %3475
    %v3477 = vsel %vm615, %v3454, -inf
    %3478 = vmax.xlane.f32.xlu0 %v3477
    %v3479 = vpop.xlane.xlu0 %3478
    %v3480 = vsel %vm615, %v3457, -inf
    %3481 = vmax.xlane.f32.xlu0 %v3480
    %v3482 = vpop.xlane.xlu0 %3481
    %v3483 = vsel %vm615, %v3460, -inf
    %3484 = vmax.xlane.f32.xlu0 %v3483
    %v3485 = vpop.xlane.xlu0 %3484
    %v3486 = vsel %vm615, %v3463, -inf
    %3487 = vmax.xlane.f32.xlu0 %v3486
    %v3488 = vpop.xlane.xlu0 %3487
    %v3489 = vsel %vm615, %v3466, -inf
    %3490 = vmax.xlane.f32.xlu0 %v3489
    %v3491 = vpop.xlane.xlu0 %3490
    %v3492 = vsel %vm615, %v3469, -inf
    %3493 = vmax.xlane.f32.xlu0 %v3492
    %v3494 = vpop.xlane.xlu0 %3493
    %v3495 = vsel %vm615, %v3472, -inf
    %3496 = vmax.xlane.f32.xlu0 %v3495
    %v3497 = vpop.xlane.xlu0 %3496
    %v3498 = vsub.f32 %v3451, %v3476
    %v3499 = vsub.f32 %v3454, %v3479
    %v3500 = vsub.f32 %v3457, %v3482
    %v3501 = vsub.f32 %v3460, %v3485
    %v3502 = vsub.f32 %v3463, %v3488
    %v3503 = vsub.f32 %v3466, %v3491
    %v3504 = vsub.f32 %v3469, %v3494
    %v3505 = vsub.f32 %v3472, %v3497
    %v3506 = vmul.f32 %v3498, 1.442695
    %v3507 = vpow.pop %v3506
    %v3508 = vmul.f32 %v3499, 1.442695
    %v3509 = vpow.pop %v3508
    %v3510 = vmul.f32 %v3500, 1.442695
    %v3511 = vpow.pop %v3510
    %v3512 = vmul.f32 %v3501, 1.442695
    %v3513 = vpow.pop %v3512
    %v3514 = vmul.f32 %v3502, 1.442695
    %v3515 = vpow.pop %v3514
    %v3516 = vmul.f32 %v3503, 1.442695
    %v3517 = vpow.pop %v3516
    %v3518 = vmul.f32 %v3504, 1.442695
    %v3519 = vpow.pop %v3518
    %v3520 = vmul.f32 %v3505, 1.442695
    %v3521 = vpow.pop %v3520
    %v3523 = vsel %vm615, %v3507, 0
    %v3526 = vsel %vm615, %v3509, 0
    %v3529 = vsel %vm615, %v3511, 0
    %v3532 = vsel %vm615, %v3513, 0
    %v3535 = vsel %vm615, %v3515, 0
    %v3538 = vsel %vm615, %v3517, 0
    %v3541 = vsel %vm615, %v3519, 0
    %v3544 = vsel %vm615, %v3521, 0
    %3546 = vmatpush.msra.mxu0 0.0
    %3547 = vmatpush.msra.mxu0 0.0
    %3548 = vmatpush.msra.mxu0 0.0
    %3549 = vmatpush.msra.mxu0 0.0
    %3550 = vmatpush.msra.mxu0 0.0
    %3551 = vmatpush.msra.mxu0 0.0
    %3552 = vmatpush.msra.mxu0 0.0
    %3553 = vmatpush.msra.mxu0 0.0
    %3554 = vmatpush.msra.mxu0 %v304
    %3555 = vmatpush.msra.mxu0 %v303
    %3556 = vmatpush.msra.mxu0 %v302
    %3557 = vmatpush.msra.mxu0 %v301
    %3558 = vmatpush.msra.mxu0 %v300
    %3559 = vmatpush.msra.mxu0 %v299
    %3560 = vmatpush.msra.mxu0 %v298
    %3561 = vmatpush.msra.mxu0 %v297
    %3562 = vmatmul.f32.gmra.mxu0 %v3523
    %v3563 = vpop.f32.mrf.mxu0
    %v3564 = vadd.f32 0.0, %v3563
    %3565 = vmatmul.f32.gmra.mxu0 %v3526
    %v3566 = vpop.f32.mrf.mxu0
    %v3567 = vadd.f32 0.0, %v3566
    %3568 = vmatmul.f32.gmra.mxu0 %v3529
    %v3569 = vpop.f32.mrf.mxu0
    %v3570 = vadd.f32 0.0, %v3569
    %3571 = vmatmul.f32.gmra.mxu0 %v3532
    %v3572 = vpop.f32.mrf.mxu0
    %v3573 = vadd.f32 0.0, %v3572
    %3574 = vmatmul.f32.gmra.mxu0 %v3535
    %v3575 = vpop.f32.mrf.mxu0
    %v3576 = vadd.f32 0.0, %v3575
    %3577 = vmatmul.f32.gmra.mxu0 %v3538
    %v3578 = vpop.f32.mrf.mxu0
    %v3579 = vadd.f32 0.0, %v3578
    %3580 = vmatmul.f32.gmra.mxu0 %v3541
    %v3581 = vpop.f32.mrf.mxu0
    %v3582 = vadd.f32 0.0, %v3581
    %3583 = vmatmul.f32.gmra.mxu0 %v3544
    %v3584 = vpop.f32.mrf.mxu0
    %v3585 = vadd.f32 0.0, %v3584
    %3586 = vdwg.mxu0
    %v3587 = vrcp.pop %v3564
    %v3588 = vmul.f32 %v3564, %v3587
    %v3589 = vsub.f32 1.0, %v3588
    %v3590 = vmul.f32 %v3587, %v3589
    %v3591 = vadd.f32 %v3587, %v3590
    %vm3592 = vweird.f32 %v3564
    %vm3593 = vweird.f32 %v3587
    %vm3594 = vmor %vm3592, %vm3593
    %v3595 = vsel %vm3594, %v3587, %v3591
    %v3596 = vand.u32 2147483647, %v3564
    %vm3597 = vcmp.eq.f32.partialorder %v3596, 8.507059e+37
    %v3598 = vand.u32 %v3564, 2147483648
    %v3599 = vor.u32 1.1754944e-38, %v3598
    %v3600 = vsel %vm3597, %v3599, %v3595
    %v3601 = vmul.f32 %v3507, %v3600
    %v3602 = vrcp.pop %v3567
    %v3603 = vmul.f32 %v3567, %v3602
    %v3604 = vsub.f32 1.0, %v3603
    %v3605 = vmul.f32 %v3602, %v3604
    %v3606 = vadd.f32 %v3602, %v3605
    %vm3607 = vweird.f32 %v3567
    %vm3608 = vweird.f32 %v3602
    %vm3609 = vmor %vm3607, %vm3608
    %v3610 = vsel %vm3609, %v3602, %v3606
    %v3611 = vand.u32 2147483647, %v3567
    %vm3612 = vcmp.eq.f32.partialorder %v3611, 8.507059e+37
    %v3613 = vand.u32 %v3567, 2147483648
    %v3614 = vor.u32 1.1754944e-38, %v3613
    %v3615 = vsel %vm3612, %v3614, %v3610
    %v3616 = vmul.f32 %v3509, %v3615
    %v3617 = vrcp.pop %v3570
    %v3618 = vmul.f32 %v3570, %v3617
    %v3619 = vsub.f32 1.0, %v3618
    %v3620 = vmul.f32 %v3617, %v3619
    %v3621 = vadd.f32 %v3617, %v3620
    %vm3622 = vweird.f32 %v3570
    %vm3623 = vweird.f32 %v3617
    %vm3624 = vmor %vm3622, %vm3623
    %v3625 = vsel %vm3624, %v3617, %v3621
    %v3626 = vand.u32 2147483647, %v3570
    %vm3627 = vcmp.eq.f32.partialorder %v3626, 8.507059e+37
    %v3628 = vand.u32 %v3570, 2147483648
    %v3629 = vor.u32 1.1754944e-38, %v3628
    %v3630 = vsel %vm3627, %v3629, %v3625
    %v3631 = vmul.f32 %v3511, %v3630
    %v3632 = vrcp.pop %v3573
    %v3633 = vmul.f32 %v3573, %v3632
    %v3634 = vsub.f32 1.0, %v3633
    %v3635 = vmul.f32 %v3632, %v3634
    %v3636 = vadd.f32 %v3632, %v3635
    %vm3637 = vweird.f32 %v3573
    %vm3638 = vweird.f32 %v3632
    %vm3639 = vmor %vm3637, %vm3638
    %v3640 = vsel %vm3639, %v3632, %v3636
    %v3641 = vand.u32 2147483647, %v3573
    %vm3642 = vcmp.eq.f32.partialorder %v3641, 8.507059e+37
    %v3643 = vand.u32 %v3573, 2147483648
    %v3644 = vor.u32 1.1754944e-38, %v3643
    %v3645 = vsel %vm3642, %v3644, %v3640
    %v3646 = vmul.f32 %v3513, %v3645
    %v3647 = vrcp.pop %v3576
    %v3648 = vmul.f32 %v3576, %v3647
    %v3649 = vsub.f32 1.0, %v3648
    %v3650 = vmul.f32 %v3647, %v3649
    %v3651 = vadd.f32 %v3647, %v3650
    %vm3652 = vweird.f32 %v3576
    %vm3653 = vweird.f32 %v3647
    %vm3654 = vmor %vm3652, %vm3653
    %v3655 = vsel %vm3654, %v3647, %v3651
    %v3656 = vand.u32 2147483647, %v3576
    %vm3657 = vcmp.eq.f32.partialorder %v3656, 8.507059e+37
    %v3658 = vand.u32 %v3576, 2147483648
    %v3659 = vor.u32 1.1754944e-38, %v3658
    %v3660 = vsel %vm3657, %v3659, %v3655
    %v3661 = vmul.f32 %v3515, %v3660
    %v3662 = vrcp.pop %v3579
    %v3663 = vmul.f32 %v3579, %v3662
    %v3664 = vsub.f32 1.0, %v3663
    %v3665 = vmul.f32 %v3662, %v3664
    %v3666 = vadd.f32 %v3662, %v3665
    %vm3667 = vweird.f32 %v3579
    %vm3668 = vweird.f32 %v3662
    %vm3669 = vmor %vm3667, %vm3668
    %v3670 = vsel %vm3669, %v3662, %v3666
    %v3671 = vand.u32 2147483647, %v3579
    %vm3672 = vcmp.eq.f32.partialorder %v3671, 8.507059e+37
    %v3673 = vand.u32 %v3579, 2147483648
    %v3674 = vor.u32 1.1754944e-38, %v3673
    %v3675 = vsel %vm3672, %v3674, %v3670
    %v3676 = vmul.f32 %v3517, %v3675
    %v3677 = vrcp.pop %v3582
    %v3678 = vmul.f32 %v3582, %v3677
    %v3679 = vsub.f32 1.0, %v3678
    %v3680 = vmul.f32 %v3677, %v3679
    %v3681 = vadd.f32 %v3677, %v3680
    %vm3682 = vweird.f32 %v3582
    %vm3683 = vweird.f32 %v3677
    %vm3684 = vmor %vm3682, %vm3683
    %v3685 = vsel %vm3684, %v3677, %v3681
    %v3686 = vand.u32 2147483647, %v3582
    %vm3687 = vcmp.eq.f32.partialorder %v3686, 8.507059e+37
    %v3688 = vand.u32 %v3582, 2147483648
    %v3689 = vor.u32 1.1754944e-38, %v3688
    %v3690 = vsel %vm3687, %v3689, %v3685
    %v3691 = vmul.f32 %v3519, %v3690
    %v3692 = vrcp.pop %v3585
    %v3693 = vmul.f32 %v3585, %v3692
    %v3694 = vsub.f32 1.0, %v3693
    %v3695 = vmul.f32 %v3692, %v3694
    %v3696 = vadd.f32 %v3692, %v3695
    %vm3697 = vweird.f32 %v3585
    %vm3698 = vweird.f32 %v3692
    %vm3699 = vmor %vm3697, %vm3698
    %v3700 = vsel %vm3699, %v3692, %v3696
    %v3701 = vand.u32 2147483647, %v3585
    %vm3702 = vcmp.eq.f32.partialorder %v3701, 8.507059e+37
    %v3703 = vand.u32 %v3585, 2147483648
    %v3704 = vor.u32 1.1754944e-38, %v3703
    %v3705 = vsel %vm3702, %v3704, %v3700
    %v3706 = vmul.f32 %v3521, %v3705
    %3707 = vrot.lane.b32.xlu0 %v3369, 96
    %v3708 = vpop.permute.xlu0 %3707
    %3709 = vrot.lane.b32.xlu0 %v3370, 96
    %v3710 = vpop.permute.xlu0 %3709
    %3711 = vrot.lane.b32.xlu0 %v3371, 96
    %v3712 = vpop.permute.xlu0 %3711
    %3713 = vrot.lane.b32.xlu0 %v3372, 96
    %v3714 = vpop.permute.xlu0 %3713
    %3715 = vrot.lane.b32.xlu0 %v3373, 96
    %v3716 = vpop.permute.xlu0 %3715
    %3717 = vrot.lane.b32.xlu0 %v3374, 96
    %v3718 = vpop.permute.xlu0 %3717
    %3719 = vrot.lane.b32.xlu0 %v3375, 96
    %v3720 = vpop.permute.xlu0 %3719
    %3721 = vrot.lane.b32.xlu0 %v3376, 96
    %v3722 = vpop.permute.xlu0 %3721
    %v3732 = vsel %vm615, %v3601, 0
    %v3735 = vsel %vm615, %v3616, 0
    %v3738 = vsel %vm615, %v3631, 0
    %v3741 = vsel %vm615, %v3646, 0
    %v3744 = vsel %vm615, %v3661, 0
    %v3747 = vsel %vm615, %v3676, 0
    %v3750 = vsel %vm615, %v3691, 0
    %v3753 = vsel %vm615, %v3706, 0
    %3755 = vmatpush.msra.mxu0 0.0
    %3756 = vmatpush.msra.mxu0 0.0
    %3757 = vmatpush.msra.mxu0 0.0
    %3758 = vmatpush.msra.mxu0 0.0
    %3759 = vmatpush.msra.mxu0 0.0
    %3760 = vmatpush.msra.mxu0 0.0
    %3761 = vmatpush.msra.mxu0 0.0
    %3762 = vmatpush.msra.mxu0 0.0
    %3763 = vmatpush.msra.mxu0 %v3722
    %3764 = vmatpush.msra.mxu0 %v3720
    %3765 = vmatpush.msra.mxu0 %v3718
    %3766 = vmatpush.msra.mxu0 %v3716
    %3767 = vmatpush.msra.mxu0 %v3714
    %3768 = vmatpush.msra.mxu0 %v3712
    %3769 = vmatpush.msra.mxu0 %v3710
    %3770 = vmatpush.msra.mxu0 %v3708
    %3771 = vmatmul.f32.gmra.mxu0 %v3732
    %v3772 = vpop.f32.mrf.mxu0
    %v3773 = vadd.f32 0.0, %v3772
    %3774 = vmatmul.f32.gmra.mxu0 %v3735
    %v3775 = vpop.f32.mrf.mxu0
    %v3776 = vadd.f32 0.0, %v3775
    %3777 = vmatmul.f32.gmra.mxu0 %v3738
    %v3778 = vpop.f32.mrf.mxu0
    %v3779 = vadd.f32 0.0, %v3778
    %3780 = vmatmul.f32.gmra.mxu0 %v3741
    %v3781 = vpop.f32.mrf.mxu0
    %v3782 = vadd.f32 0.0, %v3781
    %3783 = vmatmul.f32.gmra.mxu0 %v3744
    %v3784 = vpop.f32.mrf.mxu0
    %v3785 = vadd.f32 0.0, %v3784
    %3786 = vmatmul.f32.gmra.mxu0 %v3747
    %v3787 = vpop.f32.mrf.mxu0
    %v3788 = vadd.f32 0.0, %v3787
    %3789 = vmatmul.f32.gmra.mxu0 %v3750
    %v3790 = vpop.f32.mrf.mxu0
    %v3791 = vadd.f32 0.0, %v3790
    %3792 = vmatmul.f32.gmra.mxu0 %v3753
    %v3793 = vpop.f32.mrf.mxu0
    %v3794 = vadd.f32 0.0, %v3793
    %3795 = vdwg.mxu0
    %v3796 = vadd.f32 %v2534, %v3773
    %v3797 = vadd.f32 %v2535, %v3776
    %v3798 = vadd.f32 %v2536, %v3779
    %v3799 = vadd.f32 %v2537, %v3782
    %v3800 = vadd.f32 %v2538, %v3785
    %v3801 = vadd.f32 %v2539, %v3788
    %v3802 = vadd.f32 %v2540, %v3791
    %v3803 = vadd.f32 %v2541, %v3794
    %v3804 = vsel %vm348, %v3796, 0.0
    %3805 = vadd.xlane.f32.xlu0 %v3804
    %v3806 = vpop.xlane.xlu0 %3805
    %v3807 = vsel %vm348, %v3797, 0.0
    %3808 = vadd.xlane.f32.xlu0 %v3807
    %v3809 = vpop.xlane.xlu0 %3808
    %v3810 = vsel %vm348, %v3798, 0.0
    %3811 = vadd.xlane.f32.xlu0 %v3810
    %v3812 = vpop.xlane.xlu0 %3811
    %v3813 = vsel %vm348, %v3799, 0.0
    %3814 = vadd.xlane.f32.xlu0 %v3813
    %v3815 = vpop.xlane.xlu0 %3814
    %v3816 = vsel %vm348, %v3800, 0.0
    %3817 = vadd.xlane.f32.xlu0 %v3816
    %v3818 = vpop.xlane.xlu0 %3817
    %v3819 = vsel %vm348, %v3801, 0.0
    %3820 = vadd.xlane.f32.xlu0 %v3819
    %v3821 = vpop.xlane.xlu0 %3820
    %v3822 = vsel %vm348, %v3802, 0.0
    %3823 = vadd.xlane.f32.xlu0 %v3822
    %v3824 = vpop.xlane.xlu0 %3823
    %v3825 = vsel %vm348, %v3803, 0.0
    %3826 = vadd.xlane.f32.xlu0 %v3825
    %v3827 = vpop.xlane.xlu0 %3826
    %v3828 = vmul.f32 %v3806, %v379
    %v3829 = vmul.f32 %v3809, %v379
    %v3830 = vmul.f32 %v3812, %v379
    %v3831 = vmul.f32 %v3815, %v379
    %v3832 = vmul.f32 %v3818, %v379
    %v3833 = vmul.f32 %v3821, %v379
    %v3834 = vmul.f32 %v3824, %v379
    %v3835 = vmul.f32 %v3827, %v379
    %v3836 = vsub.f32 %v3796, %v3828
    %v3837 = vsub.f32 %v3797, %v3829
    %v3838 = vsub.f32 %v3798, %v3830
    %v3839 = vsub.f32 %v3799, %v3831
    %v3840 = vsub.f32 %v3800, %v3832
    %v3841 = vsub.f32 %v3801, %v3833
    %v3842 = vsub.f32 %v3802, %v3834
    %v3843 = vsub.f32 %v3803, %v3835
    %v3844 = vmul.f32 %v3836, %v3836
    %v3845 = vmul.f32 %v3837, %v3837
    %v3846 = vmul.f32 %v3838, %v3838
    %v3847 = vmul.f32 %v3839, %v3839
    %v3848 = vmul.f32 %v3840, %v3840
    %v3849 = vmul.f32 %v3841, %v3841
    %v3850 = vmul.f32 %v3842, %v3842
    %v3851 = vmul.f32 %v3843, %v3843
    %v3852 = vsel %vm348, %v3844, 0.0
    %3853 = vadd.xlane.f32.xlu0 %v3852
    %v3854 = vpop.xlane.xlu0 %3853
    %v3855 = vsel %vm348, %v3845, 0.0
    %3856 = vadd.xlane.f32.xlu0 %v3855
    %v3857 = vpop.xlane.xlu0 %3856
    %v3858 = vsel %vm348, %v3846, 0.0
    %3859 = vadd.xlane.f32.xlu0 %v3858
    %v3860 = vpop.xlane.xlu0 %3859
    %v3861 = vsel %vm348, %v3847, 0.0
    %3862 = vadd.xlane.f32.xlu0 %v3861
    %v3863 = vpop.xlane.xlu0 %3862
    %v3864 = vsel %vm348, %v3848, 0.0
    %3865 = vadd.xlane.f32.xlu0 %v3864
    %v3866 = vpop.xlane.xlu0 %3865
    %v3867 = vsel %vm348, %v3849, 0.0
    %3868 = vadd.xlane.f32.xlu0 %v3867
    %v3869 = vpop.xlane.xlu0 %3868
    %v3870 = vsel %vm348, %v3850, 0.0
    %3871 = vadd.xlane.f32.xlu0 %v3870
    %v3872 = vpop.xlane.xlu0 %3871
    %v3873 = vsel %vm348, %v3851, 0.0
    %3874 = vadd.xlane.f32.xlu0 %v3873
    %v3875 = vpop.xlane.xlu0 %3874
    %v3876 = vmul.f32 %v3854, %v379
    %v3877 = vmul.f32 %v3857, %v379
    %v3878 = vmul.f32 %v3860, %v379
    %v3879 = vmul.f32 %v3863, %v379
    %v3880 = vmul.f32 %v3866, %v379
    %v3881 = vmul.f32 %v3869, %v379
    %v3882 = vmul.f32 %v3872, %v379
    %v3883 = vmul.f32 %v3875, %v379
    %v3884 = vadd.f32 %v3876, 1e-05
    %v3885 = vadd.f32 %v3877, 1e-05
    %v3886 = vadd.f32 %v3878, 1e-05
    %v3887 = vadd.f32 %v3879, 1e-05
    %v3888 = vadd.f32 %v3880, 1e-05
    %v3889 = vadd.f32 %v3881, 1e-05
    %v3890 = vadd.f32 %v3882, 1e-05
    %v3891 = vadd.f32 %v3883, 1e-05
    %v3892 = vrsqrt.pop %v3884
    %v3893 = vmul.f32 %v3892, %v3884
    %v3894 = vmul.f32 %v3893, %v3892
    %v3895 = vmul.f32 0.5, %v3894
    %v3896 = vsub.f32 1.5, %v3895
    %v3897 = vmul.f32 %v3892, %v3896
    %vm3898 = vweird.f32 %v3884
    %vm3899 = vweird.f32 %v3892
    %vm3900 = vmor %vm3898, %vm3899
    %v3901 = vsel %vm3900, %v3892, %v3897
    %v3902 = vrsqrt.pop %v3885
    %v3903 = vmul.f32 %v3902, %v3885
    %v3904 = vmul.f32 %v3903, %v3902
    %v3905 = vmul.f32 0.5, %v3904
    %v3906 = vsub.f32 1.5, %v3905
    %v3907 = vmul.f32 %v3902, %v3906
    %vm3908 = vweird.f32 %v3885
    %vm3909 = vweird.f32 %v3902
    %vm3910 = vmor %vm3908, %vm3909
    %v3911 = vsel %vm3910, %v3902, %v3907
    %v3912 = vrsqrt.pop %v3886
    %v3913 = vmul.f32 %v3912, %v3886
    %v3914 = vmul.f32 %v3913, %v3912
    %v3915 = vmul.f32 0.5, %v3914
    %v3916 = vsub.f32 1.5, %v3915
    %v3917 = vmul.f32 %v3912, %v3916
    %vm3918 = vweird.f32 %v3886
    %vm3919 = vweird.f32 %v3912
    %vm3920 = vmor %vm3918, %vm3919
    %v3921 = vsel %vm3920, %v3912, %v3917
    %v3922 = vrsqrt.pop %v3887
    %v3923 = vmul.f32 %v3922, %v3887
    %v3924 = vmul.f32 %v3923, %v3922
    %v3925 = vmul.f32 0.5, %v3924
    %v3926 = vsub.f32 1.5, %v3925
    %v3927 = vmul.f32 %v3922, %v3926
    %vm3928 = vweird.f32 %v3887
    %vm3929 = vweird.f32 %v3922
    %vm3930 = vmor %vm3928, %vm3929
    %v3931 = vsel %vm3930, %v3922, %v3927
    %v3932 = vrsqrt.pop %v3888
    %v3933 = vmul.f32 %v3932, %v3888
    %v3934 = vmul.f32 %v3933, %v3932
    %v3935 = vmul.f32 0.5, %v3934
    %v3936 = vsub.f32 1.5, %v3935
    %v3937 = vmul.f32 %v3932, %v3936
    %vm3938 = vweird.f32 %v3888
    %vm3939 = vweird.f32 %v3932
    %vm3940 = vmor %vm3938, %vm3939
    %v3941 = vsel %vm3940, %v3932, %v3937
    %v3942 = vrsqrt.pop %v3889
    %v3943 = vmul.f32 %v3942, %v3889
    %v3944 = vmul.f32 %v3943, %v3942
    %v3945 = vmul.f32 0.5, %v3944
    %v3946 = vsub.f32 1.5, %v3945
    %v3947 = vmul.f32 %v3942, %v3946
    %vm3948 = vweird.f32 %v3889
    %vm3949 = vweird.f32 %v3942
    %vm3950 = vmor %vm3948, %vm3949
    %v3951 = vsel %vm3950, %v3942, %v3947
    %v3952 = vrsqrt.pop %v3890
    %v3953 = vmul.f32 %v3952, %v3890
    %v3954 = vmul.f32 %v3953, %v3952
    %v3955 = vmul.f32 0.5, %v3954
    %v3956 = vsub.f32 1.5, %v3955
    %v3957 = vmul.f32 %v3952, %v3956
    %vm3958 = vweird.f32 %v3890
    %vm3959 = vweird.f32 %v3952
    %vm3960 = vmor %vm3958, %vm3959
    %v3961 = vsel %vm3960, %v3952, %v3957
    %v3962 = vrsqrt.pop %v3891
    %v3963 = vmul.f32 %v3962, %v3891
    %v3964 = vmul.f32 %v3963, %v3962
    %v3965 = vmul.f32 0.5, %v3964
    %v3966 = vsub.f32 1.5, %v3965
    %v3967 = vmul.f32 %v3962, %v3966
    %vm3968 = vweird.f32 %v3891
    %vm3969 = vweird.f32 %v3962
    %vm3970 = vmor %vm3968, %vm3969
    %v3971 = vsel %vm3970, %v3962, %v3967
    %v3972 = vmul.f32 %v3836, %v3901
    %v3973 = vmul.f32 %v3837, %v3911
    %v3974 = vmul.f32 %v3838, %v3921
    %v3975 = vmul.f32 %v3839, %v3931
    %v3976 = vmul.f32 %v3840, %v3941
    %v3977 = vmul.f32 %v3841, %v3951
    %v3978 = vmul.f32 %v3842, %v3961
    %v3979 = vmul.f32 %v3843, %v3971
    %v3980 = vmul.f32 %v3972, %v2043
    %v3981 = vmul.f32 %v3973, %v2043
    %v3982 = vmul.f32 %v3974, %v2043
    %v3983 = vmul.f32 %v3975, %v2043
    %v3984 = vmul.f32 %v3976, %v2043
    %v3985 = vmul.f32 %v3977, %v2043
    %v3986 = vmul.f32 %v3978, %v2043
    %v3987 = vmul.f32 %v3979, %v2043
    %v3988 = vadd.f32 %v3980, %v2052
    %v3989 = vadd.f32 %v3981, %v2052
    %v3990 = vadd.f32 %v3982, %v2052
    %v3991 = vadd.f32 %v3983, %v2052
    %v3992 = vadd.f32 %v3984, %v2052
    %v3993 = vadd.f32 %v3985, %v2052
    %v3994 = vadd.f32 %v3986, %v2052
    %v3995 = vadd.f32 %v3987, %v2052
    %v3997 = vsel %vm348, %v3988, 0
    %v4000 = vsel %vm348, %v3989, 0
    %v4003 = vsel %vm348, %v3990, 0
    %v4006 = vsel %vm348, %v3991, 0
    %v4009 = vsel %vm348, %v3992, 0
    %v4012 = vsel %vm348, %v3993, 0
    %v4015 = vsel %vm348, %v3994, 0
    %v4018 = vsel %vm348, %v3995, 0
    %4020 = vmatpush.msra.mxu0 0.0
    %4021 = vmatpush.msra.mxu0 0.0
    %4022 = vmatpush.msra.mxu0 0.0
    %4023 = vmatpush.msra.mxu0 0.0
    %4024 = vmatpush.msra.mxu0 0.0
    %4025 = vmatpush.msra.mxu0 0.0
    %4026 = vmatpush.msra.mxu0 0.0
    %4027 = vmatpush.msra.mxu0 0.0
    %4028 = vmatpush.msra.mxu0 0.0
    %4029 = vmatpush.msra.mxu0 0.0
    %4030 = vmatpush.msra.mxu0 0.0
    %4031 = vmatpush.msra.mxu0 0.0
    %4032 = vmatpush.msra.mxu0 %v329
    %4033 = vmatpush.msra.mxu0 %v328
    %4034 = vmatpush.msra.mxu0 %v327
    %4035 = vmatpush.msra.mxu0 %v326
    %4036 = vmatmul.f32.gmra.mxu0 %v3997
    %v4037 = vpop.f32.mrf.mxu0
    %v4038 = vadd.f32 %v2062, %v4037
    %4039 = vmatmul.f32.gmra.mxu0 %v4000
    %v4040 = vpop.f32.mrf.mxu0
    %v4041 = vadd.f32 %v2062, %v4040
    %4042 = vmatmul.f32.gmra.mxu0 %v4003
    %v4043 = vpop.f32.mrf.mxu0
    %v4044 = vadd.f32 %v2062, %v4043
    %4045 = vmatmul.f32.gmra.mxu0 %v4006
    %v4046 = vpop.f32.mrf.mxu0
    %v4047 = vadd.f32 %v2062, %v4046
    %4048 = vmatmul.f32.gmra.mxu0 %v4009
    %v4049 = vpop.f32.mrf.mxu0
    %v4050 = vadd.f32 %v2062, %v4049
    %4051 = vmatmul.f32.gmra.mxu0 %v4012
    %v4052 = vpop.f32.mrf.mxu0
    %v4053 = vadd.f32 %v2062, %v4052
    %4054 = vmatmul.f32.gmra.mxu0 %v4015
    %v4055 = vpop.f32.mrf.mxu0
    %v4056 = vadd.f32 %v2062, %v4055
    %4057 = vmatmul.f32.gmra.mxu0 %v4018
    %v4058 = vpop.f32.mrf.mxu0
    %v4059 = vadd.f32 %v2062, %v4058
    %4060 = vdwg.mxu0
    %v4061 = vmul.f32 %v4038, 0.5
    %v4062 = vmul.f32 %v4041, 0.5
    %v4063 = vmul.f32 %v4044, 0.5
    %v4064 = vmul.f32 %v4047, 0.5
    %v4065 = vmul.f32 %v4050, 0.5
    %v4066 = vmul.f32 %v4053, 0.5
    %v4067 = vmul.f32 %v4056, 0.5
    %v4068 = vmul.f32 %v4059, 0.5
    %v4069 = vmul.f32 %v4038, 0.70710677
    %v4070 = vmul.f32 %v4041, 0.70710677
    %v4071 = vmul.f32 %v4044, 0.70710677
    %v4072 = vmul.f32 %v4047, 0.70710677
    %v4073 = vmul.f32 %v4050, 0.70710677
    %v4074 = vmul.f32 %v4053, 0.70710677
    %v4075 = vmul.f32 %v4056, 0.70710677
    %v4076 = vmul.f32 %v4059, 0.70710677
    %vm4077 = vcmp.ge.f32.partialorder %v4069, 0.0
    %vm4078 = vcmp.ge.f32.partialorder %v4070, 0.0
    %vm4079 = vcmp.ge.f32.partialorder %v4071, 0.0
    %vm4080 = vcmp.ge.f32.partialorder %v4072, 0.0
    %vm4081 = vcmp.ge.f32.partialorder %v4073, 0.0
    %vm4082 = vcmp.ge.f32.partialorder %v4074, 0.0
    %vm4083 = vcmp.ge.f32.partialorder %v4075, 0.0
    %vm4084 = vcmp.ge.f32.partialorder %v4076, 0.0
    %v4085 = vsel %vm4077, 1.0, -1.0
    %v4086 = vsel %vm4078, 1.0, -1.0
    %v4087 = vsel %vm4079, 1.0, -1.0
    %v4088 = vsel %vm4080, 1.0, -1.0
    %v4089 = vsel %vm4081, 1.0, -1.0
    %v4090 = vsel %vm4082, 1.0, -1.0
    %v4091 = vsel %vm4083, 1.0, -1.0
    %v4092 = vsel %vm4084, 1.0, -1.0
    %v4093 = vand.u32 2147483647, %v4069
    %v4094 = vand.u32 2147483647, %v4070
    %v4095 = vand.u32 2147483647, %v4071
    %v4096 = vand.u32 2147483647, %v4072
    %v4097 = vand.u32 2147483647, %v4073
    %v4098 = vand.u32 2147483647, %v4074
    %v4099 = vand.u32 2147483647, %v4075
    %v4100 = vand.u32 2147483647, %v4076
    %v4101 = vmul.f32 %v4093, 0.3275911
    %v4102 = vmul.f32 %v4094, 0.3275911
    %v4103 = vmul.f32 %v4095, 0.3275911
    %v4104 = vmul.f32 %v4096, 0.3275911
    %v4105 = vmul.f32 %v4097, 0.3275911
    %v4106 = vmul.f32 %v4098, 0.3275911
    %v4107 = vmul.f32 %v4099, 0.3275911
    %v4108 = vmul.f32 %v4100, 0.3275911
    %v4109 = vadd.f32 %v4101, 1.0
    %v4110 = vadd.f32 %v4102, 1.0
    %v4111 = vadd.f32 %v4103, 1.0
    %v4112 = vadd.f32 %v4104, 1.0
    %v4113 = vadd.f32 %v4105, 1.0
    %v4114 = vadd.f32 %v4106, 1.0
    %v4115 = vadd.f32 %v4107, 1.0
    %v4116 = vadd.f32 %v4108, 1.0
    %v4117 = vrcp.pop %v4109
    %v4118 = vmul.f32 %v4109, %v4117
    %v4119 = vsub.f32 1.0, %v4118
    %v4120 = vmul.f32 %v4117, %v4119
    %v4121 = vadd.f32 %v4117, %v4120
    %vm4122 = vweird.f32 %v4109
    %vm4123 = vweird.f32 %v4117
    %vm4124 = vmor %vm4122, %vm4123
    %v4125 = vsel %vm4124, %v4117, %v4121
    %v4126 = vand.u32 2147483647, %v4109
    %vm4127 = vcmp.eq.f32.partialorder %v4126, 8.507059e+37
    %v4128 = vand.u32 %v4109, 2147483648
    %v4129 = vor.u32 1.1754944e-38, %v4128
    %v4130 = vsel %vm4127, %v4129, %v4125
    %v4131 = vmul.f32 1.0, %v4130
    %v4132 = vrcp.pop %v4110
    %v4133 = vmul.f32 %v4110, %v4132
    %v4134 = vsub.f32 1.0, %v4133
    %v4135 = vmul.f32 %v4132, %v4134
    %v4136 = vadd.f32 %v4132, %v4135
    %vm4137 = vweird.f32 %v4110
    %vm4138 = vweird.f32 %v4132
    %vm4139 = vmor %vm4137, %vm4138
    %v4140 = vsel %vm4139, %v4132, %v4136
    %v4141 = vand.u32 2147483647, %v4110
    %vm4142 = vcmp.eq.f32.partialorder %v4141, 8.507059e+37
    %v4143 = vand.u32 %v4110, 2147483648
    %v4144 = vor.u32 1.1754944e-38, %v4143
    %v4145 = vsel %vm4142, %v4144, %v4140
    %v4146 = vmul.f32 1.0, %v4145
    %v4147 = vrcp.pop %v4111
    %v4148 = vmul.f32 %v4111, %v4147
    %v4149 = vsub.f32 1.0, %v4148
    %v4150 = vmul.f32 %v4147, %v4149
    %v4151 = vadd.f32 %v4147, %v4150
    %vm4152 = vweird.f32 %v4111
    %vm4153 = vweird.f32 %v4147
    %vm4154 = vmor %vm4152, %vm4153
    %v4155 = vsel %vm4154, %v4147, %v4151
    %v4156 = vand.u32 2147483647, %v4111
    %vm4157 = vcmp.eq.f32.partialorder %v4156, 8.507059e+37
    %v4158 = vand.u32 %v4111, 2147483648
    %v4159 = vor.u32 1.1754944e-38, %v4158
    %v4160 = vsel %vm4157, %v4159, %v4155
    %v4161 = vmul.f32 1.0, %v4160
    %v4162 = vrcp.pop %v4112
    %v4163 = vmul.f32 %v4112, %v4162
    %v4164 = vsub.f32 1.0, %v4163
    %v4165 = vmul.f32 %v4162, %v4164
    %v4166 = vadd.f32 %v4162, %v4165
    %vm4167 = vweird.f32 %v4112
    %vm4168 = vweird.f32 %v4162
    %vm4169 = vmor %vm4167, %vm4168
    %v4170 = vsel %vm4169, %v4162, %v4166
    %v4171 = vand.u32 2147483647, %v4112
    %vm4172 = vcmp.eq.f32.partialorder %v4171, 8.507059e+37
    %v4173 = vand.u32 %v4112, 2147483648
    %v4174 = vor.u32 1.1754944e-38, %v4173
    %v4175 = vsel %vm4172, %v4174, %v4170
    %v4176 = vmul.f32 1.0, %v4175
    %v4177 = vrcp.pop %v4113
    %v4178 = vmul.f32 %v4113, %v4177
    %v4179 = vsub.f32 1.0, %v4178
    %v4180 = vmul.f32 %v4177, %v4179
    %v4181 = vadd.f32 %v4177, %v4180
    %vm4182 = vweird.f32 %v4113
    %vm4183 = vweird.f32 %v4177
    %vm4184 = vmor %vm4182, %vm4183
    %v4185 = vsel %vm4184, %v4177, %v4181
    %v4186 = vand.u32 2147483647, %v4113
    %vm4187 = vcmp.eq.f32.partialorder %v4186, 8.507059e+37
    %v4188 = vand.u32 %v4113, 2147483648
    %v4189 = vor.u32 1.1754944e-38, %v4188
    %v4190 = vsel %vm4187, %v4189, %v4185
    %v4191 = vmul.f32 1.0, %v4190
    %v4192 = vrcp.pop %v4114
    %v4193 = vmul.f32 %v4114, %v4192
    %v4194 = vsub.f32 1.0, %v4193
    %v4195 = vmul.f32 %v4192, %v4194
    %v4196 = vadd.f32 %v4192, %v4195
    %vm4197 = vweird.f32 %v4114
    %vm4198 = vweird.f32 %v4192
    %vm4199 = vmor %vm4197, %vm4198
    %v4200 = vsel %vm4199, %v4192, %v4196
    %v4201 = vand.u32 2147483647, %v4114
    %vm4202 = vcmp.eq.f32.partialorder %v4201, 8.507059e+37
    %v4203 = vand.u32 %v4114, 2147483648
    %v4204 = vor.u32 1.1754944e-38, %v4203
    %v4205 = vsel %vm4202, %v4204, %v4200
    %v4206 = vmul.f32 1.0, %v4205
    %v4207 = vrcp.pop %v4115
    %v4208 = vmul.f32 %v4115, %v4207
    %v4209 = vsub.f32 1.0, %v4208
    %v4210 = vmul.f32 %v4207, %v4209
    %v4211 = vadd.f32 %v4207, %v4210
    %vm4212 = vweird.f32 %v4115
    %vm4213 = vweird.f32 %v4207
    %vm4214 = vmor %vm4212, %vm4213
    %v4215 = vsel %vm4214, %v4207, %v4211
    %v4216 = vand.u32 2147483647, %v4115
    %vm4217 = vcmp.eq.f32.partialorder %v4216, 8.507059e+37
    %v4218 = vand.u32 %v4115, 2147483648
    %v4219 = vor.u32 1.1754944e-38, %v4218
    %v4220 = vsel %vm4217, %v4219, %v4215
    %v4221 = vmul.f32 1.0, %v4220
    %v4222 = vrcp.pop %v4116
    %v4223 = vmul.f32 %v4116, %v4222
    %v4224 = vsub.f32 1.0, %v4223
    %v4225 = vmul.f32 %v4222, %v4224
    %v4226 = vadd.f32 %v4222, %v4225
    %vm4227 = vweird.f32 %v4116
    %vm4228 = vweird.f32 %v4222
    %vm4229 = vmor %vm4227, %vm4228
    %v4230 = vsel %vm4229, %v4222, %v4226
    %v4231 = vand.u32 2147483647, %v4116
    %vm4232 = vcmp.eq.f32.partialorder %v4231, 8.507059e+37
    %v4233 = vand.u32 %v4116, 2147483648
    %v4234 = vor.u32 1.1754944e-38, %v4233
    %v4235 = vsel %vm4232, %v4234, %v4230
    %v4236 = vmul.f32 1.0, %v4235
    %v4237 = vmul.f32 %v4131, 1.0614054
    %v4238 = vmul.f32 %v4146, 1.0614054
    %v4239 = vmul.f32 %v4161, 1.0614054
    %v4240 = vmul.f32 %v4176, 1.0614054
    %v4241 = vmul.f32 %v4191, 1.0614054
    %v4242 = vmul.f32 %v4206, 1.0614054
    %v4243 = vmul.f32 %v4221, 1.0614054
    %v4244 = vmul.f32 %v4236, 1.0614054
    %v4245 = vadd.f32 %v4237, -1.4531521
    %v4246 = vadd.f32 %v4238, -1.4531521
    %v4247 = vadd.f32 %v4239, -1.4531521
    %v4248 = vadd.f32 %v4240, -1.4531521
    %v4249 = vadd.f32 %v4241, -1.4531521
    %v4250 = vadd.f32 %v4242, -1.4531521
    %v4251 = vadd.f32 %v4243, -1.4531521
    %v4252 = vadd.f32 %v4244, -1.4531521
    %v4253 = vmul.f32 %v4245, %v4131
    %v4254 = vmul.f32 %v4246, %v4146
    %v4255 = vmul.f32 %v4247, %v4161
    %v4256 = vmul.f32 %v4248, %v4176
    %v4257 = vmul.f32 %v4249, %v4191
    %v4258 = vmul.f32 %v4250, %v4206
    %v4259 = vmul.f32 %v4251, %v4221
    %v4260 = vmul.f32 %v4252, %v4236
    %v4261 = vadd.f32 %v4253, 1.4214138
    %v4262 = vadd.f32 %v4254, 1.4214138
    %v4263 = vadd.f32 %v4255, 1.4214138
    %v4264 = vadd.f32 %v4256, 1.4214138
    %v4265 = vadd.f32 %v4257, 1.4214138
    %v4266 = vadd.f32 %v4258, 1.4214138
    %v4267 = vadd.f32 %v4259, 1.4214138
    %v4268 = vadd.f32 %v4260, 1.4214138
    %v4269 = vmul.f32 %v4261, %v4131
    %v4270 = vmul.f32 %v4262, %v4146
    %v4271 = vmul.f32 %v4263, %v4161
    %v4272 = vmul.f32 %v4264, %v4176
    %v4273 = vmul.f32 %v4265, %v4191
    %v4274 = vmul.f32 %v4266, %v4206
    %v4275 = vmul.f32 %v4267, %v4221
    %v4276 = vmul.f32 %v4268, %v4236
    %v4277 = vadd.f32 %v4269, -0.28449672
    %v4278 = vadd.f32 %v4270, -0.28449672
    %v4279 = vadd.f32 %v4271, -0.28449672
    %v4280 = vadd.f32 %v4272, -0.28449672
    %v4281 = vadd.f32 %v4273, -0.28449672
    %v4282 = vadd.f32 %v4274, -0.28449672
    %v4283 = vadd.f32 %v4275, -0.28449672
    %v4284 = vadd.f32 %v4276, -0.28449672
    %v4285 = vmul.f32 %v4277, %v4131
    %v4286 = vmul.f32 %v4278, %v4146
    %v4287 = vmul.f32 %v4279, %v4161
    %v4288 = vmul.f32 %v4280, %v4176
    %v4289 = vmul.f32 %v4281, %v4191
    %v4290 = vmul.f32 %v4282, %v4206
    %v4291 = vmul.f32 %v4283, %v4221
    %v4292 = vmul.f32 %v4284, %v4236
    %v4293 = vadd.f32 %v4285, 0.2548296
    %v4294 = vadd.f32 %v4286, 0.2548296
    %v4295 = vadd.f32 %v4287, 0.2548296
    %v4296 = vadd.f32 %v4288, 0.2548296
    %v4297 = vadd.f32 %v4289, 0.2548296
    %v4298 = vadd.f32 %v4290, 0.2548296
    %v4299 = vadd.f32 %v4291, 0.2548296
    %v4300 = vadd.f32 %v4292, 0.2548296
    %v4301 = vmul.f32 %v4293, %v4131
    %v4302 = vmul.f32 %v4294, %v4146
    %v4303 = vmul.f32 %v4295, %v4161
    %v4304 = vmul.f32 %v4296, %v4176
    %v4305 = vmul.f32 %v4297, %v4191
    %v4306 = vmul.f32 %v4298, %v4206
    %v4307 = vmul.f32 %v4299, %v4221
    %v4308 = vmul.f32 %v4300, %v4236
    %v4309 = vsub.f32 0.0, %v4093
    %v4310 = vsub.f32 0.0, %v4094
    %v4311 = vsub.f32 0.0, %v4095
    %v4312 = vsub.f32 0.0, %v4096
    %v4313 = vsub.f32 0.0, %v4097
    %v4314 = vsub.f32 0.0, %v4098
    %v4315 = vsub.f32 0.0, %v4099
    %v4316 = vsub.f32 0.0, %v4100
    %v4317 = vmul.f32 %v4309, %v4093
    %v4318 = vmul.f32 %v4310, %v4094
    %v4319 = vmul.f32 %v4311, %v4095
    %v4320 = vmul.f32 %v4312, %v4096
    %v4321 = vmul.f32 %v4313, %v4097
    %v4322 = vmul.f32 %v4314, %v4098
    %v4323 = vmul.f32 %v4315, %v4099
    %v4324 = vmul.f32 %v4316, %v4100
    %v4325 = vmul.f32 %v4317, 1.442695
    %v4326 = vpow.pop %v4325
    %v4327 = vmul.f32 %v4318, 1.442695
    %v4328 = vpow.pop %v4327
    %v4329 = vmul.f32 %v4319, 1.442695
    %v4330 = vpow.pop %v4329
    %v4331 = vmul.f32 %v4320, 1.442695
    %v4332 = vpow.pop %v4331
    %v4333 = vmul.f32 %v4321, 1.442695
    %v4334 = vpow.pop %v4333
    %v4335 = vmul.f32 %v4322, 1.442695
    %v4336 = vpow.pop %v4335
    %v4337 = vmul.f32 %v4323, 1.442695
    %v4338 = vpow.pop %v4337
    %v4339 = vmul.f32 %v4324, 1.442695
    %v4340 = vpow.pop %v4339
    %v4341 = vmul.f32 %v4301, %v4326
    %v4342 = vmul.f32 %v4302, %v4328
    %v4343 = vmul.f32 %v4303, %v4330
    %v4344 = vmul.f32 %v4304, %v4332
    %v4345 = vmul.f32 %v4305, %v4334
    %v4346 = vmul.f32 %v4306, %v4336
    %v4347 = vmul.f32 %v4307, %v4338
    %v4348 = vmul.f32 %v4308, %v4340
    %v4349 = vsub.f32 1.0, %v4341
    %v4350 = vsub.f32 1.0, %v4342
    %v4351 = vsub.f32 1.0, %v4343
    %v4352 = vsub.f32 1.0, %v4344
    %v4353 = vsub.f32 1.0, %v4345
    %v4354 = vsub.f32 1.0, %v4346
    %v4355 = vsub.f32 1.0, %v4347
    %v4356 = vsub.f32 1.0, %v4348
    %v4357 = vmul.f32 %v4085, %v4349
    %v4358 = vmul.f32 %v4086, %v4350
    %v4359 = vmul.f32 %v4087, %v4351
    %v4360 = vmul.f32 %v4088, %v4352
    %v4361 = vmul.f32 %v4089, %v4353
    %v4362 = vmul.f32 %v4090, %v4354
    %v4363 = vmul.f32 %v4091, %v4355
    %v4364 = vmul.f32 %v4092, %v4356
    %v4365 = vadd.f32 %v4357, 1.0
    %v4366 = vadd.f32 %v4358, 1.0
    %v4367 = vadd.f32 %v4359, 1.0
    %v4368 = vadd.f32 %v4360, 1.0
    %v4369 = vadd.f32 %v4361, 1.0
    %v4370 = vadd.f32 %v4362, 1.0
    %v4371 = vadd.f32 %v4363, 1.0
    %v4372 = vadd.f32 %v4364, 1.0
    %v4373 = vmul.f32 %v4061, %v4365
    %v4374 = vmul.f32 %v4062, %v4366
    %v4375 = vmul.f32 %v4063, %v4367
    %v4376 = vmul.f32 %v4064, %v4368
    %v4377 = vmul.f32 %v4065, %v4369
    %v4378 = vmul.f32 %v4066, %v4370
    %v4379 = vmul.f32 %v4067, %v4371
    %v4380 = vmul.f32 %v4068, %v4372
    %v4382 = vsel %vm615, %v4373, 0
    %v4385 = vsel %vm615, %v4374, 0
    %v4388 = vsel %vm615, %v4375, 0
    %v4391 = vsel %vm615, %v4376, 0
    %v4394 = vsel %vm615, %v4377, 0
    %v4397 = vsel %vm615, %v4378, 0
    %v4400 = vsel %vm615, %v4379, 0
    %v4403 = vsel %vm615, %v4380, 0
    %4405 = vmatpush.msra.mxu0 0.0
    %4406 = vmatpush.msra.mxu0 0.0
    %4407 = vmatpush.msra.mxu0 0.0
    %4408 = vmatpush.msra.mxu0 0.0
    %4409 = vmatpush.msra.mxu0 0.0
    %4410 = vmatpush.msra.mxu0 0.0
    %4411 = vmatpush.msra.mxu0 0.0
    %4412 = vmatpush.msra.mxu0 0.0
    %4413 = vmatpush.msra.mxu0 %v338
    %4414 = vmatpush.msra.mxu0 %v337
    %4415 = vmatpush.msra.mxu0 %v336
    %4416 = vmatpush.msra.mxu0 %v335
    %4417 = vmatpush.msra.mxu0 %v334
    %4418 = vmatpush.msra.mxu0 %v333
    %4419 = vmatpush.msra.mxu0 %v332
    %4420 = vmatpush.msra.mxu0 %v331
    %4421 = vmatmul.f32.gmra.mxu0 %v4382
    %v4422 = vpop.f32.mrf.mxu0
    %v4423 = vadd.f32 %v2450, %v4422
    %4424 = vmatmul.f32.gmra.mxu0 %v4385
    %v4425 = vpop.f32.mrf.mxu0
    %v4426 = vadd.f32 %v2450, %v4425
    %4427 = vmatmul.f32.gmra.mxu0 %v4388
    %v4428 = vpop.f32.mrf.mxu0
    %v4429 = vadd.f32 %v2450, %v4428
    %4430 = vmatmul.f32.gmra.mxu0 %v4391
    %v4431 = vpop.f32.mrf.mxu0
    %v4432 = vadd.f32 %v2450, %v4431
    %4433 = vmatmul.f32.gmra.mxu0 %v4394
    %v4434 = vpop.f32.mrf.mxu0
    %v4435 = vadd.f32 %v2450, %v4434
    %4436 = vmatmul.f32.gmra.mxu0 %v4397
    %v4437 = vpop.f32.mrf.mxu0
    %v4438 = vadd.f32 %v2450, %v4437
    %4439 = vmatmul.f32.gmra.mxu0 %v4400
    %v4440 = vpop.f32.mrf.mxu0
    %v4441 = vadd.f32 %v2450, %v4440
    %4442 = vmatmul.f32.gmra.mxu0 %v4403
    %v4443 = vpop.f32.mrf.mxu0
    %v4444 = vadd.f32 %v2450, %v4443
    %4445 = vdwg.mxu0
    %v4446 = vadd.f32 %v3796, %v4423
    %v4447 = vadd.f32 %v3797, %v4426
    %v4448 = vadd.f32 %v3798, %v4429
    %v4449 = vadd.f32 %v3799, %v4432
    %v4450 = vadd.f32 %v3800, %v4435
    %v4451 = vadd.f32 %v3801, %v4438
    %v4452 = vadd.f32 %v3802, %v4441
    %v4453 = vadd.f32 %v3803, %v4444
    %s4454 = scalar_lea.vmem %s20, 64
    %4455 = vst.msk [vmem:[%s4454] sm:$0xff] %vm348, %v4446
    %4456 = vst.msk [vmem:[%s4454 + $0x8] sm:$0xff] %vm348, %v4447
    %4457 = vst.msk [vmem:[%s4454 + $0x10] sm:$0xff] %vm348, %v4448
    %4458 = vst.msk [vmem:[%s4454 + $0x18] sm:$0xff] %vm348, %v4449
    %4459 = vst.msk [vmem:[%s4454 + $0x20] sm:$0xff] %vm348, %v4450
    %4460 = vst.msk [vmem:[%s4454 + $0x28] sm:$0xff] %vm348, %v4451
    %4461 = vst.msk [vmem:[%s4454 + $0x30] sm:$0xff] %vm348, %v4452
    %4462 = vst.msk [vmem:[%s4454 + $0x38] sm:$0xff] %vm348, %v4453
    // Predicated region
    $region122: #{mixed_attention_forward.1} parent=1 // pred_check
      _
    $region123: #{mixed_attention_forward.1} parent=1 // pred_check_branch
      %4464 = sbr.rel (0) target = $region125
    $region124: #{mixed_attention_forward.1} parent=1 // pred_region
      _
    $region125: #{mixed_attention_forward.1} parent=1 // pred_fallthru
      _
    // Predicated region
    $region126: #{mixed_attention_forward.1} parent=1 // pred_check
      _
    $region127: #{mixed_attention_forward.1} parent=1 // pred_check_branch
      %4466 = sbr.rel (0) target = $region129
    $region128: #{mixed_attention_forward.1} parent=1 // pred_region
      _
    $region129: #{mixed_attention_forward.1} parent=1 // pred_fallthru
      _
    %4467 = vsyncpa [#allocation3], 1
    %4468 = vsyncpa [#allocation5], 1
    %4469 = vsyncpa [#allocation8], 1
    %4470 = vsyncpa [#allocation11], 1
    %4471 = vsyncpa [#allocation14], 1
    %4472 = vsyncpa [#allocation17], 1

</llo_original>
